<compile_context>
chip_gen: v7x
topology: tpu7x:2x2x1
jax: 0.10.0
libtpu: 0.0.40
codegen_flags: <defaults>
</compile_context>

<pallas_src>
import jax
import jax.numpy as jnp
from jax.experimental import pallas as pl
from jax.experimental.pallas import tpu as pltpu

# Lane-padded sizes (TPU vreg lane width = 128).
CINP = 8      # in_chans (3) padded to 8 (minor dim == full array dim for input)
C1P = 128     # conv1 out channels (16) padded to 128
C2P = 128     # conv2 out channels (32) padded to 128
NCP = 128     # num_classes (10) padded to 128


def _timmnet_fused_kernel(xp_ref, w1_ref, b1_ref, w2_ref, b2_ref,
                          wf_ref, bf_ref, o_ref, a1p_ref):
    """Whole forward pass for one image (one grid step).

    xp_ref : (1, H+2, W+2, CINP) f32   spatially pre-padded input
    w1_ref : (9, CINP, C1P)      bf16  conv1 taps, (kh*3 + kw) major
    b1_ref : (1, C1P)            f32
    w2_ref : (9, C1P, C2P)       bf16  conv2 taps
    b2_ref : (1, C2P)            f32
    wf_ref : (C2P, NCP)          bf16  classifier
    bf_ref : (1, NCP)            f32
    o_ref  : (1, 8, NCP)         f32   logits (broadcast over 8 sublanes)
    a1p_ref: (H+2, W+2, C1P)     f32   VMEM scratch: zero-haloed conv1 output
    """
    hp2, wp2 = xp_ref.shape[1], xp_ref.shape[2]
    H, W = hp2 - 2, wp2 - 2
    HW = H * W
    cinp = xp_ref.shape[3]
    c1p = w1_ref.shape[2]
    c2p = w2_ref.shape[2]
    ncp = wf_ref.shape[1]

    # ---- conv1: 3x3 'same' conv as 9 shifted MXU dots; bias in acc init ----
    acc1 = jnp.broadcast_to(b1_ref[...], (HW, c1p))           # f32
    for t in range(9):
        kh, kw = divmod(t, 3)
        patch = xp_ref[0, pl.ds(kh, H), pl.ds(kw, W), :]      # (H, W, CINP)
        patch = patch.reshape(HW, cinp).astype(jnp.bfloat16)
        acc1 = acc1 + jnp.dot(patch, w1_ref[t],
                              preferred_element_type=jnp.float32)
    a1 = jnp.maximum(acc1, 0.0)                               # (HW, C1P) f32

    # Stash conv1 output with a zero halo in VMEM for conv2's shifted reads.
    # Re-zeroed every grid step so it is valid on whichever core runs it.
    a1p_ref[...] = jnp.zeros_like(a1p_ref)
    a1p_ref[pl.ds(1, H), pl.ds(1, W), :] = a1.reshape(H, W, c1p)

    # ---- conv2: same shifted-dot accumulation over the VMEM-resident a1 ----
    acc2 = jnp.broadcast_to(b2_ref[...], (HW, c2p))           # f32
    for t in range(9):
        kh, kw = divmod(t, 3)
        patch = a1p_ref[pl.ds(kh, H), pl.ds(kw, W), :]        # (H, W, C1P)
        patch = patch.reshape(HW, c1p).astype(jnp.bfloat16)
        acc2 = acc2 + jnp.dot(patch, w2_ref[t],
                              preferred_element_type=jnp.float32)
    a2 = jnp.maximum(acc2, 0.0)                               # (HW, C2P) f32

    # ---- head: global_pool='max' -> dropout (identity at eval) -> Linear ----
    pooled = jnp.max(a2, axis=0, keepdims=True)               # (1, C2P) f32
    logits = jnp.dot(pooled.astype(jnp.bfloat16), wf_ref[...],
                     preferred_element_type=jnp.float32) + bf_ref[...]
    o_ref[0] = jnp.broadcast_to(logits, (8, ncp)).astype(o_ref.dtype)


def timmnet_fused_call(xp, w1, b1, w2, b2, wf, bf):
    B, hp2, wp2, cinp = xp.shape
    c1p, c2p, ncp = w1.shape[2], w2.shape[2], wf.shape[1]
    grid_spec = pltpu.PrefetchScalarGridSpec(
        num_scalar_prefetch=0,
        grid=(B,),
        in_specs=[
            pl.BlockSpec((1, hp2, wp2, cinp), lambda i: (i, 0, 0, 0)),
            pl.BlockSpec((9, cinp, c1p), lambda i: (0, 0, 0)),
            pl.BlockSpec((1, c1p), lambda i: (0, 0)),
            pl.BlockSpec((9, c1p, c2p), lambda i: (0, 0, 0)),
            pl.BlockSpec((1, c2p), lambda i: (0, 0)),
            pl.BlockSpec((c2p, ncp), lambda i: (0, 0)),
            pl.BlockSpec((1, ncp), lambda i: (0, 0)),
        ],
        out_specs=pl.BlockSpec((1, 8, ncp), lambda i: (i, 0, 0)),
        scratch_shapes=[pltpu.VMEM((hp2, wp2, c1p), jnp.float32)],
    )
    return pl.pallas_call(
        _timmnet_fused_kernel,
        out_shape=jax.ShapeDtypeStruct((B, 8, ncp), jnp.float32),
        grid_spec=grid_spec,
        compiler_params=pltpu.CompilerParams(
            dimension_semantics=("parallel",)),
    )(xp, w1, b1, w2, b2, wf, bf)


def init_params(key, in_chans=3, c1=16, c2=32, num_classes=10):
    """Deterministic synthetic weights (shapes implied by the module).

    BatchNorm is assumed folded into the conv weight/bias (eval mode).
    """
    k1, k2, k3 = jax.random.split(key, 3)
    return {
        "w1": jax.random.normal(k1, (3, 3, in_chans, c1), jnp.float32) * 0.1,
        "b1": jnp.zeros((c1,), jnp.float32),
        "w2": jax.random.normal(k2, (3, 3, c1, c2), jnp.float32) * 0.1,
        "b2": jnp.zeros((c2,), jnp.float32),
        "wf": jax.random.normal(k3, (c2, num_classes), jnp.float32) * 0.1,
        "bf": jnp.zeros((num_classes,), jnp.float32),
    }


def _prepare_padded_params(params):
    """Zero-pad channel/class dims to lane-dense sizes; matmul weights -> bf16."""
    w1, b1 = params["w1"], params["b1"]
    w2, b2 = params["w2"], params["b2"]
    wf, bf = params["wf"], params["bf"]
    cin, c1 = w1.shape[2], w1.shape[3]
    c2 = w2.shape[3]
    nc = wf.shape[1]

    w1p = jnp.zeros((3, 3, CINP, C1P), jnp.float32).at[:, :, :cin, :c1].set(w1)
    w1p = w1p.reshape(9, CINP, C1P).astype(jnp.bfloat16)
    b1p = jnp.zeros((1, C1P), jnp.float32).at[0, :c1].set(b1)

    w2p = jnp.zeros((3, 3, C1P, C2P), jnp.float32).at[:, :, :c1, :c2].set(w2)
    w2p = w2p.reshape(9, C1P, C2P).astype(jnp.bfloat16)
    b2p = jnp.zeros((1, C2P), jnp.float32).at[0, :c2].set(b2)

    wfp = jnp.zeros((C2P, NCP), jnp.float32).at[:c2, :nc].set(wf)
    wfp = wfp.astype(jnp.bfloat16)
    bfp = jnp.zeros((1, NCP), jnp.float32).at[0, :nc].set(bf)
    return (w1p, b1p, w2p, b2p, wfp, bfp), nc


@jax.jit
def timmnet_forward(x_nchw, params):
    # PyTorch NCHW -> NHWC, then spatial 'same' halo + channel pad to CINP.
    x = jnp.transpose(x_nchw, (0, 2, 3, 1)).astype(jnp.float32)
    B, H, W, cin = x.shape
    xp = jnp.zeros((B, H + 2, W + 2, CINP), jnp.float32)
    xp = xp.at[:, 1:H + 1, 1:W + 1, :cin].set(x)

    (w1p, b1p, w2p, b2p, wfp, bfp), nc = _prepare_padded_params(params)
    out = timmnet_fused_call(xp, w1p, b1p, w2p, b2p, wfp, bfp)
    return out[:, 0, :nc]                                   # (B, num_classes)


def reference_forward(x_nchw, params):
    """Plain-JAX (XLA) reference for numerical checking."""
    x = jnp.transpose(x_nchw, (0, 2, 3, 1)).astype(jnp.float32)
    dn = ("NHWC", "HWIO", "NHWC")
    a = jax.lax.conv_general_dilated(x, params["w1"], (1, 1), "SAME",
                                     dimension_numbers=dn) + params["b1"]
    a = jnp.maximum(a, 0.0)
    a = jax.lax.conv_general_dilated(a, params["w2"], (1, 1), "SAME",
                                     dimension_numbers=dn) + params["b2"]
    a = jnp.maximum(a, 0.0)
    pooled = jnp.max(a, axis=(1, 2))                         # global_pool='max'
    return pooled @ params["wf"] + params["bf"]


if __name__ == "__main__":
    key = jax.random.PRNGKey(0)
    kx, kp = jax.random.split(key)
    # Small shapes consistent with the module: batch=2, in_chans=3, 16x16.
    x = jax.random.normal(kx, (2, 3, 16, 16), jnp.float32)   # NCHW like PyTorch
    params = init_params(kp, in_chans=3, c1=16, c2=32, num_classes=10)

    logits = timmnet_forward(x, params)
    jax.block_until_ready(logits)
    assert logits.shape == (2, 10), logits.shape
    assert logits.dtype == jnp.float32

    # Numerical sanity check against a plain-JAX reference (bf16 MXU inputs,
    # f32 accumulation -> loose tolerance).
    ref = reference_forward(x, params)
    err = float(jnp.max(jnp.abs(logits - ref)))
    assert err < 0.15, f"max abs error vs reference: {err}"
    print("KERNEL_OK")
</pallas_src>

<mosaic_0001>
module attributes {stable_mosaic.version = 11 : i64} {
  func.func @_timmnet_fused_kernel(%arg0: i32, %arg1: memref<1x18x18x8xf32, #tpu.memory_space<vmem>>, %arg2: memref<9x8x128xbf16, #tpu.memory_space<vmem>>, %arg3: memref<1x128xf32, #tpu.memory_space<vmem>>, %arg4: memref<9x128x128xbf16, #tpu.memory_space<vmem>>, %arg5: memref<1x128xf32, #tpu.memory_space<vmem>>, %arg6: memref<128x128xbf16, #tpu.memory_space<vmem>>, %arg7: memref<1x128xf32, #tpu.memory_space<vmem>>, %arg8: memref<1x8x128xf32, #tpu.memory_space<vmem>>, %arg9: memref<18x18x128xf32, #tpu.memory_space<vmem>>) attributes {dimension_semantics = [#tpu.dimension_semantics<parallel>], iteration_bounds = array<i64: 2>, scalar_prefetch = 0 : i64, scratch_operands = 1 : i64, tpu.core_type = #tpu.core_type<tc>, window_params = [{transform_indices = @transform_0, window_bounds = array<i64: 1, 18, 18, 8>}, {pipeline_mode = #tpu.pipeline_mode<synchronous>, transform_indices = @transform_1, window_bounds = array<i64: 9, 8, 128>}, {pipeline_mode = #tpu.pipeline_mode<synchronous>, transform_indices = @transform_2, window_bounds = array<i64: 1, 128>}, {pipeline_mode = #tpu.pipeline_mode<synchronous>, transform_indices = @transform_3, window_bounds = array<i64: 9, 128, 128>}, {pipeline_mode = #tpu.pipeline_mode<synchronous>, transform_indices = @transform_4, window_bounds = array<i64: 1, 128>}, {pipeline_mode = #tpu.pipeline_mode<synchronous>, transform_indices = @transform_5, window_bounds = array<i64: 128, 128>}, {pipeline_mode = #tpu.pipeline_mode<synchronous>, transform_indices = @transform_6, window_bounds = array<i64: 1, 128>}, {transform_indices = @transform_7, window_bounds = array<i64: 1, 8, 128>}]} {
    %c0 = arith.constant 0 : index
    %c0_0 = arith.constant 0 : index
    %0 = vector.load %arg3[%c0, %c0_0] : memref<1x128xf32, #tpu.memory_space<vmem>>, vector<1x128xf32>
    %1 = vector.shape_cast %0 : vector<1x128xf32> to vector<1x128xf32>
    %2 = vector.broadcast %1 : vector<1x128xf32> to vector<256x128xf32>
    %c0_1 = arith.constant 0 : index
    %c0_2 = arith.constant 0 : index
    %c0_3 = arith.constant 0 : index
    %c0_4 = arith.constant 0 : index
    %3 = vector.load %arg1[%c0_1, %c0_2, %c0_3, %c0_4] : memref<1x18x18x8xf32, #tpu.memory_space<vmem>>, vector<1x16x16x8xf32>
    %4 = vector.shape_cast %3 : vector<1x16x16x8xf32> to vector<16x16x8xf32>
    %5 = vector.shape_cast %4 : vector<16x16x8xf32> to vector<256x8xf32>
    %6 = arith.truncf %5 : vector<256x8xf32> to vector<256x8xbf16>
    %c0_5 = arith.constant 0 : index
    %c0_6 = arith.constant 0 : index
    %c0_7 = arith.constant 0 : index
    %7 = vector.load %arg2[%c0_5, %c0_6, %c0_7] : memref<9x8x128xbf16, #tpu.memory_space<vmem>>, vector<1x8x128xbf16>
    %8 = vector.shape_cast %7 : vector<1x8x128xbf16> to vector<8x128xbf16>
    %cst = arith.constant dense<0.000000e+00> : vector<256x128xf32>
    %9 = tpu.matmul %6, %8, %cst {dimension_numbers = #tpu.dot_dimension_numbers<[1], [0], [0], [1], [0, 0, 1, 1], [], []>} : vector<256x8xbf16>, vector<8x128xbf16>, vector<256x128xf32> -> vector<256x128xf32>
    %10 = arith.addf %2, %9 : vector<256x128xf32>
    %c0_8 = arith.constant 0 : index
    %c0_9 = arith.constant 0 : index
    %c1 = arith.constant 1 : index
    %c0_10 = arith.constant 0 : index
    %11 = vector.load %arg1[%c0_8, %c0_9, %c1, %c0_10] : memref<1x18x18x8xf32, #tpu.memory_space<vmem>>, vector<1x16x16x8xf32>
    %12 = vector.shape_cast %11 : vector<1x16x16x8xf32> to vector<16x16x8xf32>
    %13 = vector.shape_cast %12 : vector<16x16x8xf32> to vector<256x8xf32>
    %14 = arith.truncf %13 : vector<256x8xf32> to vector<256x8xbf16>
    %c1_11 = arith.constant 1 : index
    %c0_12 = arith.constant 0 : index
    %c0_13 = arith.constant 0 : index
    %15 = vector.load %arg2[%c1_11, %c0_12, %c0_13] : memref<9x8x128xbf16, #tpu.memory_space<vmem>>, vector<1x8x128xbf16>
    %16 = vector.shape_cast %15 : vector<1x8x128xbf16> to vector<8x128xbf16>
    %cst_14 = arith.constant dense<0.000000e+00> : vector<256x128xf32>
    %17 = tpu.matmul %14, %16, %cst_14 {dimension_numbers = #tpu.dot_dimension_numbers<[1], [0], [0], [1], [0, 0, 1, 1], [], []>} : vector<256x8xbf16>, vector<8x128xbf16>, vector<256x128xf32> -> vector<256x128xf32>
    %18 = arith.addf %10, %17 : vector<256x128xf32>
    %c0_15 = arith.constant 0 : index
    %c0_16 = arith.constant 0 : index
    %c2 = arith.constant 2 : index
    %c0_17 = arith.constant 0 : index
    %19 = vector.load %arg1[%c0_15, %c0_16, %c2, %c0_17] : memref<1x18x18x8xf32, #tpu.memory_space<vmem>>, vector<1x16x16x8xf32>
    %20 = vector.shape_cast %19 : vector<1x16x16x8xf32> to vector<16x16x8xf32>
    %21 = vector.shape_cast %20 : vector<16x16x8xf32> to vector<256x8xf32>
    %22 = arith.truncf %21 : vector<256x8xf32> to vector<256x8xbf16>
    %c2_18 = arith.constant 2 : index
    %c0_19 = arith.constant 0 : index
    %c0_20 = arith.constant 0 : index
    %23 = vector.load %arg2[%c2_18, %c0_19, %c0_20] : memref<9x8x128xbf16, #tpu.memory_space<vmem>>, vector<1x8x128xbf16>
    %24 = vector.shape_cast %23 : vector<1x8x128xbf16> to vector<8x128xbf16>
    %cst_21 = arith.constant dense<0.000000e+00> : vector<256x128xf32>
    %25 = tpu.matmul %22, %24, %cst_21 {dimension_numbers = #tpu.dot_dimension_numbers<[1], [0], [0], [1], [0, 0, 1, 1], [], []>} : vector<256x8xbf16>, vector<8x128xbf16>, vector<256x128xf32> -> vector<256x128xf32>
    %26 = arith.addf %18, %25 : vector<256x128xf32>
    %c0_22 = arith.constant 0 : index
    %c1_23 = arith.constant 1 : index
    %c0_24 = arith.constant 0 : index
    %c0_25 = arith.constant 0 : index
    %27 = vector.load %arg1[%c0_22, %c1_23, %c0_24, %c0_25] : memref<1x18x18x8xf32, #tpu.memory_space<vmem>>, vector<1x16x16x8xf32>
    %28 = vector.shape_cast %27 : vector<1x16x16x8xf32> to vector<16x16x8xf32>
    %29 = vector.shape_cast %28 : vector<16x16x8xf32> to vector<256x8xf32>
    %30 = arith.truncf %29 : vector<256x8xf32> to vector<256x8xbf16>
    %c3 = arith.constant 3 : index
    %c0_26 = arith.constant 0 : index
    %c0_27 = arith.constant 0 : index
    %31 = vector.load %arg2[%c3, %c0_26, %c0_27] : memref<9x8x128xbf16, #tpu.memory_space<vmem>>, vector<1x8x128xbf16>
    %32 = vector.shape_cast %31 : vector<1x8x128xbf16> to vector<8x128xbf16>
    %cst_28 = arith.constant dense<0.000000e+00> : vector<256x128xf32>
    %33 = tpu.matmul %30, %32, %cst_28 {dimension_numbers = #tpu.dot_dimension_numbers<[1], [0], [0], [1], [0, 0, 1, 1], [], []>} : vector<256x8xbf16>, vector<8x128xbf16>, vector<256x128xf32> -> vector<256x128xf32>
    %34 = arith.addf %26, %33 : vector<256x128xf32>
    %c0_29 = arith.constant 0 : index
    %c1_30 = arith.constant 1 : index
    %c1_31 = arith.constant 1 : index
    %c0_32 = arith.constant 0 : index
    %35 = vector.load %arg1[%c0_29, %c1_30, %c1_31, %c0_32] : memref<1x18x18x8xf32, #tpu.memory_space<vmem>>, vector<1x16x16x8xf32>
    %36 = vector.shape_cast %35 : vector<1x16x16x8xf32> to vector<16x16x8xf32>
    %37 = vector.shape_cast %36 : vector<16x16x8xf32> to vector<256x8xf32>
    %38 = arith.truncf %37 : vector<256x8xf32> to vector<256x8xbf16>
    %c4 = arith.constant 4 : index
    %c0_33 = arith.constant 0 : index
    %c0_34 = arith.constant 0 : index
    %39 = vector.load %arg2[%c4, %c0_33, %c0_34] : memref<9x8x128xbf16, #tpu.memory_space<vmem>>, vector<1x8x128xbf16>
    %40 = vector.shape_cast %39 : vector<1x8x128xbf16> to vector<8x128xbf16>
    %cst_35 = arith.constant dense<0.000000e+00> : vector<256x128xf32>
    %41 = tpu.matmul %38, %40, %cst_35 {dimension_numbers = #tpu.dot_dimension_numbers<[1], [0], [0], [1], [0, 0, 1, 1], [], []>} : vector<256x8xbf16>, vector<8x128xbf16>, vector<256x128xf32> -> vector<256x128xf32>
    %42 = arith.addf %34, %41 : vector<256x128xf32>
    %c0_36 = arith.constant 0 : index
    %c1_37 = arith.constant 1 : index
    %c2_38 = arith.constant 2 : index
    %c0_39 = arith.constant 0 : index
    %43 = vector.load %arg1[%c0_36, %c1_37, %c2_38, %c0_39] : memref<1x18x18x8xf32, #tpu.memory_space<vmem>>, vector<1x16x16x8xf32>
    %44 = vector.shape_cast %43 : vector<1x16x16x8xf32> to vector<16x16x8xf32>
    %45 = vector.shape_cast %44 : vector<16x16x8xf32> to vector<256x8xf32>
    %46 = arith.truncf %45 : vector<256x8xf32> to vector<256x8xbf16>
    %c5 = arith.constant 5 : index
    %c0_40 = arith.constant 0 : index
    %c0_41 = arith.constant 0 : index
    %47 = vector.load %arg2[%c5, %c0_40, %c0_41] : memref<9x8x128xbf16, #tpu.memory_space<vmem>>, vector<1x8x128xbf16>
    %48 = vector.shape_cast %47 : vector<1x8x128xbf16> to vector<8x128xbf16>
    %cst_42 = arith.constant dense<0.000000e+00> : vector<256x128xf32>
    %49 = tpu.matmul %46, %48, %cst_42 {dimension_numbers = #tpu.dot_dimension_numbers<[1], [0], [0], [1], [0, 0, 1, 1], [], []>} : vector<256x8xbf16>, vector<8x128xbf16>, vector<256x128xf32> -> vector<256x128xf32>
    %50 = arith.addf %42, %49 : vector<256x128xf32>
    %c0_43 = arith.constant 0 : index
    %c2_44 = arith.constant 2 : index
    %c0_45 = arith.constant 0 : index
    %c0_46 = arith.constant 0 : index
    %51 = vector.load %arg1[%c0_43, %c2_44, %c0_45, %c0_46] : memref<1x18x18x8xf32, #tpu.memory_space<vmem>>, vector<1x16x16x8xf32>
    %52 = vector.shape_cast %51 : vector<1x16x16x8xf32> to vector<16x16x8xf32>
    %53 = vector.shape_cast %52 : vector<16x16x8xf32> to vector<256x8xf32>
    %54 = arith.truncf %53 : vector<256x8xf32> to vector<256x8xbf16>
    %c6 = arith.constant 6 : index
    %c0_47 = arith.constant 0 : index
    %c0_48 = arith.constant 0 : index
    %55 = vector.load %arg2[%c6, %c0_47, %c0_48] : memref<9x8x128xbf16, #tpu.memory_space<vmem>>, vector<1x8x128xbf16>
    %56 = vector.shape_cast %55 : vector<1x8x128xbf16> to vector<8x128xbf16>
    %cst_49 = arith.constant dense<0.000000e+00> : vector<256x128xf32>
    %57 = tpu.matmul %54, %56, %cst_49 {dimension_numbers = #tpu.dot_dimension_numbers<[1], [0], [0], [1], [0, 0, 1, 1], [], []>} : vector<256x8xbf16>, vector<8x128xbf16>, vector<256x128xf32> -> vector<256x128xf32>
    %58 = arith.addf %50, %57 : vector<256x128xf32>
    %c0_50 = arith.constant 0 : index
    %c2_51 = arith.constant 2 : index
    %c1_52 = arith.constant 1 : index
    %c0_53 = arith.constant 0 : index
    %59 = vector.load %arg1[%c0_50, %c2_51, %c1_52, %c0_53] : memref<1x18x18x8xf32, #tpu.memory_space<vmem>>, vector<1x16x16x8xf32>
    %60 = vector.shape_cast %59 : vector<1x16x16x8xf32> to vector<16x16x8xf32>
    %61 = vector.shape_cast %60 : vector<16x16x8xf32> to vector<256x8xf32>
    %62 = arith.truncf %61 : vector<256x8xf32> to vector<256x8xbf16>
    %c7 = arith.constant 7 : index
    %c0_54 = arith.constant 0 : index
    %c0_55 = arith.constant 0 : index
    %63 = vector.load %arg2[%c7, %c0_54, %c0_55] : memref<9x8x128xbf16, #tpu.memory_space<vmem>>, vector<1x8x128xbf16>
    %64 = vector.shape_cast %63 : vector<1x8x128xbf16> to vector<8x128xbf16>
    %cst_56 = arith.constant dense<0.000000e+00> : vector<256x128xf32>
    %65 = tpu.matmul %62, %64, %cst_56 {dimension_numbers = #tpu.dot_dimension_numbers<[1], [0], [0], [1], [0, 0, 1, 1], [], []>} : vector<256x8xbf16>, vector<8x128xbf16>, vector<256x128xf32> -> vector<256x128xf32>
    %66 = arith.addf %58, %65 : vector<256x128xf32>
    %c0_57 = arith.constant 0 : index
    %c2_58 = arith.constant 2 : index
    %c2_59 = arith.constant 2 : index
    %c0_60 = arith.constant 0 : index
    %67 = vector.load %arg1[%c0_57, %c2_58, %c2_59, %c0_60] : memref<1x18x18x8xf32, #tpu.memory_space<vmem>>, vector<1x16x16x8xf32>
    %68 = vector.shape_cast %67 : vector<1x16x16x8xf32> to vector<16x16x8xf32>
    %69 = vector.shape_cast %68 : vector<16x16x8xf32> to vector<256x8xf32>
    %70 = arith.truncf %69 : vector<256x8xf32> to vector<256x8xbf16>
    %c8 = arith.constant 8 : index
    %c0_61 = arith.constant 0 : index
    %c0_62 = arith.constant 0 : index
    %71 = vector.load %arg2[%c8, %c0_61, %c0_62] : memref<9x8x128xbf16, #tpu.memory_space<vmem>>, vector<1x8x128xbf16>
    %72 = vector.shape_cast %71 : vector<1x8x128xbf16> to vector<8x128xbf16>
    %cst_63 = arith.constant dense<0.000000e+00> : vector<256x128xf32>
    %73 = tpu.matmul %70, %72, %cst_63 {dimension_numbers = #tpu.dot_dimension_numbers<[1], [0], [0], [1], [0, 0, 1, 1], [], []>} : vector<256x8xbf16>, vector<8x128xbf16>, vector<256x128xf32> -> vector<256x128xf32>
    %74 = arith.addf %66, %73 : vector<256x128xf32>
    %cst_64 = arith.constant 0.000000e+00 : f32
    %75 = vector.broadcast %cst_64 : f32 to vector<256x128xf32>
    %76 = arith.maximumf %74, %75 : vector<256x128xf32>
    %cst_65 = arith.constant 0.000000e+00 : f32
    %77 = vector.broadcast %cst_65 : f32 to vector<18x18x128xf32>
    %c0_66 = arith.constant 0 : index
    %c0_67 = arith.constant 0 : index
    %c0_68 = arith.constant 0 : index
    %78 = vector.load %arg9[%c0_66, %c0_67, %c0_68] : memref<18x18x128xf32, #tpu.memory_space<vmem>>, vector<18x18x128xf32>
    tpu.vector_store %arg9[%c0_66, %c0_67, %c0_68], %77 {strides = array<i32>} : memref<18x18x128xf32, #tpu.memory_space<vmem>>, vector<18x18x128xf32>,
    %79 = vector.shape_cast %76 : vector<256x128xf32> to vector<16x16x128xf32>
    %c1_69 = arith.constant 1 : index
    %c1_70 = arith.constant 1 : index
    %c0_71 = arith.constant 0 : index
    %80 = vector.load %arg9[%c1_69, %c1_70, %c0_71] : memref<18x18x128xf32, #tpu.memory_space<vmem>>, vector<16x16x128xf32>
    tpu.vector_store %arg9[%c1_69, %c1_70, %c0_71], %79 {strides = array<i32>} : memref<18x18x128xf32, #tpu.memory_space<vmem>>, vector<16x16x128xf32>,
    %c0_72 = arith.constant 0 : index
    %c0_73 = arith.constant 0 : index
    %81 = vector.load %arg5[%c0_72, %c0_73] : memref<1x128xf32, #tpu.memory_space<vmem>>, vector<1x128xf32>
    %82 = vector.shape_cast %81 : vector<1x128xf32> to vector<1x128xf32>
    %83 = vector.broadcast %82 : vector<1x128xf32> to vector<256x128xf32>
    %c0_74 = arith.constant 0 : index
    %c0_75 = arith.constant 0 : index
    %c0_76 = arith.constant 0 : index
    %84 = vector.load %arg9[%c0_74, %c0_75, %c0_76] : memref<18x18x128xf32, #tpu.memory_space<vmem>>, vector<16x16x128xf32>
    %85 = vector.shape_cast %84 : vector<16x16x128xf32> to vector<256x128xf32>
    %86 = arith.truncf %85 : vector<256x128xf32> to vector<256x128xbf16>
    %c0_77 = arith.constant 0 : index
    %c0_78 = arith.constant 0 : index
    %c0_79 = arith.constant 0 : index
    %87 = vector.load %arg4[%c0_77, %c0_78, %c0_79] : memref<9x128x128xbf16, #tpu.memory_space<vmem>>, vector<1x128x128xbf16>
    %88 = vector.shape_cast %87 : vector<1x128x128xbf16> to vector<128x128xbf16>
    %cst_80 = arith.constant dense<0.000000e+00> : vector<256x128xf32>
    %89 = tpu.matmul %86, %88, %cst_80 {dimension_numbers = #tpu.dot_dimension_numbers<[1], [0], [0], [1], [0, 0, 1, 1], [], []>} : vector<256x128xbf16>, vector<128x128xbf16>, vector<256x128xf32> -> vector<256x128xf32>
    %90 = arith.addf %83, %89 : vector<256x128xf32>
    %c0_81 = arith.constant 0 : index
    %c1_82 = arith.constant 1 : index
    %c0_83 = arith.constant 0 : index
    %91 = vector.load %arg9[%c0_81, %c1_82, %c0_83] : memref<18x18x128xf32, #tpu.memory_space<vmem>>, vector<16x16x128xf32>
    %92 = vector.shape_cast %91 : vector<16x16x128xf32> to vector<256x128xf32>
    %93 = arith.truncf %92 : vector<256x128xf32> to vector<256x128xbf16>
    %c1_84 = arith.constant 1 : index
    %c0_85 = arith.constant 0 : index
    %c0_86 = arith.constant 0 : index
    %94 = vector.load %arg4[%c1_84, %c0_85, %c0_86] : memref<9x128x128xbf16, #tpu.memory_space<vmem>>, vector<1x128x128xbf16>
    %95 = vector.shape_cast %94 : vector<1x128x128xbf16> to vector<128x128xbf16>
    %cst_87 = arith.constant dense<0.000000e+00> : vector<256x128xf32>
    %96 = tpu.matmul %93, %95, %cst_87 {dimension_numbers = #tpu.dot_dimension_numbers<[1], [0], [0], [1], [0, 0, 1, 1], [], []>} : vector<256x128xbf16>, vector<128x128xbf16>, vector<256x128xf32> -> vector<256x128xf32>
    %97 = arith.addf %90, %96 : vector<256x128xf32>
    %c0_88 = arith.constant 0 : index
    %c2_89 = arith.constant 2 : index
    %c0_90 = arith.constant 0 : index
    %98 = vector.load %arg9[%c0_88, %c2_89, %c0_90] : memref<18x18x128xf32, #tpu.memory_space<vmem>>, vector<16x16x128xf32>
    %99 = vector.shape_cast %98 : vector<16x16x128xf32> to vector<256x128xf32>
    %100 = arith.truncf %99 : vector<256x128xf32> to vector<256x128xbf16>
    %c2_91 = arith.constant 2 : index
    %c0_92 = arith.constant 0 : index
    %c0_93 = arith.constant 0 : index
    %101 = vector.load %arg4[%c2_91, %c0_92, %c0_93] : memref<9x128x128xbf16, #tpu.memory_space<vmem>>, vector<1x128x128xbf16>
    %102 = vector.shape_cast %101 : vector<1x128x128xbf16> to vector<128x128xbf16>
    %cst_94 = arith.constant dense<0.000000e+00> : vector<256x128xf32>
    %103 = tpu.matmul %100, %102, %cst_94 {dimension_numbers = #tpu.dot_dimension_numbers<[1], [0], [0], [1], [0, 0, 1, 1], [], []>} : vector<256x128xbf16>, vector<128x128xbf16>, vector<256x128xf32> -> vector<256x128xf32>
    %104 = arith.addf %97, %103 : vector<256x128xf32>
    %c1_95 = arith.constant 1 : index
    %c0_96 = arith.constant 0 : index
    %c0_97 = arith.constant 0 : index
    %105 = vector.load %arg9[%c1_95, %c0_96, %c0_97] : memref<18x18x128xf32, #tpu.memory_space<vmem>>, vector<16x16x128xf32>
    %106 = vector.shape_cast %105 : vector<16x16x128xf32> to vector<256x128xf32>
    %107 = arith.truncf %106 : vector<256x128xf32> to vector<256x128xbf16>
    %c3_98 = arith.constant 3 : index
    %c0_99 = arith.constant 0 : index
    %c0_100 = arith.constant 0 : index
    %108 = vector.load %arg4[%c3_98, %c0_99, %c0_100] : memref<9x128x128xbf16, #tpu.memory_space<vmem>>, vector<1x128x128xbf16>
    %109 = vector.shape_cast %108 : vector<1x128x128xbf16> to vector<128x128xbf16>
    %cst_101 = arith.constant dense<0.000000e+00> : vector<256x128xf32>
    %110 = tpu.matmul %107, %109, %cst_101 {dimension_numbers = #tpu.dot_dimension_numbers<[1], [0], [0], [1], [0, 0, 1, 1], [], []>} : vector<256x128xbf16>, vector<128x128xbf16>, vector<256x128xf32> -> vector<256x128xf32>
    %111 = arith.addf %104, %110 : vector<256x128xf32>
    %c1_102 = arith.constant 1 : index
    %c1_103 = arith.constant 1 : index
    %c0_104 = arith.constant 0 : index
    %112 = vector.load %arg9[%c1_102, %c1_103, %c0_104] : memref<18x18x128xf32, #tpu.memory_space<vmem>>, vector<16x16x128xf32>
    %113 = vector.shape_cast %112 : vector<16x16x128xf32> to vector<256x128xf32>
    %114 = arith.truncf %113 : vector<256x128xf32> to vector<256x128xbf16>
    %c4_105 = arith.constant 4 : index
    %c0_106 = arith.constant 0 : index
    %c0_107 = arith.constant 0 : index
    %115 = vector.load %arg4[%c4_105, %c0_106, %c0_107] : memref<9x128x128xbf16, #tpu.memory_space<vmem>>, vector<1x128x128xbf16>
    %116 = vector.shape_cast %115 : vector<1x128x128xbf16> to vector<128x128xbf16>
    %cst_108 = arith.constant dense<0.000000e+00> : vector<256x128xf32>
    %117 = tpu.matmul %114, %116, %cst_108 {dimension_numbers = #tpu.dot_dimension_numbers<[1], [0], [0], [1], [0, 0, 1, 1], [], []>} : vector<256x128xbf16>, vector<128x128xbf16>, vector<256x128xf32> -> vector<256x128xf32>
    %118 = arith.addf %111, %117 : vector<256x128xf32>
    %c1_109 = arith.constant 1 : index
    %c2_110 = arith.constant 2 : index
    %c0_111 = arith.constant 0 : index
    %119 = vector.load %arg9[%c1_109, %c2_110, %c0_111] : memref<18x18x128xf32, #tpu.memory_space<vmem>>, vector<16x16x128xf32>
    %120 = vector.shape_cast %119 : vector<16x16x128xf32> to vector<256x128xf32>
    %121 = arith.truncf %120 : vector<256x128xf32> to vector<256x128xbf16>
    %c5_112 = arith.constant 5 : index
    %c0_113 = arith.constant 0 : index
    %c0_114 = arith.constant 0 : index
    %122 = vector.load %arg4[%c5_112, %c0_113, %c0_114] : memref<9x128x128xbf16, #tpu.memory_space<vmem>>, vector<1x128x128xbf16>
    %123 = vector.shape_cast %122 : vector<1x128x128xbf16> to vector<128x128xbf16>
    %cst_115 = arith.constant dense<0.000000e+00> : vector<256x128xf32>
    %124 = tpu.matmul %121, %123, %cst_115 {dimension_numbers = #tpu.dot_dimension_numbers<[1], [0], [0], [1], [0, 0, 1, 1], [], []>} : vector<256x128xbf16>, vector<128x128xbf16>, vector<256x128xf32> -> vector<256x128xf32>
    %125 = arith.addf %118, %124 : vector<256x128xf32>
    %c2_116 = arith.constant 2 : index
    %c0_117 = arith.constant 0 : index
    %c0_118 = arith.constant 0 : index
    %126 = vector.load %arg9[%c2_116, %c0_117, %c0_118] : memref<18x18x128xf32, #tpu.memory_space<vmem>>, vector<16x16x128xf32>
    %127 = vector.shape_cast %126 : vector<16x16x128xf32> to vector<256x128xf32>
    %128 = arith.truncf %127 : vector<256x128xf32> to vector<256x128xbf16>
    %c6_119 = arith.constant 6 : index
    %c0_120 = arith.constant 0 : index
    %c0_121 = arith.constant 0 : index
    %129 = vector.load %arg4[%c6_119, %c0_120, %c0_121] : memref<9x128x128xbf16, #tpu.memory_space<vmem>>, vector<1x128x128xbf16>
    %130 = vector.shape_cast %129 : vector<1x128x128xbf16> to vector<128x128xbf16>
    %cst_122 = arith.constant dense<0.000000e+00> : vector<256x128xf32>
    %131 = tpu.matmul %128, %130, %cst_122 {dimension_numbers = #tpu.dot_dimension_numbers<[1], [0], [0], [1], [0, 0, 1, 1], [], []>} : vector<256x128xbf16>, vector<128x128xbf16>, vector<256x128xf32> -> vector<256x128xf32>
    %132 = arith.addf %125, %131 : vector<256x128xf32>
    %c2_123 = arith.constant 2 : index
    %c1_124 = arith.constant 1 : index
    %c0_125 = arith.constant 0 : index
    %133 = vector.load %arg9[%c2_123, %c1_124, %c0_125] : memref<18x18x128xf32, #tpu.memory_space<vmem>>, vector<16x16x128xf32>
    %134 = vector.shape_cast %133 : vector<16x16x128xf32> to vector<256x128xf32>
    %135 = arith.truncf %134 : vector<256x128xf32> to vector<256x128xbf16>
    %c7_126 = arith.constant 7 : index
    %c0_127 = arith.constant 0 : index
    %c0_128 = arith.constant 0 : index
    %136 = vector.load %arg4[%c7_126, %c0_127, %c0_128] : memref<9x128x128xbf16, #tpu.memory_space<vmem>>, vector<1x128x128xbf16>
    %137 = vector.shape_cast %136 : vector<1x128x128xbf16> to vector<128x128xbf16>
    %cst_129 = arith.constant dense<0.000000e+00> : vector<256x128xf32>
    %138 = tpu.matmul %135, %137, %cst_129 {dimension_numbers = #tpu.dot_dimension_numbers<[1], [0], [0], [1], [0, 0, 1, 1], [], []>} : vector<256x128xbf16>, vector<128x128xbf16>, vector<256x128xf32> -> vector<256x128xf32>
    %139 = arith.addf %132, %138 : vector<256x128xf32>
    %c2_130 = arith.constant 2 : index
    %c2_131 = arith.constant 2 : index
    %c0_132 = arith.constant 0 : index
    %140 = vector.load %arg9[%c2_130, %c2_131, %c0_132] : memref<18x18x128xf32, #tpu.memory_space<vmem>>, vector<16x16x128xf32>
    %141 = vector.shape_cast %140 : vector<16x16x128xf32> to vector<256x128xf32>
    %142 = arith.truncf %141 : vector<256x128xf32> to vector<256x128xbf16>
    %c8_133 = arith.constant 8 : index
    %c0_134 = arith.constant 0 : index
    %c0_135 = arith.constant 0 : index
    %143 = vector.load %arg4[%c8_133, %c0_134, %c0_135] : memref<9x128x128xbf16, #tpu.memory_space<vmem>>, vector<1x128x128xbf16>
    %144 = vector.shape_cast %143 : vector<1x128x128xbf16> to vector<128x128xbf16>
    %cst_136 = arith.constant dense<0.000000e+00> : vector<256x128xf32>
    %145 = tpu.matmul %142, %144, %cst_136 {dimension_numbers = #tpu.dot_dimension_numbers<[1], [0], [0], [1], [0, 0, 1, 1], [], []>} : vector<256x128xbf16>, vector<128x128xbf16>, vector<256x128xf32> -> vector<256x128xf32>
    %146 = arith.addf %139, %145 : vector<256x128xf32>
    %cst_137 = arith.constant 0.000000e+00 : f32
    %147 = vector.broadcast %cst_137 : f32 to vector<256x128xf32>
    %148 = arith.maximumf %146, %147 : vector<256x128xf32>
    %cst_138 = arith.constant dense<0xFF800000> : vector<128xf32>
    %149 = vector.multi_reduction <maximumf>, %148, %cst_138 [0] : vector<256x128xf32> to vector<128xf32>
    %150 = vector.shape_cast %149 : vector<128xf32> to vector<1x128xf32>
    %151 = arith.truncf %150 : vector<1x128xf32> to vector<1x128xbf16>
    %c0_139 = arith.constant 0 : index
    %c0_140 = arith.constant 0 : index
    %152 = vector.load %arg6[%c0_139, %c0_140] : memref<128x128xbf16, #tpu.memory_space<vmem>>, vector<128x128xbf16>
    %cst_141 = arith.constant dense<0.000000e+00> : vector<1x128xf32>
    %153 = tpu.matmul %151, %152, %cst_141 {dimension_numbers = #tpu.dot_dimension_numbers<[1], [0], [0], [1], [0, 0, 1, 1], [], []>} : vector<1x128xbf16>, vector<128x128xbf16>, vector<1x128xf32> -> vector<1x128xf32>
    %c0_142 = arith.constant 0 : index
    %c0_143 = arith.constant 0 : index
    %154 = vector.load %arg7[%c0_142, %c0_143] : memref<1x128xf32, #tpu.memory_space<vmem>>, vector<1x128xf32>
    %155 = arith.addf %153, %154 : vector<1x128xf32>
    %156 = vector.shape_cast %155 : vector<1x128xf32> to vector<1x128xf32>
    %157 = vector.broadcast %156 : vector<1x128xf32> to vector<8x128xf32>
    %c0_144 = arith.constant 0 : index
    %c0_145 = arith.constant 0 : index
    %c0_146 = arith.constant 0 : index
    %158 = vector.load %arg8[%c0_144, %c0_145, %c0_146] : memref<1x8x128xf32, #tpu.memory_space<vmem>>, vector<1x8x128xf32>
    %159 = vector.shape_cast %158 : vector<1x8x128xf32> to vector<8x128xf32>
    %160 = vector.shape_cast %157 : vector<8x128xf32> to vector<1x8x128xf32>
    tpu.vector_store %arg8[%c0_144, %c0_145, %c0_146], %160 {strides = array<i32>} : memref<1x8x128xf32, #tpu.memory_space<vmem>>, vector<1x8x128xf32>,
    return
  }
  func.func @transform_0(%arg0: i32) -> (i32, i32, i32, i32) {
    %c0_i32 = arith.constant 0 : i32
    %c0_i32_0 = arith.constant 0 : i32
    %c0_i32_1 = arith.constant 0 : i32
    %c0_i32_2 = arith.constant 0 : i32
    return %arg0, %c0_i32, %c0_i32_0, %c0_i32_1 : i32, i32, i32, i32
  }
  func.func @transform_1(%arg0: i32) -> (i32, i32, i32) {
    %c0_i32 = arith.constant 0 : i32
    %c0_i32_0 = arith.constant 0 : i32
    %c0_i32_1 = arith.constant 0 : i32
    %c0_i32_2 = arith.constant 0 : i32
    return %c0_i32, %c0_i32_0, %c0_i32_1 : i32, i32, i32
  }
  func.func @transform_2(%arg0: i32) -> (i32, i32) {
    %c0_i32 = arith.constant 0 : i32
    %c0_i32_0 = arith.constant 0 : i32
    %c0_i32_1 = arith.constant 0 : i32
    return %c0_i32, %c0_i32_0 : i32, i32
  }
  func.func @transform_3(%arg0: i32) -> (i32, i32, i32) {
    %c0_i32 = arith.constant 0 : i32
    %c0_i32_0 = arith.constant 0 : i32
    %c0_i32_1 = arith.constant 0 : i32
    %c0_i32_2 = arith.constant 0 : i32
    return %c0_i32, %c0_i32_0, %c0_i32_1 : i32, i32, i32
  }
  func.func @transform_4(%arg0: i32) -> (i32, i32) {
    %c0_i32 = arith.constant 0 : i32
    %c0_i32_0 = arith.constant 0 : i32
    %c0_i32_1 = arith.constant 0 : i32
    return %c0_i32, %c0_i32_0 : i32, i32
  }
  func.func @transform_5(%arg0: i32) -> (i32, i32) {
    %c0_i32 = arith.constant 0 : i32
    %c0_i32_0 = arith.constant 0 : i32
    %c0_i32_1 = arith.constant 0 : i32
    return %c0_i32, %c0_i32_0 : i32, i32
  }
  func.func @transform_6(%arg0: i32) -> (i32, i32) {
    %c0_i32 = arith.constant 0 : i32
    %c0_i32_0 = arith.constant 0 : i32
    %c0_i32_1 = arith.constant 0 : i32
    return %c0_i32, %c0_i32_0 : i32, i32
  }
  func.func @transform_7(%arg0: i32) -> (i32, i32, i32) {
    %c0_i32 = arith.constant 0 : i32
    %c0_i32_0 = arith.constant 0 : i32
    %c0_i32_1 = arith.constant 0 : i32
    return %arg0, %c0_i32, %c0_i32_0 : i32, i32, i32
  }
}

</mosaic_0001>

<llo_original>
// kernel: timmnet_forward.1
$region0: #{timmnet_forward.1}
  #allocation0 [shape = 'u32[]', space=smem, size = 0x4, offset = 0x4, fixed_abs, tag = 'smem constant byte address 0x4 - core index']
  #allocation1 [shape = 'u32[144,128]{1,0:T(1,128)}', space=vmem, size = 0x12000, scoped, tag = 'internal scratch']
  #allocation2 [shape = 'f32[18,18,128]{2,1,0:T(8,128)}', space=vmem, size = 0x36000, scoped, tag = 'scratch operand']
  %s0 = inlined_call_operand.vmem [shape: f32[2,18,18,8], index: 0, kind: input, shape index: {}]
  %s1 = inlined_call_operand.vmem [shape: bf16[9,8,128], index: 1, kind: input, shape index: {}]
  %s2 = inlined_call_operand.vmem [shape: f32[1,128], index: 2, kind: input, shape index: {}]
  %s3 = inlined_call_operand.vmem [shape: bf16[9,128,128], index: 3, kind: input, shape index: {}]
  %s4 = inlined_call_operand.vmem [shape: f32[1,128], index: 4, kind: input, shape index: {}]
  %s5 = inlined_call_operand.vmem [shape: bf16[128,128], index: 5, kind: input, shape index: {}]
  %s6 = inlined_call_operand.vmem [shape: f32[1,128], index: 6, kind: input, shape index: {}]
  %s7 = inlined_call_operand.vmem [shape: f32[2,8,128], index: 7, kind: output, shape index: {}]
  %s8 = sld [smem:[#allocation0]]
  $region61: #{timmnet_forward.1} parent=0
    _
  %s10 = ssub.s32 1, %s8
  %s11 = scalar_select 0, %s10, %s8
  loop: start=0, step=1, limit=4
  $region2: #{timmnet_forward.1} parent=0 // loop_pre_header
    _
  $region3: #{timmnet_forward.1} parent=0 // loop_header
    %s13 = sphi 0, %s17
    %p14 = scmp.ge.s32.totalorder %s13, 4
    %s23 = sphi 0, %s25
    %s26 = sphi 0, %s23
    %s27 = sphi 0, %s26
    %s43 = sphi 0, %s27
    %s47 = sphi 0, %s47
    %s49 = sphi 0, %s47
    %s50 = sphi 0, %s49
    %s64 = sphi 0, %s50
    %s68 = sphi 0, %s68
    %s70 = sphi 0, %s68
    %s71 = sphi 0, %s70
    %s85 = sphi 0, %s71
    %s89 = sphi 0, %s89
    %s91 = sphi 0, %s89
    %s92 = sphi 0, %s91
    %s106 = sphi 0, %s92
    %s110 = sphi 0, %s110
    %s112 = sphi 0, %s110
    %s113 = sphi 0, %s112
    %s127 = sphi 0, %s113
    %s131 = sphi 0, %s131
    %s133 = sphi 0, %s131
    %s134 = sphi 0, %s133
    %s148 = sphi 0, %s134
    %s152 = sphi 0, %s152
    %s154 = sphi 0, %s152
    %s155 = sphi 0, %s154
    %s169 = sphi 0, %s155
    %s175 = sphi 0, %s177
    %s178 = sphi 0, %s175
    %s179 = sphi 0, %s178
    %s195 = sphi 0, %s179
  $region4: #{timmnet_forward.1} parent=0 // loop_header_branch
    %16 = sbr.rel (%p14) target = $region8
  $region5: #{timmnet_forward.1} parent=0 // loop_body
    %s18 = ssub.s32 %s13, 1
    %s19 = ssub.s32 %s13, 2
    %s20 = sadd.s32 %s13, 1
    %s21 = ssub.s32 %s13, %s20
    %p22 = scmp.eq.s32.totalorder %s21, 0
    %s24 = sadd.s32 %s23, 1
    %s25 = scalar_select %p22, %s23, %s24
    %p28 = pneg %p22
    %p29 = scmp.eq.s32.totalorder %s13, 1
    %p30 = por %p28, %p29
    %p31 = scmp.ne.s32.totalorder %s23, %s26
    %p32 = scmp.eq.s32.totalorder %s13, 0
    %p33 = por %p31, %p32
    %p34 = scmp.ne.s32.totalorder %s23, %s26
    %p35 = scmp.eq.s32.totalorder %s18, 1
    %p36 = por %p34, %p35
    %p37 = scmp.ne.s32.totalorder %s26, %s27
    %p38 = scmp.eq.s32.totalorder %s18, 0
    %p39 = por %p37, %p38
    %p40 = scmp.ne.s32.totalorder %s26, %s27
    %p41 = scmp.eq.s32.totalorder %s19, 1
    %p42 = por %p40, %p41
    %p44 = scmp.ne.s32.totalorder %s27, %s43
    %p45 = scmp.eq.s32.totalorder %s19, 0
    %p46 = por %p44, %p45
    %s48 = sadd.s32 %s47, 1
    %p51 = scmp.eq.s32.totalorder %s13, 1
    %p52 = scmp.ne.s32.totalorder %s47, %s49
    %p53 = scmp.eq.s32.totalorder %s13, 0
    %p54 = por %p52, %p53
    %p55 = scmp.ne.s32.totalorder %s47, %s49
    %p56 = scmp.eq.s32.totalorder %s18, 1
    %p57 = por %p55, %p56
    %p58 = scmp.ne.s32.totalorder %s49, %s50
    %p59 = scmp.eq.s32.totalorder %s18, 0
    %p60 = por %p58, %p59
    %p61 = scmp.ne.s32.totalorder %s49, %s50
    %p62 = scmp.eq.s32.totalorder %s19, 1
    %p63 = por %p61, %p62
    %p65 = scmp.ne.s32.totalorder %s50, %s64
    %p66 = scmp.eq.s32.totalorder %s19, 0
    %p67 = por %p65, %p66
    %s69 = sadd.s32 %s68, 1
    %p72 = scmp.eq.s32.totalorder %s13, 1
    %p73 = scmp.ne.s32.totalorder %s68, %s70
    %p74 = scmp.eq.s32.totalorder %s13, 0
    %p75 = por %p73, %p74
    %p76 = scmp.ne.s32.totalorder %s68, %s70
    %p77 = scmp.eq.s32.totalorder %s18, 1
    %p78 = por %p76, %p77
    %p79 = scmp.ne.s32.totalorder %s70, %s71
    %p80 = scmp.eq.s32.totalorder %s18, 0
    %p81 = por %p79, %p80
    %p82 = scmp.ne.s32.totalorder %s70, %s71
    %p83 = scmp.eq.s32.totalorder %s19, 1
    %p84 = por %p82, %p83
    %p86 = scmp.ne.s32.totalorder %s71, %s85
    %p87 = scmp.eq.s32.totalorder %s19, 0
    %p88 = por %p86, %p87
    %s90 = sadd.s32 %s89, 1
    %p93 = scmp.eq.s32.totalorder %s13, 1
    %p94 = scmp.ne.s32.totalorder %s89, %s91
    %p95 = scmp.eq.s32.totalorder %s13, 0
    %p96 = por %p94, %p95
    %p97 = scmp.ne.s32.totalorder %s89, %s91
    %p98 = scmp.eq.s32.totalorder %s18, 1
    %p99 = por %p97, %p98
    %p100 = scmp.ne.s32.totalorder %s91, %s92
    %p101 = scmp.eq.s32.totalorder %s18, 0
    %p102 = por %p100, %p101
    %p103 = scmp.ne.s32.totalorder %s91, %s92
    %p104 = scmp.eq.s32.totalorder %s19, 1
    %p105 = por %p103, %p104
    %p107 = scmp.ne.s32.totalorder %s92, %s106
    %p108 = scmp.eq.s32.totalorder %s19, 0
    %p109 = por %p107, %p108
    %s111 = sadd.s32 %s110, 1
    %p114 = scmp.eq.s32.totalorder %s13, 1
    %p115 = scmp.ne.s32.totalorder %s110, %s112
    %p116 = scmp.eq.s32.totalorder %s13, 0
    %p117 = por %p115, %p116
    %p118 = scmp.ne.s32.totalorder %s110, %s112
    %p119 = scmp.eq.s32.totalorder %s18, 1
    %p120 = por %p118, %p119
    %p121 = scmp.ne.s32.totalorder %s112, %s113
    %p122 = scmp.eq.s32.totalorder %s18, 0
    %p123 = por %p121, %p122
    %p124 = scmp.ne.s32.totalorder %s112, %s113
    %p125 = scmp.eq.s32.totalorder %s19, 1
    %p126 = por %p124, %p125
    %p128 = scmp.ne.s32.totalorder %s113, %s127
    %p129 = scmp.eq.s32.totalorder %s19, 0
    %p130 = por %p128, %p129
    %s132 = sadd.s32 %s131, 1
    %p135 = scmp.eq.s32.totalorder %s13, 1
    %p136 = scmp.ne.s32.totalorder %s131, %s133
    %p137 = scmp.eq.s32.totalorder %s13, 0
    %p138 = por %p136, %p137
    %p139 = scmp.ne.s32.totalorder %s131, %s133
    %p140 = scmp.eq.s32.totalorder %s18, 1
    %p141 = por %p139, %p140
    %p142 = scmp.ne.s32.totalorder %s133, %s134
    %p143 = scmp.eq.s32.totalorder %s18, 0
    %p144 = por %p142, %p143
    %p145 = scmp.ne.s32.totalorder %s133, %s134
    %p146 = scmp.eq.s32.totalorder %s19, 1
    %p147 = por %p145, %p146
    %p149 = scmp.ne.s32.totalorder %s134, %s148
    %p150 = scmp.eq.s32.totalorder %s19, 0
    %p151 = por %p149, %p150
    %s153 = sadd.s32 %s152, 1
    %p156 = scmp.eq.s32.totalorder %s13, 1
    %p157 = scmp.ne.s32.totalorder %s152, %s154
    %p158 = scmp.eq.s32.totalorder %s13, 0
    %p159 = por %p157, %p158
    %p160 = scmp.ne.s32.totalorder %s152, %s154
    %p161 = scmp.eq.s32.totalorder %s18, 1
    %p162 = por %p160, %p161
    %p163 = scmp.ne.s32.totalorder %s154, %s155
    %p164 = scmp.eq.s32.totalorder %s18, 0
    %p165 = por %p163, %p164
    %p166 = scmp.ne.s32.totalorder %s154, %s155
    %p167 = scmp.eq.s32.totalorder %s19, 1
    %p168 = por %p166, %p167
    %p170 = scmp.ne.s32.totalorder %s155, %s169
    %p171 = scmp.eq.s32.totalorder %s19, 0
    %p172 = por %p170, %p171
    %s173 = ssub.s32 %s13, %s20
    %p174 = scmp.eq.s32.totalorder %s173, 0
    %s176 = sadd.s32 %s175, 1
    %s177 = scalar_select %p174, %s175, %s176
    %p180 = pneg %p174
    %p181 = scmp.eq.s32.totalorder %s13, 1
    %p182 = por %p180, %p181
    %p183 = scmp.ne.s32.totalorder %s175, %s178
    %p184 = scmp.eq.s32.totalorder %s13, 0
    %p185 = por %p183, %p184
    %p186 = scmp.ne.s32.totalorder %s175, %s178
    %p187 = scmp.eq.s32.totalorder %s18, 1
    %p188 = por %p186, %p187
    %p189 = scmp.ne.s32.totalorder %s178, %s179
    %p190 = scmp.eq.s32.totalorder %s18, 0
    %p191 = por %p189, %p190
    %p192 = scmp.ne.s32.totalorder %s178, %s179
    %p193 = scmp.eq.s32.totalorder %s19, 1
    %p194 = por %p192, %p193
    %p196 = scmp.ne.s32.totalorder %s179, %s195
    %p197 = scmp.eq.s32.totalorder %s19, 0
    %p198 = por %p196, %p197
    %p199 = scmp.le.s32.totalorder 1, %s13
    %p200 = scmp.lt.s32.totalorder %s13, 3
    %p201 = pnand %p199, %p200
    %p202 = pneg %p201
    // Predicated region
    $region9: #{timmnet_forward.1} parent=5 // pred_check
      _
    $region10: #{timmnet_forward.1} parent=5 // pred_check_branch
      %204 = sbr.rel (%p201) target = $region12
    $region11: #{timmnet_forward.1} parent=5 // pred_region
      %s205 = ssub.s32 %s13, 1
      // Predicated region
      $region13: #{timmnet_forward.1} parent=11 // pred_check
        %p206 = pneg %p60
      $region14: #{timmnet_forward.1} parent=11 // pred_check_branch
        %208 = sbr.rel (%p206) target = $region16
      $region15: #{timmnet_forward.1} parent=11 // pred_region
        _
      $region16: #{timmnet_forward.1} parent=11 // pred_fallthru
        _
      // Predicated region
      $region17: #{timmnet_forward.1} parent=11 // pred_check
        %p209 = pneg %p81
      $region18: #{timmnet_forward.1} parent=11 // pred_check_branch
        %211 = sbr.rel (%p209) target = $region20
      $region19: #{timmnet_forward.1} parent=11 // pred_region
        _
      $region20: #{timmnet_forward.1} parent=11 // pred_fallthru
        _
      // Predicated region
      $region21: #{timmnet_forward.1} parent=11 // pred_check
        %p212 = pneg %p102
      $region22: #{timmnet_forward.1} parent=11 // pred_check_branch
        %214 = sbr.rel (%p212) target = $region24
      $region23: #{timmnet_forward.1} parent=11 // pred_region
        _
      $region24: #{timmnet_forward.1} parent=11 // pred_fallthru
        _
      // Predicated region
      $region25: #{timmnet_forward.1} parent=11 // pred_check
        %p215 = pneg %p123
      $region26: #{timmnet_forward.1} parent=11 // pred_check_branch
        %217 = sbr.rel (%p215) target = $region28
      $region27: #{timmnet_forward.1} parent=11 // pred_region
        _
      $region28: #{timmnet_forward.1} parent=11 // pred_fallthru
        _
      // Predicated region
      $region29: #{timmnet_forward.1} parent=11 // pred_check
        %p218 = pneg %p144
      $region30: #{timmnet_forward.1} parent=11 // pred_check_branch
        %220 = sbr.rel (%p218) target = $region32
      $region31: #{timmnet_forward.1} parent=11 // pred_region
        _
      $region32: #{timmnet_forward.1} parent=11 // pred_fallthru
        _
      // Predicated region
      $region33: #{timmnet_forward.1} parent=11 // pred_check
        %p221 = pneg %p165
      $region34: #{timmnet_forward.1} parent=11 // pred_check_branch
        %223 = sbr.rel (%p221) target = $region36
      $region35: #{timmnet_forward.1} parent=11 // pred_region
        _
      $region36: #{timmnet_forward.1} parent=11 // pred_fallthru
        _
    $region12: #{timmnet_forward.1} parent=5 // pred_fallthru
      _
    %p224 = scmp.lt.s32.totalorder %s13, 2
    // Predicated region
    $region37: #{timmnet_forward.1} parent=5 // pred_check
      %p225 = pneg %p224
    $region38: #{timmnet_forward.1} parent=5 // pred_check_branch
      %227 = sbr.rel (%p225) target = $region40
    $region39: #{timmnet_forward.1} parent=5 // pred_region
      // Predicated region
      $region41: #{timmnet_forward.1} parent=39 // pred_check
        %p228 = pneg %p33
      $region42: #{timmnet_forward.1} parent=39 // pred_check_branch
        %230 = sbr.rel (%p228) target = $region44
      $region43: #{timmnet_forward.1} parent=39 // pred_region
        %p231 = scmp.lt.s32.totalorder %s13, 1
        %s232 = scalar_select %p231, %s13, 1
        %s233 = smul.addr %s232, 54
        %s234 = smul.addr %s233, 8
        %s235 = scalar_lea.vmem %s0, %s234
      $region44: #{timmnet_forward.1} parent=39 // pred_fallthru
        _
    $region40: #{timmnet_forward.1} parent=5 // pred_fallthru
      _
    %p236 = scmp.le.s32.totalorder 1, %s13
    %p237 = scmp.lt.s32.totalorder %s13, 3
    %p238 = pnand %p236, %p237
    %p239 = pneg %p238
    // Predicated region
    $region45: #{timmnet_forward.1} parent=5 // pred_check
      _
    $region46: #{timmnet_forward.1} parent=5 // pred_check_branch
      %241 = sbr.rel (%p238) target = $region48
    $region47: #{timmnet_forward.1} parent=5 // pred_region
      %s242 = ssub.s32 %s13, 1
      %p243 = scmp.lt.s32.totalorder %s18, 1
      %s244 = scalar_select %p243, %s18, 1
      %s245 = smul.addr %s244, 54
      %s246 = smul.addr %s245, 8
      %s247 = scalar_lea.vmem %s0, %s246
      %p248 = pneg %p39
      %p249 = pneg %p36
      %p250 = pneg %p60
      %p251 = pneg %p57
      %p252 = pneg %p81
      %p253 = pneg %p78
      %p254 = pneg %p102
      %p255 = pneg %p99
      %p256 = pneg %p123
      %p257 = pneg %p120
      %p258 = pneg %p144
      %p259 = pneg %p141
      %p260 = pneg %p165
      %p261 = pneg %p162
      %p262 = pneg %p191
      %p263 = pneg %p188
      %p264 = scmp.lt.s32.totalorder %s18, 1
      %s265 = scalar_select %p264, %s18, 1
      %s266 = smul.addr %s265, 8
      %s267 = scalar_lea.vmem %s7, %s266
      %p268 = scmp.lt.s32.totalorder %s18, 1
      %s269 = scalar_select %p268, %s18, 1
      %s270 = smul.addr %s269, 54
      %s271 = smul.addr %s270, 8
      %s272 = scalar_lea.vmem %s0, %s271
      %p273 = scmp.lt.s32.totalorder %s18, 1
      %s274 = scalar_select %p273, %s18, 1
      %s275 = smul.addr %s274, 8
      %s276 = scalar_lea.vmem %s7, %s275
      %v278 = vld [vmem:[%s2] sm:$0x1]
      %v280 = vlaneseq
      %v281 = vshrl.u32 %v280, 7
      %v282 = vsub.s32 0, %v281
      %v283 = vrot.slane %v278, %v282
      %v285 = vld [vmem:[%s272] sm:$0xff]
      %v286 = vld [vmem:[%s272 + $0x8] sm:$0xff]
      %v287 = vld [vmem:[%s272 + $0x18] sm:$0xff]
      %v288 = vld [vmem:[%s272 + $0x20] sm:$0xff]
      %v289 = vld [vmem:[%s272 + $0x30] sm:$0xff]
      %v290 = vld [vmem:[%s272 + $0x38] sm:$0xff]
      %v291 = vld [vmem:[%s272 + $0x48] sm:$0xff]
      %v292 = vld [vmem:[%s272 + $0x50] sm:$0xff]
      %v293 = vld [vmem:[%s272 + $0x60] sm:$0xff]
      %v294 = vld [vmem:[%s272 + $0x68] sm:$0xff]
      %v295 = vld [vmem:[%s272 + $0x78] sm:$0xff]
      %v296 = vld [vmem:[%s272 + $0x80] sm:$0xff]
      %v297 = vld [vmem:[%s272 + $0x90] sm:$0xff]
      %v298 = vld [vmem:[%s272 + $0x98] sm:$0xff]
      %v299 = vld [vmem:[%s272 + $0xa8] sm:$0xff]
      %v300 = vld [vmem:[%s272 + $0xb0] sm:$0xff]
      %v301 = vld [vmem:[%s272 + $0xc0] sm:$0xff]
      %v302 = vld [vmem:[%s272 + $0xc8] sm:$0xff]
      %v303 = vld [vmem:[%s272 + $0xd8] sm:$0xff]
      %v304 = vld [vmem:[%s272 + $0xe0] sm:$0xff]
      %v305 = vld [vmem:[%s272 + $0xf0] sm:$0xff]
      %v306 = vld [vmem:[%s272 + $0xf8] sm:$0xff]
      %v307 = vld [vmem:[%s272 + $0x108] sm:$0xff]
      %v308 = vld [vmem:[%s272 + $0x110] sm:$0xff]
      %v309 = vld [vmem:[%s272 + $0x120] sm:$0xff]
      %v310 = vld [vmem:[%s272 + $0x128] sm:$0xff]
      %v311 = vld [vmem:[%s272 + $0x138] sm:$0xff]
      %v312 = vld [vmem:[%s272 + $0x140] sm:$0xff]
      %v313 = vld [vmem:[%s272 + $0x150] sm:$0xff]
      %v314 = vld [vmem:[%s272 + $0x158] sm:$0xff]
      %v315 = vld [vmem:[%s272 + $0x168] sm:$0xff]
      %v316 = vld [vmem:[%s272 + $0x170] sm:$0xff]
      %v317 = vpack.c.bf16 %v286, %v285
      %v318 = vpack.c.bf16 %v288, %v287
      %v319 = vpack.c.bf16 %v290, %v289
      %v320 = vpack.c.bf16 %v292, %v291
      %v321 = vpack.c.bf16 %v294, %v293
      %v322 = vpack.c.bf16 %v296, %v295
      %v323 = vpack.c.bf16 %v298, %v297
      %v324 = vpack.c.bf16 %v300, %v299
      %v325 = vpack.c.bf16 %v302, %v301
      %v326 = vpack.c.bf16 %v304, %v303
      %v327 = vpack.c.bf16 %v306, %v305
      %v328 = vpack.c.bf16 %v308, %v307
      %v329 = vpack.c.bf16 %v310, %v309
      %v330 = vpack.c.bf16 %v312, %v311
      %v331 = vpack.c.bf16 %v314, %v313
      %v332 = vpack.c.bf16 %v316, %v315
      %v333 = vld [vmem:[%s1] sm:$0xf]
      %vm334 = vcmask 64512
      %v336 = vsel %vm334, %v317, 0
      %v339 = vsel %vm334, %v318, 0
      %v342 = vsel %vm334, %v319, 0
      %v345 = vsel %vm334, %v320, 0
      %v348 = vsel %vm334, %v321, 0
      %v351 = vsel %vm334, %v322, 0
      %v354 = vsel %vm334, %v323, 0
      %v357 = vsel %vm334, %v324, 0
      %v360 = vsel %vm334, %v325, 0
      %v363 = vsel %vm334, %v326, 0
      %v366 = vsel %vm334, %v327, 0
      %v369 = vsel %vm334, %v328, 0
      %v372 = vsel %vm334, %v329, 0
      %v375 = vsel %vm334, %v330, 0
      %v378 = vsel %vm334, %v331, 0
      %v381 = vsel %vm334, %v332, 0
      %vm383 = vcmask 1043456
      %v385 = vsel %vm383, %v333, 0
      %387 = vmatprep.subr.bf16.mxu0 0
      %388 = vmatpush1.bf16.msra.mxu0 %v385
      %389 = vmatprep.subr.bf16.mxu0 0
      %390 = vmatpush1.bf16.msra.mxu0 0
      %391 = vmatprep.subr.bf16.mxu0 0
      %392 = vmatpush1.bf16.msra.mxu0 0
      %393 = vmatprep.subr.bf16.mxu0 0
      %394 = vmatpush1.bf16.msra.mxu0 0
      %395 = vmatprep.subr.bf16.mxu0 0
      %396 = vmatpush1.bf16.msra.mxu0 0
      %397 = vmatprep.subr.bf16.mxu0 0
      %398 = vmatpush1.bf16.msra.mxu0 0
      %399 = vmatprep.subr.bf16.mxu0 0
      %400 = vmatpush1.bf16.msra.mxu0 0
      %401 = vmatprep.subr.bf16.mxu0 0
      %402 = vmatpush1.bf16.msra.mxu0 0
      %403 = vmatprep.subr.bf16.mxu0 0
      %404 = vmatpush1.bf16.msra.mxu0 0
      %405 = vmatprep.subr.bf16.mxu0 0
      %406 = vmatpush1.bf16.msra.mxu0 0
      %407 = vmatprep.subr.bf16.mxu0 0
      %408 = vmatpush1.bf16.msra.mxu0 0
      %409 = vmatprep.subr.bf16.mxu0 0
      %410 = vmatpush1.bf16.msra.mxu0 0
      %411 = vmatprep.subr.bf16.mxu0 0
      %412 = vmatpush1.bf16.msra.mxu0 0
      %413 = vmatprep.subr.bf16.mxu0 0
      %414 = vmatpush1.bf16.msra.mxu0 0
      %415 = vmatprep.subr.bf16.mxu0 0
      %416 = vmatpush1.bf16.msra.mxu0 0
      %417 = vmatprep.subr.bf16.mxu0 0
      %418 = vmatpush1.bf16.msra.mxu0 0
      %419 = vmatprep.mubr.bf16.mxu0 0
      %420 = vmatmul.mubr.bf16.gmra.mrb[0].mxu0 %v336
      %v421 = vpop.f32.mrb[0].mxu0
      %v422 = vadd.f32 0.0, %v421
      %v423 = vpop.f32.mrb[0].mxu0
      %v424 = vpop.f32.mrb[0].mxu0
      %v425 = vadd.f32 0.0, %v424
      %v426 = vpop.f32.mrb[0].mxu0
      %427 = vmatprep.mubr.bf16.mxu0 0
      %428 = vmatmul.mubr.bf16.gmra.mrb[0].mxu0 %v339
      %v429 = vpop.f32.mrb[0].mxu0
      %v430 = vadd.f32 0.0, %v429
      %v431 = vpop.f32.mrb[0].mxu0
      %v432 = vpop.f32.mrb[0].mxu0
      %v433 = vadd.f32 0.0, %v432
      %v434 = vpop.f32.mrb[0].mxu0
      %435 = vmatprep.mubr.bf16.mxu0 0
      %436 = vmatmul.mubr.bf16.gmra.mrb[0].mxu0 %v342
      %v437 = vpop.f32.mrb[0].mxu0
      %v438 = vadd.f32 0.0, %v437
      %v439 = vpop.f32.mrb[0].mxu0
      %v440 = vpop.f32.mrb[0].mxu0
      %v441 = vadd.f32 0.0, %v440
      %v442 = vpop.f32.mrb[0].mxu0
      %443 = vmatprep.mubr.bf16.mxu0 0
      %444 = vmatmul.mubr.bf16.gmra.mrb[0].mxu0 %v345
      %v445 = vpop.f32.mrb[0].mxu0
      %v446 = vadd.f32 0.0, %v445
      %v447 = vpop.f32.mrb[0].mxu0
      %v448 = vpop.f32.mrb[0].mxu0
      %v449 = vadd.f32 0.0, %v448
      %v450 = vpop.f32.mrb[0].mxu0
      %451 = vmatprep.mubr.bf16.mxu0 0
      %452 = vmatmul.mubr.bf16.gmra.mrb[0].mxu0 %v348
      %v453 = vpop.f32.mrb[0].mxu0
      %v454 = vadd.f32 0.0, %v453
      %v455 = vpop.f32.mrb[0].mxu0
      %v456 = vpop.f32.mrb[0].mxu0
      %v457 = vadd.f32 0.0, %v456
      %v458 = vpop.f32.mrb[0].mxu0
      %459 = vmatprep.mubr.bf16.mxu0 0
      %460 = vmatmul.mubr.bf16.gmra.mrb[0].mxu0 %v351
      %v461 = vpop.f32.mrb[0].mxu0
      %v462 = vadd.f32 0.0, %v461
      %v463 = vpop.f32.mrb[0].mxu0
      %v464 = vpop.f32.mrb[0].mxu0
      %v465 = vadd.f32 0.0, %v464
      %v466 = vpop.f32.mrb[0].mxu0
      %467 = vmatprep.mubr.bf16.mxu0 0
      %468 = vmatmul.mubr.bf16.gmra.mrb[0].mxu0 %v354
      %v469 = vpop.f32.mrb[0].mxu0
      %v470 = vadd.f32 0.0, %v469
      %v471 = vpop.f32.mrb[0].mxu0
      %v472 = vpop.f32.mrb[0].mxu0
      %v473 = vadd.f32 0.0, %v472
      %v474 = vpop.f32.mrb[0].mxu0
      %475 = vmatprep.mubr.bf16.mxu0 0
      %476 = vmatmul.mubr.bf16.gmra.mrb[0].mxu0 %v357
      %v477 = vpop.f32.mrb[0].mxu0
      %v478 = vadd.f32 0.0, %v477
      %v479 = vpop.f32.mrb[0].mxu0
      %v480 = vpop.f32.mrb[0].mxu0
      %v481 = vadd.f32 0.0, %v480
      %v482 = vpop.f32.mrb[0].mxu0
      %483 = vmatprep.mubr.bf16.mxu0 0
      %484 = vmatmul.mubr.bf16.gmra.mrb[0].mxu0 %v360
      %v485 = vpop.f32.mrb[0].mxu0
      %v486 = vadd.f32 0.0, %v485
      %v487 = vpop.f32.mrb[0].mxu0
      %v488 = vpop.f32.mrb[0].mxu0
      %v489 = vadd.f32 0.0, %v488
      %v490 = vpop.f32.mrb[0].mxu0
      %491 = vmatprep.mubr.bf16.mxu0 0
      %492 = vmatmul.mubr.bf16.gmra.mrb[0].mxu0 %v363
      %v493 = vpop.f32.mrb[0].mxu0
      %v494 = vadd.f32 0.0, %v493
      %v495 = vpop.f32.mrb[0].mxu0
      %v496 = vpop.f32.mrb[0].mxu0
      %v497 = vadd.f32 0.0, %v496
      %v498 = vpop.f32.mrb[0].mxu0
      %499 = vmatprep.mubr.bf16.mxu0 0
      %500 = vmatmul.mubr.bf16.gmra.mrb[0].mxu0 %v366
      %v501 = vpop.f32.mrb[0].mxu0
      %v502 = vadd.f32 0.0, %v501
      %v503 = vpop.f32.mrb[0].mxu0
      %v504 = vpop.f32.mrb[0].mxu0
      %v505 = vadd.f32 0.0, %v504
      %v506 = vpop.f32.mrb[0].mxu0
      %507 = vmatprep.mubr.bf16.mxu0 0
      %508 = vmatmul.mubr.bf16.gmra.mrb[0].mxu0 %v369
      %v509 = vpop.f32.mrb[0].mxu0
      %v510 = vadd.f32 0.0, %v509
      %v511 = vpop.f32.mrb[0].mxu0
      %v512 = vpop.f32.mrb[0].mxu0
      %v513 = vadd.f32 0.0, %v512
      %v514 = vpop.f32.mrb[0].mxu0
      %515 = vmatprep.mubr.bf16.mxu0 0
      %516 = vmatmul.mubr.bf16.gmra.mrb[0].mxu0 %v372
      %v517 = vpop.f32.mrb[0].mxu0
      %v518 = vadd.f32 0.0, %v517
      %v519 = vpop.f32.mrb[0].mxu0
      %v520 = vpop.f32.mrb[0].mxu0
      %v521 = vadd.f32 0.0, %v520
      %v522 = vpop.f32.mrb[0].mxu0
      %523 = vmatprep.mubr.bf16.mxu0 0
      %524 = vmatmul.mubr.bf16.gmra.mrb[0].mxu0 %v375
      %v525 = vpop.f32.mrb[0].mxu0
      %v526 = vadd.f32 0.0, %v525
      %v527 = vpop.f32.mrb[0].mxu0
      %v528 = vpop.f32.mrb[0].mxu0
      %v529 = vadd.f32 0.0, %v528
      %v530 = vpop.f32.mrb[0].mxu0
      %531 = vmatprep.mubr.bf16.mxu0 0
      %532 = vmatmul.mubr.bf16.gmra.mrb[0].mxu0 %v378
      %v533 = vpop.f32.mrb[0].mxu0
      %v534 = vadd.f32 0.0, %v533
      %v535 = vpop.f32.mrb[0].mxu0
      %v536 = vpop.f32.mrb[0].mxu0
      %v537 = vadd.f32 0.0, %v536
      %v538 = vpop.f32.mrb[0].mxu0
      %539 = vmatprep.mubr.bf16.mxu0 0
      %540 = vmatmul.mubr.bf16.gmra.mrb[0].mxu0 %v381
      %v541 = vpop.f32.mrb[0].mxu0
      %v542 = vadd.f32 0.0, %v541
      %v543 = vpop.f32.mrb[0].mxu0
      %v544 = vpop.f32.mrb[0].mxu0
      %v545 = vadd.f32 0.0, %v544
      %v546 = vpop.f32.mrb[0].mxu0
      %547 = vdwg.mxu0
      %v548 = vadd.f32 %v283, %v422
      %v549 = vadd.f32 %v283, %v425
      %v550 = vadd.f32 %v283, %v430
      %v551 = vadd.f32 %v283, %v433
      %v552 = vadd.f32 %v283, %v438
      %v553 = vadd.f32 %v283, %v441
      %v554 = vadd.f32 %v283, %v446
      %v555 = vadd.f32 %v283, %v449
      %v556 = vadd.f32 %v283, %v454
      %v557 = vadd.f32 %v283, %v457
      %v558 = vadd.f32 %v283, %v462
      %v559 = vadd.f32 %v283, %v465
      %v560 = vadd.f32 %v283, %v470
      %v561 = vadd.f32 %v283, %v473
      %v562 = vadd.f32 %v283, %v478
      %v563 = vadd.f32 %v283, %v481
      %v564 = vadd.f32 %v283, %v486
      %v565 = vadd.f32 %v283, %v489
      %v566 = vadd.f32 %v283, %v494
      %v567 = vadd.f32 %v283, %v497
      %v568 = vadd.f32 %v283, %v502
      %v569 = vadd.f32 %v283, %v505
      %v570 = vadd.f32 %v283, %v510
      %v571 = vadd.f32 %v283, %v513
      %v572 = vadd.f32 %v283, %v518
      %v573 = vadd.f32 %v283, %v521
      %v574 = vadd.f32 %v283, %v526
      %v575 = vadd.f32 %v283, %v529
      %v576 = vadd.f32 %v283, %v534
      %v577 = vadd.f32 %v283, %v537
      %v578 = vadd.f32 %v283, %v542
      %v579 = vadd.f32 %v283, %v545
      %v580 = vld [vmem:[%s272 + $0x1] sm:$0xff]
      %v581 = vld [vmem:[%s272 + $0x9] sm:$0xff]
      %v582 = vld [vmem:[%s272 + $0x19] sm:$0xff]
      %v583 = vld [vmem:[%s272 + $0x21] sm:$0xff]
      %v584 = vld [vmem:[%s272 + $0x31] sm:$0xff]
      %v585 = vld [vmem:[%s272 + $0x39] sm:$0xff]
      %v586 = vld [vmem:[%s272 + $0x49] sm:$0xff]
      %v587 = vld [vmem:[%s272 + $0x51] sm:$0xff]
      %v588 = vld [vmem:[%s272 + $0x61] sm:$0xff]
      %v589 = vld [vmem:[%s272 + $0x69] sm:$0xff]
      %v590 = vld [vmem:[%s272 + $0x79] sm:$0xff]
      %v591 = vld [vmem:[%s272 + $0x81] sm:$0xff]
      %v592 = vld [vmem:[%s272 + $0x91] sm:$0xff]
      %v593 = vld [vmem:[%s272 + $0x99] sm:$0xff]
      %v594 = vld [vmem:[%s272 + $0xa9] sm:$0xff]
      %v595 = vld [vmem:[%s272 + $0xb1] sm:$0xff]
      %v596 = vld [vmem:[%s272 + $0xc1] sm:$0xff]
      %v597 = vld [vmem:[%s272 + $0xc9] sm:$0xff]
      %v598 = vld [vmem:[%s272 + $0xd9] sm:$0xff]
      %v599 = vld [vmem:[%s272 + $0xe1] sm:$0xff]
      %v600 = vld [vmem:[%s272 + $0xf1] sm:$0xff]
      %v601 = vld [vmem:[%s272 + $0xf9] sm:$0xff]
      %v602 = vld [vmem:[%s272 + $0x109] sm:$0xff]
      %v603 = vld [vmem:[%s272 + $0x111] sm:$0xff]
      %v604 = vld [vmem:[%s272 + $0x121] sm:$0xff]
      %v605 = vld [vmem:[%s272 + $0x129] sm:$0xff]
      %v606 = vld [vmem:[%s272 + $0x139] sm:$0xff]
      %v607 = vld [vmem:[%s272 + $0x141] sm:$0xff]
      %v608 = vld [vmem:[%s272 + $0x151] sm:$0xff]
      %v609 = vld [vmem:[%s272 + $0x159] sm:$0xff]
      %v610 = vld [vmem:[%s272 + $0x169] sm:$0xff]
      %v611 = vld [vmem:[%s272 + $0x171] sm:$0xff]
      %v612 = vpack.c.bf16 %v581, %v580
      %v613 = vpack.c.bf16 %v583, %v582
      %v614 = vpack.c.bf16 %v585, %v584
      %v615 = vpack.c.bf16 %v587, %v586
      %v616 = vpack.c.bf16 %v589, %v588
      %v617 = vpack.c.bf16 %v591, %v590
      %v618 = vpack.c.bf16 %v593, %v592
      %v619 = vpack.c.bf16 %v595, %v594
      %v620 = vpack.c.bf16 %v597, %v596
      %v621 = vpack.c.bf16 %v599, %v598
      %v622 = vpack.c.bf16 %v601, %v600
      %v623 = vpack.c.bf16 %v603, %v602
      %v624 = vpack.c.bf16 %v605, %v604
      %v625 = vpack.c.bf16 %v607, %v606
      %v626 = vpack.c.bf16 %v609, %v608
      %v627 = vpack.c.bf16 %v611, %v610
      %s628 = scalar_lea.vmem %s1, 4
      %v629 = vld [vmem:[%s628] sm:$0xf]
      %v631 = vsel %vm334, %v612, 0
      %v634 = vsel %vm334, %v613, 0
      %v637 = vsel %vm334, %v614, 0
      %v640 = vsel %vm334, %v615, 0
      %v643 = vsel %vm334, %v616, 0
      %v646 = vsel %vm334, %v617, 0
      %v649 = vsel %vm334, %v618, 0
      %v652 = vsel %vm334, %v619, 0
      %v655 = vsel %vm334, %v620, 0
      %v658 = vsel %vm334, %v621, 0
      %v661 = vsel %vm334, %v622, 0
      %v664 = vsel %vm334, %v623, 0
      %v667 = vsel %vm334, %v624, 0
      %v670 = vsel %vm334, %v625, 0
      %v673 = vsel %vm334, %v626, 0
      %v676 = vsel %vm334, %v627, 0
      %v679 = vsel %vm383, %v629, 0
      %681 = vmatprep.subr.bf16.mxu0 0
      %682 = vmatpush1.bf16.msra.mxu0 %v679
      %683 = vmatprep.subr.bf16.mxu0 0
      %684 = vmatpush1.bf16.msra.mxu0 0
      %685 = vmatprep.subr.bf16.mxu0 0
      %686 = vmatpush1.bf16.msra.mxu0 0
      %687 = vmatprep.subr.bf16.mxu0 0
      %688 = vmatpush1.bf16.msra.mxu0 0
      %689 = vmatprep.subr.bf16.mxu0 0
      %690 = vmatpush1.bf16.msra.mxu0 0
      %691 = vmatprep.subr.bf16.mxu0 0
      %692 = vmatpush1.bf16.msra.mxu0 0
      %693 = vmatprep.subr.bf16.mxu0 0
      %694 = vmatpush1.bf16.msra.mxu0 0
      %695 = vmatprep.subr.bf16.mxu0 0
      %696 = vmatpush1.bf16.msra.mxu0 0
      %697 = vmatprep.subr.bf16.mxu0 0
      %698 = vmatpush1.bf16.msra.mxu0 0
      %699 = vmatprep.subr.bf16.mxu0 0
      %700 = vmatpush1.bf16.msra.mxu0 0
      %701 = vmatprep.subr.bf16.mxu0 0
      %702 = vmatpush1.bf16.msra.mxu0 0
      %703 = vmatprep.subr.bf16.mxu0 0
      %704 = vmatpush1.bf16.msra.mxu0 0
      %705 = vmatprep.subr.bf16.mxu0 0
      %706 = vmatpush1.bf16.msra.mxu0 0
      %707 = vmatprep.subr.bf16.mxu0 0
      %708 = vmatpush1.bf16.msra.mxu0 0
      %709 = vmatprep.subr.bf16.mxu0 0
      %710 = vmatpush1.bf16.msra.mxu0 0
      %711 = vmatprep.subr.bf16.mxu0 0
      %712 = vmatpush1.bf16.msra.mxu0 0
      %713 = vmatprep.mubr.bf16.mxu0 0
      %714 = vmatmul.mubr.bf16.gmra.mrb[0].mxu0 %v631
      %v715 = vpop.f32.mrb[0].mxu0
      %v716 = vadd.f32 0.0, %v715
      %v717 = vpop.f32.mrb[0].mxu0
      %v718 = vpop.f32.mrb[0].mxu0
      %v719 = vadd.f32 0.0, %v718
      %v720 = vpop.f32.mrb[0].mxu0
      %721 = vmatprep.mubr.bf16.mxu0 0
      %722 = vmatmul.mubr.bf16.gmra.mrb[0].mxu0 %v634
      %v723 = vpop.f32.mrb[0].mxu0
      %v724 = vadd.f32 0.0, %v723
      %v725 = vpop.f32.mrb[0].mxu0
      %v726 = vpop.f32.mrb[0].mxu0
      %v727 = vadd.f32 0.0, %v726
      %v728 = vpop.f32.mrb[0].mxu0
      %729 = vmatprep.mubr.bf16.mxu0 0
      %730 = vmatmul.mubr.bf16.gmra.mrb[0].mxu0 %v637
      %v731 = vpop.f32.mrb[0].mxu0
      %v732 = vadd.f32 0.0, %v731
      %v733 = vpop.f32.mrb[0].mxu0
      %v734 = vpop.f32.mrb[0].mxu0
      %v735 = vadd.f32 0.0, %v734
      %v736 = vpop.f32.mrb[0].mxu0
      %737 = vmatprep.mubr.bf16.mxu0 0
      %738 = vmatmul.mubr.bf16.gmra.mrb[0].mxu0 %v640
      %v739 = vpop.f32.mrb[0].mxu0
      %v740 = vadd.f32 0.0, %v739
      %v741 = vpop.f32.mrb[0].mxu0
      %v742 = vpop.f32.mrb[0].mxu0
      %v743 = vadd.f32 0.0, %v742
      %v744 = vpop.f32.mrb[0].mxu0
      %745 = vmatprep.mubr.bf16.mxu0 0
      %746 = vmatmul.mubr.bf16.gmra.mrb[0].mxu0 %v643
      %v747 = vpop.f32.mrb[0].mxu0
      %v748 = vadd.f32 0.0, %v747
      %v749 = vpop.f32.mrb[0].mxu0
      %v750 = vpop.f32.mrb[0].mxu0
      %v751 = vadd.f32 0.0, %v750
      %v752 = vpop.f32.mrb[0].mxu0
      %753 = vmatprep.mubr.bf16.mxu0 0
      %754 = vmatmul.mubr.bf16.gmra.mrb[0].mxu0 %v646
      %v755 = vpop.f32.mrb[0].mxu0
      %v756 = vadd.f32 0.0, %v755
      %v757 = vpop.f32.mrb[0].mxu0
      %v758 = vpop.f32.mrb[0].mxu0
      %v759 = vadd.f32 0.0, %v758
      %v760 = vpop.f32.mrb[0].mxu0
      %761 = vmatprep.mubr.bf16.mxu0 0
      %762 = vmatmul.mubr.bf16.gmra.mrb[0].mxu0 %v649
      %v763 = vpop.f32.mrb[0].mxu0
      %v764 = vadd.f32 0.0, %v763
      %v765 = vpop.f32.mrb[0].mxu0
      %v766 = vpop.f32.mrb[0].mxu0
      %v767 = vadd.f32 0.0, %v766
      %v768 = vpop.f32.mrb[0].mxu0
      %769 = vmatprep.mubr.bf16.mxu0 0
      %770 = vmatmul.mubr.bf16.gmra.mrb[0].mxu0 %v652
      %v771 = vpop.f32.mrb[0].mxu0
      %v772 = vadd.f32 0.0, %v771
      %v773 = vpop.f32.mrb[0].mxu0
      %v774 = vpop.f32.mrb[0].mxu0
      %v775 = vadd.f32 0.0, %v774
      %v776 = vpop.f32.mrb[0].mxu0
      %777 = vmatprep.mubr.bf16.mxu0 0
      %778 = vmatmul.mubr.bf16.gmra.mrb[0].mxu0 %v655
      %v779 = vpop.f32.mrb[0].mxu0
      %v780 = vadd.f32 0.0, %v779
      %v781 = vpop.f32.mrb[0].mxu0
      %v782 = vpop.f32.mrb[0].mxu0
      %v783 = vadd.f32 0.0, %v782
      %v784 = vpop.f32.mrb[0].mxu0
      %785 = vmatprep.mubr.bf16.mxu0 0
      %786 = vmatmul.mubr.bf16.gmra.mrb[0].mxu0 %v658
      %v787 = vpop.f32.mrb[0].mxu0
      %v788 = vadd.f32 0.0, %v787
      %v789 = vpop.f32.mrb[0].mxu0
      %v790 = vpop.f32.mrb[0].mxu0
      %v791 = vadd.f32 0.0, %v790
      %v792 = vpop.f32.mrb[0].mxu0
      %793 = vmatprep.mubr.bf16.mxu0 0
      %794 = vmatmul.mubr.bf16.gmra.mrb[0].mxu0 %v661
      %v795 = vpop.f32.mrb[0].mxu0
      %v796 = vadd.f32 0.0, %v795
      %v797 = vpop.f32.mrb[0].mxu0
      %v798 = vpop.f32.mrb[0].mxu0
      %v799 = vadd.f32 0.0, %v798
      %v800 = vpop.f32.mrb[0].mxu0
      %801 = vmatprep.mubr.bf16.mxu0 0
      %802 = vmatmul.mubr.bf16.gmra.mrb[0].mxu0 %v664
      %v803 = vpop.f32.mrb[0].mxu0
      %v804 = vadd.f32 0.0, %v803
      %v805 = vpop.f32.mrb[0].mxu0
      %v806 = vpop.f32.mrb[0].mxu0
      %v807 = vadd.f32 0.0, %v806
      %v808 = vpop.f32.mrb[0].mxu0
      %809 = vmatprep.mubr.bf16.mxu0 0
      %810 = vmatmul.mubr.bf16.gmra.mrb[0].mxu0 %v667
      %v811 = vpop.f32.mrb[0].mxu0
      %v812 = vadd.f32 0.0, %v811
      %v813 = vpop.f32.mrb[0].mxu0
      %v814 = vpop.f32.mrb[0].mxu0
      %v815 = vadd.f32 0.0, %v814
      %v816 = vpop.f32.mrb[0].mxu0
      %817 = vmatprep.mubr.bf16.mxu0 0
      %818 = vmatmul.mubr.bf16.gmra.mrb[0].mxu0 %v670
      %v819 = vpop.f32.mrb[0].mxu0
      %v820 = vadd.f32 0.0, %v819
      %v821 = vpop.f32.mrb[0].mxu0
      %v822 = vpop.f32.mrb[0].mxu0
      %v823 = vadd.f32 0.0, %v822
      %v824 = vpop.f32.mrb[0].mxu0
      %825 = vmatprep.mubr.bf16.mxu0 0
      %826 = vmatmul.mubr.bf16.gmra.mrb[0].mxu0 %v673
      %v827 = vpop.f32.mrb[0].mxu0
      %v828 = vadd.f32 0.0, %v827
      %v829 = vpop.f32.mrb[0].mxu0
      %v830 = vpop.f32.mrb[0].mxu0
      %v831 = vadd.f32 0.0, %v830
      %v832 = vpop.f32.mrb[0].mxu0
      %833 = vmatprep.mubr.bf16.mxu0 0
      %834 = vmatmul.mubr.bf16.gmra.mrb[0].mxu0 %v676
      %v835 = vpop.f32.mrb[0].mxu0
      %v836 = vadd.f32 0.0, %v835
      %v837 = vpop.f32.mrb[0].mxu0
      %v838 = vpop.f32.mrb[0].mxu0
      %v839 = vadd.f32 0.0, %v838
      %v840 = vpop.f32.mrb[0].mxu0
      %841 = vdwg.mxu0
      %v842 = vadd.f32 %v548, %v716
      %v843 = vadd.f32 %v549, %v719
      %v844 = vadd.f32 %v550, %v724
      %v845 = vadd.f32 %v551, %v727
      %v846 = vadd.f32 %v552, %v732
      %v847 = vadd.f32 %v553, %v735
      %v848 = vadd.f32 %v554, %v740
      %v849 = vadd.f32 %v555, %v743
      %v850 = vadd.f32 %v556, %v748
      %v851 = vadd.f32 %v557, %v751
      %v852 = vadd.f32 %v558, %v756
      %v853 = vadd.f32 %v559, %v759
      %v854 = vadd.f32 %v560, %v764
      %v855 = vadd.f32 %v561, %v767
      %v856 = vadd.f32 %v562, %v772
      %v857 = vadd.f32 %v563, %v775
      %v858 = vadd.f32 %v564, %v780
      %v859 = vadd.f32 %v565, %v783
      %v860 = vadd.f32 %v566, %v788
      %v861 = vadd.f32 %v567, %v791
      %v862 = vadd.f32 %v568, %v796
      %v863 = vadd.f32 %v569, %v799
      %v864 = vadd.f32 %v570, %v804
      %v865 = vadd.f32 %v571, %v807
      %v866 = vadd.f32 %v572, %v812
      %v867 = vadd.f32 %v573, %v815
      %v868 = vadd.f32 %v574, %v820
      %v869 = vadd.f32 %v575, %v823
      %v870 = vadd.f32 %v576, %v828
      %v871 = vadd.f32 %v577, %v831
      %v872 = vadd.f32 %v578, %v836
      %v873 = vadd.f32 %v579, %v839
      %v874 = vld [vmem:[%s272 + $0x2] sm:$0xff]
      %v875 = vld [vmem:[%s272 + $0xa] sm:$0xff]
      %v876 = vld [vmem:[%s272 + $0x1a] sm:$0xff]
      %v877 = vld [vmem:[%s272 + $0x22] sm:$0xff]
      %v878 = vld [vmem:[%s272 + $0x32] sm:$0xff]
      %v879 = vld [vmem:[%s272 + $0x3a] sm:$0xff]
      %v880 = vld [vmem:[%s272 + $0x4a] sm:$0xff]
      %v881 = vld [vmem:[%s272 + $0x52] sm:$0xff]
      %v882 = vld [vmem:[%s272 + $0x62] sm:$0xff]
      %v883 = vld [vmem:[%s272 + $0x6a] sm:$0xff]
      %v884 = vld [vmem:[%s272 + $0x7a] sm:$0xff]
      %v885 = vld [vmem:[%s272 + $0x82] sm:$0xff]
      %v886 = vld [vmem:[%s272 + $0x92] sm:$0xff]
      %v887 = vld [vmem:[%s272 + $0x9a] sm:$0xff]
      %v888 = vld [vmem:[%s272 + $0xaa] sm:$0xff]
      %v889 = vld [vmem:[%s272 + $0xb2] sm:$0xff]
      %v890 = vld [vmem:[%s272 + $0xc2] sm:$0xff]
      %v891 = vld [vmem:[%s272 + $0xca] sm:$0xff]
      %v892 = vld [vmem:[%s272 + $0xda] sm:$0xff]
      %v893 = vld [vmem:[%s272 + $0xe2] sm:$0xff]
      %v894 = vld [vmem:[%s272 + $0xf2] sm:$0xff]
      %v895 = vld [vmem:[%s272 + $0xfa] sm:$0xff]
      %v896 = vld [vmem:[%s272 + $0x10a] sm:$0xff]
      %v897 = vld [vmem:[%s272 + $0x112] sm:$0xff]
      %v898 = vld [vmem:[%s272 + $0x122] sm:$0xff]
      %v899 = vld [vmem:[%s272 + $0x12a] sm:$0xff]
      %v900 = vld [vmem:[%s272 + $0x13a] sm:$0xff]
      %v901 = vld [vmem:[%s272 + $0x142] sm:$0xff]
      %v902 = vld [vmem:[%s272 + $0x152] sm:$0xff]
      %v903 = vld [vmem:[%s272 + $0x15a] sm:$0xff]
      %v904 = vld [vmem:[%s272 + $0x16a] sm:$0xff]
      %v905 = vld [vmem:[%s272 + $0x172] sm:$0xff]
      %v906 = vpack.c.bf16 %v875, %v874
      %v907 = vpack.c.bf16 %v877, %v876
      %v908 = vpack.c.bf16 %v879, %v878
      %v909 = vpack.c.bf16 %v881, %v880
      %v910 = vpack.c.bf16 %v883, %v882
      %v911 = vpack.c.bf16 %v885, %v884
      %v912 = vpack.c.bf16 %v887, %v886
      %v913 = vpack.c.bf16 %v889, %v888
      %v914 = vpack.c.bf16 %v891, %v890
      %v915 = vpack.c.bf16 %v893, %v892
      %v916 = vpack.c.bf16 %v895, %v894
      %v917 = vpack.c.bf16 %v897, %v896
      %v918 = vpack.c.bf16 %v899, %v898
      %v919 = vpack.c.bf16 %v901, %v900
      %v920 = vpack.c.bf16 %v903, %v902
      %v921 = vpack.c.bf16 %v905, %v904
      %s922 = scalar_lea.vmem %s1, 8
      %v923 = vld [vmem:[%s922] sm:$0xf]
      %v925 = vsel %vm334, %v906, 0
      %v928 = vsel %vm334, %v907, 0
      %v931 = vsel %vm334, %v908, 0
      %v934 = vsel %vm334, %v909, 0
      %v937 = vsel %vm334, %v910, 0
      %v940 = vsel %vm334, %v911, 0
      %v943 = vsel %vm334, %v912, 0
      %v946 = vsel %vm334, %v913, 0
      %v949 = vsel %vm334, %v914, 0
      %v952 = vsel %vm334, %v915, 0
      %v955 = vsel %vm334, %v916, 0
      %v958 = vsel %vm334, %v917, 0
      %v961 = vsel %vm334, %v918, 0
      %v964 = vsel %vm334, %v919, 0
      %v967 = vsel %vm334, %v920, 0
      %v970 = vsel %vm334, %v921, 0
      %v973 = vsel %vm383, %v923, 0
      %975 = vmatprep.subr.bf16.mxu0 0
      %976 = vmatpush1.bf16.msra.mxu0 %v973
      %977 = vmatprep.subr.bf16.mxu0 0
      %978 = vmatpush1.bf16.msra.mxu0 0
      %979 = vmatprep.subr.bf16.mxu0 0
      %980 = vmatpush1.bf16.msra.mxu0 0
      %981 = vmatprep.subr.bf16.mxu0 0
      %982 = vmatpush1.bf16.msra.mxu0 0
      %983 = vmatprep.subr.bf16.mxu0 0
      %984 = vmatpush1.bf16.msra.mxu0 0
      %985 = vmatprep.subr.bf16.mxu0 0
      %986 = vmatpush1.bf16.msra.mxu0 0
      %987 = vmatprep.subr.bf16.mxu0 0
      %988 = vmatpush1.bf16.msra.mxu0 0
      %989 = vmatprep.subr.bf16.mxu0 0
      %990 = vmatpush1.bf16.msra.mxu0 0
      %991 = vmatprep.subr.bf16.mxu0 0
      %992 = vmatpush1.bf16.msra.mxu0 0
      %993 = vmatprep.subr.bf16.mxu0 0
      %994 = vmatpush1.bf16.msra.mxu0 0
      %995 = vmatprep.subr.bf16.mxu0 0
      %996 = vmatpush1.bf16.msra.mxu0 0
      %997 = vmatprep.subr.bf16.mxu0 0
      %998 = vmatpush1.bf16.msra.mxu0 0
      %999 = vmatprep.subr.bf16.mxu0 0
      %1000 = vmatpush1.bf16.msra.mxu0 0
      %1001 = vmatprep.subr.bf16.mxu0 0
      %1002 = vmatpush1.bf16.msra.mxu0 0
      %1003 = vmatprep.subr.bf16.mxu0 0
      %1004 = vmatpush1.bf16.msra.mxu0 0
      %1005 = vmatprep.subr.bf16.mxu0 0
      %1006 = vmatpush1.bf16.msra.mxu0 0
      %1007 = vmatprep.mubr.bf16.mxu0 0
      %1008 = vmatmul.mubr.bf16.gmra.mrb[0].mxu0 %v925
      %v1009 = vpop.f32.mrb[0].mxu0
      %v1010 = vadd.f32 0.0, %v1009
      %v1011 = vpop.f32.mrb[0].mxu0
      %v1012 = vpop.f32.mrb[0].mxu0
      %v1013 = vadd.f32 0.0, %v1012
      %v1014 = vpop.f32.mrb[0].mxu0
      %1015 = vmatprep.mubr.bf16.mxu0 0
      %1016 = vmatmul.mubr.bf16.gmra.mrb[0].mxu0 %v928
      %v1017 = vpop.f32.mrb[0].mxu0
      %v1018 = vadd.f32 0.0, %v1017
      %v1019 = vpop.f32.mrb[0].mxu0
      %v1020 = vpop.f32.mrb[0].mxu0
      %v1021 = vadd.f32 0.0, %v1020
      %v1022 = vpop.f32.mrb[0].mxu0
      %1023 = vmatprep.mubr.bf16.mxu0 0
      %1024 = vmatmul.mubr.bf16.gmra.mrb[0].mxu0 %v931
      %v1025 = vpop.f32.mrb[0].mxu0
      %v1026 = vadd.f32 0.0, %v1025
      %v1027 = vpop.f32.mrb[0].mxu0
      %v1028 = vpop.f32.mrb[0].mxu0
      %v1029 = vadd.f32 0.0, %v1028
      %v1030 = vpop.f32.mrb[0].mxu0
      %1031 = vmatprep.mubr.bf16.mxu0 0
      %1032 = vmatmul.mubr.bf16.gmra.mrb[0].mxu0 %v934
      %v1033 = vpop.f32.mrb[0].mxu0
      %v1034 = vadd.f32 0.0, %v1033
      %v1035 = vpop.f32.mrb[0].mxu0
      %v1036 = vpop.f32.mrb[0].mxu0
      %v1037 = vadd.f32 0.0, %v1036
      %v1038 = vpop.f32.mrb[0].mxu0
      %1039 = vmatprep.mubr.bf16.mxu0 0
      %1040 = vmatmul.mubr.bf16.gmra.mrb[0].mxu0 %v937
      %v1041 = vpop.f32.mrb[0].mxu0
      %v1042 = vadd.f32 0.0, %v1041
      %v1043 = vpop.f32.mrb[0].mxu0
      %v1044 = vpop.f32.mrb[0].mxu0
      %v1045 = vadd.f32 0.0, %v1044
      %v1046 = vpop.f32.mrb[0].mxu0
      %1047 = vmatprep.mubr.bf16.mxu0 0
      %1048 = vmatmul.mubr.bf16.gmra.mrb[0].mxu0 %v940
      %v1049 = vpop.f32.mrb[0].mxu0
      %v1050 = vadd.f32 0.0, %v1049
      %v1051 = vpop.f32.mrb[0].mxu0
      %v1052 = vpop.f32.mrb[0].mxu0
      %v1053 = vadd.f32 0.0, %v1052
      %v1054 = vpop.f32.mrb[0].mxu0
      %1055 = vmatprep.mubr.bf16.mxu0 0
      %1056 = vmatmul.mubr.bf16.gmra.mrb[0].mxu0 %v943
      %v1057 = vpop.f32.mrb[0].mxu0
      %v1058 = vadd.f32 0.0, %v1057
      %v1059 = vpop.f32.mrb[0].mxu0
      %v1060 = vpop.f32.mrb[0].mxu0
      %v1061 = vadd.f32 0.0, %v1060
      %v1062 = vpop.f32.mrb[0].mxu0
      %1063 = vmatprep.mubr.bf16.mxu0 0
      %1064 = vmatmul.mubr.bf16.gmra.mrb[0].mxu0 %v946
      %v1065 = vpop.f32.mrb[0].mxu0
      %v1066 = vadd.f32 0.0, %v1065
      %v1067 = vpop.f32.mrb[0].mxu0
      %v1068 = vpop.f32.mrb[0].mxu0
      %v1069 = vadd.f32 0.0, %v1068
      %v1070 = vpop.f32.mrb[0].mxu0
      %1071 = vmatprep.mubr.bf16.mxu0 0
      %1072 = vmatmul.mubr.bf16.gmra.mrb[0].mxu0 %v949
      %v1073 = vpop.f32.mrb[0].mxu0
      %v1074 = vadd.f32 0.0, %v1073
      %v1075 = vpop.f32.mrb[0].mxu0
      %v1076 = vpop.f32.mrb[0].mxu0
      %v1077 = vadd.f32 0.0, %v1076
      %v1078 = vpop.f32.mrb[0].mxu0
      %1079 = vmatprep.mubr.bf16.mxu0 0
      %1080 = vmatmul.mubr.bf16.gmra.mrb[0].mxu0 %v952
      %v1081 = vpop.f32.mrb[0].mxu0
      %v1082 = vadd.f32 0.0, %v1081
      %v1083 = vpop.f32.mrb[0].mxu0
      %v1084 = vpop.f32.mrb[0].mxu0
      %v1085 = vadd.f32 0.0, %v1084
      %v1086 = vpop.f32.mrb[0].mxu0
      %1087 = vmatprep.mubr.bf16.mxu0 0
      %1088 = vmatmul.mubr.bf16.gmra.mrb[0].mxu0 %v955
      %v1089 = vpop.f32.mrb[0].mxu0
      %v1090 = vadd.f32 0.0, %v1089
      %v1091 = vpop.f32.mrb[0].mxu0
      %v1092 = vpop.f32.mrb[0].mxu0
      %v1093 = vadd.f32 0.0, %v1092
      %v1094 = vpop.f32.mrb[0].mxu0
      %1095 = vmatprep.mubr.bf16.mxu0 0
      %1096 = vmatmul.mubr.bf16.gmra.mrb[0].mxu0 %v958
      %v1097 = vpop.f32.mrb[0].mxu0
      %v1098 = vadd.f32 0.0, %v1097
      %v1099 = vpop.f32.mrb[0].mxu0
      %v1100 = vpop.f32.mrb[0].mxu0
      %v1101 = vadd.f32 0.0, %v1100
      %v1102 = vpop.f32.mrb[0].mxu0
      %1103 = vmatprep.mubr.bf16.mxu0 0
      %1104 = vmatmul.mubr.bf16.gmra.mrb[0].mxu0 %v961
      %v1105 = vpop.f32.mrb[0].mxu0
      %v1106 = vadd.f32 0.0, %v1105
      %v1107 = vpop.f32.mrb[0].mxu0
      %v1108 = vpop.f32.mrb[0].mxu0
      %v1109 = vadd.f32 0.0, %v1108
      %v1110 = vpop.f32.mrb[0].mxu0
      %1111 = vmatprep.mubr.bf16.mxu0 0
      %1112 = vmatmul.mubr.bf16.gmra.mrb[0].mxu0 %v964
      %v1113 = vpop.f32.mrb[0].mxu0
      %v1114 = vadd.f32 0.0, %v1113
      %v1115 = vpop.f32.mrb[0].mxu0
      %v1116 = vpop.f32.mrb[0].mxu0
      %v1117 = vadd.f32 0.0, %v1116
      %v1118 = vpop.f32.mrb[0].mxu0
      %1119 = vmatprep.mubr.bf16.mxu0 0
      %1120 = vmatmul.mubr.bf16.gmra.mrb[0].mxu0 %v967
      %v1121 = vpop.f32.mrb[0].mxu0
      %v1122 = vadd.f32 0.0, %v1121
      %v1123 = vpop.f32.mrb[0].mxu0
      %v1124 = vpop.f32.mrb[0].mxu0
      %v1125 = vadd.f32 0.0, %v1124
      %v1126 = vpop.f32.mrb[0].mxu0
      %1127 = vmatprep.mubr.bf16.mxu0 0
      %1128 = vmatmul.mubr.bf16.gmra.mrb[0].mxu0 %v970
      %v1129 = vpop.f32.mrb[0].mxu0
      %v1130 = vadd.f32 0.0, %v1129
      %v1131 = vpop.f32.mrb[0].mxu0
      %v1132 = vpop.f32.mrb[0].mxu0
      %v1133 = vadd.f32 0.0, %v1132
      %v1134 = vpop.f32.mrb[0].mxu0
      %1135 = vdwg.mxu0
      %v1136 = vadd.f32 %v842, %v1010
      %v1137 = vadd.f32 %v843, %v1013
      %v1138 = vadd.f32 %v844, %v1018
      %v1139 = vadd.f32 %v845, %v1021
      %v1140 = vadd.f32 %v846, %v1026
      %v1141 = vadd.f32 %v847, %v1029
      %v1142 = vadd.f32 %v848, %v1034
      %v1143 = vadd.f32 %v849, %v1037
      %v1144 = vadd.f32 %v850, %v1042
      %v1145 = vadd.f32 %v851, %v1045
      %v1146 = vadd.f32 %v852, %v1050
      %v1147 = vadd.f32 %v853, %v1053
      %v1148 = vadd.f32 %v854, %v1058
      %v1149 = vadd.f32 %v855, %v1061
      %v1150 = vadd.f32 %v856, %v1066
      %v1151 = vadd.f32 %v857, %v1069
      %v1152 = vadd.f32 %v858, %v1074
      %v1153 = vadd.f32 %v859, %v1077
      %v1154 = vadd.f32 %v860, %v1082
      %v1155 = vadd.f32 %v861, %v1085
      %v1156 = vadd.f32 %v862, %v1090
      %v1157 = vadd.f32 %v863, %v1093
      %v1158 = vadd.f32 %v864, %v1098
      %v1159 = vadd.f32 %v865, %v1101
      %v1160 = vadd.f32 %v866, %v1106
      %v1161 = vadd.f32 %v867, %v1109
      %v1162 = vadd.f32 %v868, %v1114
      %v1163 = vadd.f32 %v869, %v1117
      %v1164 = vadd.f32 %v870, %v1122
      %v1165 = vadd.f32 %v871, %v1125
      %v1166 = vadd.f32 %v872, %v1130
      %v1167 = vadd.f32 %v873, %v1133
      %s1168 = scalar_lea.vmem %s272, 24
      %v1169 = vld [vmem:[%s1168] sm:$0xff]
      %v1170 = vld [vmem:[%s1168 + $0x8] sm:$0xff]
      %v1171 = vld [vmem:[%s1168 + $0x18] sm:$0xff]
      %v1172 = vld [vmem:[%s1168 + $0x20] sm:$0xff]
      %v1173 = vld [vmem:[%s1168 + $0x30] sm:$0xff]
      %v1174 = vld [vmem:[%s1168 + $0x38] sm:$0xff]
      %v1175 = vld [vmem:[%s1168 + $0x48] sm:$0xff]
      %v1176 = vld [vmem:[%s1168 + $0x50] sm:$0xff]
      %v1177 = vld [vmem:[%s1168 + $0x60] sm:$0xff]
      %v1178 = vld [vmem:[%s1168 + $0x68] sm:$0xff]
      %v1179 = vld [vmem:[%s1168 + $0x78] sm:$0xff]
      %v1180 = vld [vmem:[%s1168 + $0x80] sm:$0xff]
      %v1181 = vld [vmem:[%s1168 + $0x90] sm:$0xff]
      %v1182 = vld [vmem:[%s1168 + $0x98] sm:$0xff]
      %v1183 = vld [vmem:[%s1168 + $0xa8] sm:$0xff]
      %v1184 = vld [vmem:[%s1168 + $0xb0] sm:$0xff]
      %v1185 = vld [vmem:[%s1168 + $0xc0] sm:$0xff]
      %v1186 = vld [vmem:[%s1168 + $0xc8] sm:$0xff]
      %v1187 = vld [vmem:[%s1168 + $0xd8] sm:$0xff]
      %v1188 = vld [vmem:[%s1168 + $0xe0] sm:$0xff]
      %v1189 = vld [vmem:[%s1168 + $0xf0] sm:$0xff]
      %v1190 = vld [vmem:[%s1168 + $0xf8] sm:$0xff]
      %v1191 = vld [vmem:[%s1168 + $0x108] sm:$0xff]
      %v1192 = vld [vmem:[%s1168 + $0x110] sm:$0xff]
      %v1193 = vld [vmem:[%s1168 + $0x120] sm:$0xff]
      %v1194 = vld [vmem:[%s1168 + $0x128] sm:$0xff]
      %v1195 = vld [vmem:[%s1168 + $0x138] sm:$0xff]
      %v1196 = vld [vmem:[%s1168 + $0x140] sm:$0xff]
      %v1197 = vld [vmem:[%s1168 + $0x150] sm:$0xff]
      %v1198 = vld [vmem:[%s1168 + $0x158] sm:$0xff]
      %v1199 = vld [vmem:[%s1168 + $0x168] sm:$0xff]
      %v1200 = vld [vmem:[%s1168 + $0x170] sm:$0xff]
      %v1201 = vpack.c.bf16 %v1170, %v1169
      %v1202 = vpack.c.bf16 %v1172, %v1171
      %v1203 = vpack.c.bf16 %v1174, %v1173
      %v1204 = vpack.c.bf16 %v1176, %v1175
      %v1205 = vpack.c.bf16 %v1178, %v1177
      %v1206 = vpack.c.bf16 %v1180, %v1179
      %v1207 = vpack.c.bf16 %v1182, %v1181
      %v1208 = vpack.c.bf16 %v1184, %v1183
      %v1209 = vpack.c.bf16 %v1186, %v1185
      %v1210 = vpack.c.bf16 %v1188, %v1187
      %v1211 = vpack.c.bf16 %v1190, %v1189
      %v1212 = vpack.c.bf16 %v1192, %v1191
      %v1213 = vpack.c.bf16 %v1194, %v1193
      %v1214 = vpack.c.bf16 %v1196, %v1195
      %v1215 = vpack.c.bf16 %v1198, %v1197
      %v1216 = vpack.c.bf16 %v1200, %v1199
      %s1217 = scalar_lea.vmem %s1, 12
      %v1218 = vld [vmem:[%s1217] sm:$0xf]
      %v1220 = vsel %vm334, %v1201, 0
      %v1223 = vsel %vm334, %v1202, 0
      %v1226 = vsel %vm334, %v1203, 0
      %v1229 = vsel %vm334, %v1204, 0
      %v1232 = vsel %vm334, %v1205, 0
      %v1235 = vsel %vm334, %v1206, 0
      %v1238 = vsel %vm334, %v1207, 0
      %v1241 = vsel %vm334, %v1208, 0
      %v1244 = vsel %vm334, %v1209, 0
      %v1247 = vsel %vm334, %v1210, 0
      %v1250 = vsel %vm334, %v1211, 0
      %v1253 = vsel %vm334, %v1212, 0
      %v1256 = vsel %vm334, %v1213, 0
      %v1259 = vsel %vm334, %v1214, 0
      %v1262 = vsel %vm334, %v1215, 0
      %v1265 = vsel %vm334, %v1216, 0
      %v1268 = vsel %vm383, %v1218, 0
      %1270 = vmatprep.subr.bf16.mxu0 0
      %1271 = vmatpush1.bf16.msra.mxu0 %v1268
      %1272 = vmatprep.subr.bf16.mxu0 0
      %1273 = vmatpush1.bf16.msra.mxu0 0
      %1274 = vmatprep.subr.bf16.mxu0 0
      %1275 = vmatpush1.bf16.msra.mxu0 0
      %1276 = vmatprep.subr.bf16.mxu0 0
      %1277 = vmatpush1.bf16.msra.mxu0 0
      %1278 = vmatprep.subr.bf16.mxu0 0
      %1279 = vmatpush1.bf16.msra.mxu0 0
      %1280 = vmatprep.subr.bf16.mxu0 0
      %1281 = vmatpush1.bf16.msra.mxu0 0
      %1282 = vmatprep.subr.bf16.mxu0 0
      %1283 = vmatpush1.bf16.msra.mxu0 0
      %1284 = vmatprep.subr.bf16.mxu0 0
      %1285 = vmatpush1.bf16.msra.mxu0 0
      %1286 = vmatprep.subr.bf16.mxu0 0
      %1287 = vmatpush1.bf16.msra.mxu0 0
      %1288 = vmatprep.subr.bf16.mxu0 0
      %1289 = vmatpush1.bf16.msra.mxu0 0
      %1290 = vmatprep.subr.bf16.mxu0 0
      %1291 = vmatpush1.bf16.msra.mxu0 0
      %1292 = vmatprep.subr.bf16.mxu0 0
      %1293 = vmatpush1.bf16.msra.mxu0 0
      %1294 = vmatprep.subr.bf16.mxu0 0
      %1295 = vmatpush1.bf16.msra.mxu0 0
      %1296 = vmatprep.subr.bf16.mxu0 0
      %1297 = vmatpush1.bf16.msra.mxu0 0
      %1298 = vmatprep.subr.bf16.mxu0 0
      %1299 = vmatpush1.bf16.msra.mxu0 0
      %1300 = vmatprep.subr.bf16.mxu0 0
      %1301 = vmatpush1.bf16.msra.mxu0 0
      %1302 = vmatprep.mubr.bf16.mxu0 0
      %1303 = vmatmul.mubr.bf16.gmra.mrb[0].mxu0 %v1220
      %v1304 = vpop.f32.mrb[0].mxu0
      %v1305 = vadd.f32 0.0, %v1304
      %v1306 = vpop.f32.mrb[0].mxu0
      %v1307 = vpop.f32.mrb[0].mxu0
      %v1308 = vadd.f32 0.0, %v1307
      %v1309 = vpop.f32.mrb[0].mxu0
      %1310 = vmatprep.mubr.bf16.mxu0 0
      %1311 = vmatmul.mubr.bf16.gmra.mrb[0].mxu0 %v1223
      %v1312 = vpop.f32.mrb[0].mxu0
      %v1313 = vadd.f32 0.0, %v1312
      %v1314 = vpop.f32.mrb[0].mxu0
      %v1315 = vpop.f32.mrb[0].mxu0
      %v1316 = vadd.f32 0.0, %v1315
      %v1317 = vpop.f32.mrb[0].mxu0
      %1318 = vmatprep.mubr.bf16.mxu0 0
      %1319 = vmatmul.mubr.bf16.gmra.mrb[0].mxu0 %v1226
      %v1320 = vpop.f32.mrb[0].mxu0
      %v1321 = vadd.f32 0.0, %v1320
      %v1322 = vpop.f32.mrb[0].mxu0
      %v1323 = vpop.f32.mrb[0].mxu0
      %v1324 = vadd.f32 0.0, %v1323
      %v1325 = vpop.f32.mrb[0].mxu0
      %1326 = vmatprep.mubr.bf16.mxu0 0
      %1327 = vmatmul.mubr.bf16.gmra.mrb[0].mxu0 %v1229
      %v1328 = vpop.f32.mrb[0].mxu0
      %v1329 = vadd.f32 0.0, %v1328
      %v1330 = vpop.f32.mrb[0].mxu0
      %v1331 = vpop.f32.mrb[0].mxu0
      %v1332 = vadd.f32 0.0, %v1331
      %v1333 = vpop.f32.mrb[0].mxu0
      %1334 = vmatprep.mubr.bf16.mxu0 0
      %1335 = vmatmul.mubr.bf16.gmra.mrb[0].mxu0 %v1232
      %v1336 = vpop.f32.mrb[0].mxu0
      %v1337 = vadd.f32 0.0, %v1336
      %v1338 = vpop.f32.mrb[0].mxu0
      %v1339 = vpop.f32.mrb[0].mxu0
      %v1340 = vadd.f32 0.0, %v1339
      %v1341 = vpop.f32.mrb[0].mxu0
      %1342 = vmatprep.mubr.bf16.mxu0 0
      %1343 = vmatmul.mubr.bf16.gmra.mrb[0].mxu0 %v1235
      %v1344 = vpop.f32.mrb[0].mxu0
      %v1345 = vadd.f32 0.0, %v1344
      %v1346 = vpop.f32.mrb[0].mxu0
      %v1347 = vpop.f32.mrb[0].mxu0
      %v1348 = vadd.f32 0.0, %v1347
      %v1349 = vpop.f32.mrb[0].mxu0
      %1350 = vmatprep.mubr.bf16.mxu0 0
      %1351 = vmatmul.mubr.bf16.gmra.mrb[0].mxu0 %v1238
      %v1352 = vpop.f32.mrb[0].mxu0
      %v1353 = vadd.f32 0.0, %v1352
      %v1354 = vpop.f32.mrb[0].mxu0
      %v1355 = vpop.f32.mrb[0].mxu0
      %v1356 = vadd.f32 0.0, %v1355
      %v1357 = vpop.f32.mrb[0].mxu0
      %1358 = vmatprep.mubr.bf16.mxu0 0
      %1359 = vmatmul.mubr.bf16.gmra.mrb[0].mxu0 %v1241
      %v1360 = vpop.f32.mrb[0].mxu0
      %v1361 = vadd.f32 0.0, %v1360
      %v1362 = vpop.f32.mrb[0].mxu0
      %v1363 = vpop.f32.mrb[0].mxu0
      %v1364 = vadd.f32 0.0, %v1363
      %v1365 = vpop.f32.mrb[0].mxu0
      %1366 = vmatprep.mubr.bf16.mxu0 0
      %1367 = vmatmul.mubr.bf16.gmra.mrb[0].mxu0 %v1244
      %v1368 = vpop.f32.mrb[0].mxu0
      %v1369 = vadd.f32 0.0, %v1368
      %v1370 = vpop.f32.mrb[0].mxu0
      %v1371 = vpop.f32.mrb[0].mxu0
      %v1372 = vadd.f32 0.0, %v1371
      %v1373 = vpop.f32.mrb[0].mxu0
      %1374 = vmatprep.mubr.bf16.mxu0 0
      %1375 = vmatmul.mubr.bf16.gmra.mrb[0].mxu0 %v1247
      %v1376 = vpop.f32.mrb[0].mxu0
      %v1377 = vadd.f32 0.0, %v1376
      %v1378 = vpop.f32.mrb[0].mxu0
      %v1379 = vpop.f32.mrb[0].mxu0
      %v1380 = vadd.f32 0.0, %v1379
      %v1381 = vpop.f32.mrb[0].mxu0
      %1382 = vmatprep.mubr.bf16.mxu0 0
      %1383 = vmatmul.mubr.bf16.gmra.mrb[0].mxu0 %v1250
      %v1384 = vpop.f32.mrb[0].mxu0
      %v1385 = vadd.f32 0.0, %v1384
      %v1386 = vpop.f32.mrb[0].mxu0
      %v1387 = vpop.f32.mrb[0].mxu0
      %v1388 = vadd.f32 0.0, %v1387
      %v1389 = vpop.f32.mrb[0].mxu0
      %1390 = vmatprep.mubr.bf16.mxu0 0
      %1391 = vmatmul.mubr.bf16.gmra.mrb[0].mxu0 %v1253
      %v1392 = vpop.f32.mrb[0].mxu0
      %v1393 = vadd.f32 0.0, %v1392
      %v1394 = vpop.f32.mrb[0].mxu0
      %v1395 = vpop.f32.mrb[0].mxu0
      %v1396 = vadd.f32 0.0, %v1395
      %v1397 = vpop.f32.mrb[0].mxu0
      %1398 = vmatprep.mubr.bf16.mxu0 0
      %1399 = vmatmul.mubr.bf16.gmra.mrb[0].mxu0 %v1256
      %v1400 = vpop.f32.mrb[0].mxu0
      %v1401 = vadd.f32 0.0, %v1400
      %v1402 = vpop.f32.mrb[0].mxu0
      %v1403 = vpop.f32.mrb[0].mxu0
      %v1404 = vadd.f32 0.0, %v1403
      %v1405 = vpop.f32.mrb[0].mxu0
      %1406 = vmatprep.mubr.bf16.mxu0 0
      %1407 = vmatmul.mubr.bf16.gmra.mrb[0].mxu0 %v1259
      %v1408 = vpop.f32.mrb[0].mxu0
      %v1409 = vadd.f32 0.0, %v1408
      %v1410 = vpop.f32.mrb[0].mxu0
      %v1411 = vpop.f32.mrb[0].mxu0
      %v1412 = vadd.f32 0.0, %v1411
      %v1413 = vpop.f32.mrb[0].mxu0
      %1414 = vmatprep.mubr.bf16.mxu0 0
      %1415 = vmatmul.mubr.bf16.gmra.mrb[0].mxu0 %v1262
      %v1416 = vpop.f32.mrb[0].mxu0
      %v1417 = vadd.f32 0.0, %v1416
      %v1418 = vpop.f32.mrb[0].mxu0
      %v1419 = vpop.f32.mrb[0].mxu0
      %v1420 = vadd.f32 0.0, %v1419
      %v1421 = vpop.f32.mrb[0].mxu0
      %1422 = vmatprep.mubr.bf16.mxu0 0
      %1423 = vmatmul.mubr.bf16.gmra.mrb[0].mxu0 %v1265
      %v1424 = vpop.f32.mrb[0].mxu0
      %v1425 = vadd.f32 0.0, %v1424
      %v1426 = vpop.f32.mrb[0].mxu0
      %v1427 = vpop.f32.mrb[0].mxu0
      %v1428 = vadd.f32 0.0, %v1427
      %v1429 = vpop.f32.mrb[0].mxu0
      %1430 = vdwg.mxu0
      %v1431 = vadd.f32 %v1136, %v1305
      %v1432 = vadd.f32 %v1137, %v1308
      %v1433 = vadd.f32 %v1138, %v1313
      %v1434 = vadd.f32 %v1139, %v1316
      %v1435 = vadd.f32 %v1140, %v1321
      %v1436 = vadd.f32 %v1141, %v1324
      %v1437 = vadd.f32 %v1142, %v1329
      %v1438 = vadd.f32 %v1143, %v1332
      %v1439 = vadd.f32 %v1144, %v1337
      %v1440 = vadd.f32 %v1145, %v1340
      %v1441 = vadd.f32 %v1146, %v1345
      %v1442 = vadd.f32 %v1147, %v1348
      %v1443 = vadd.f32 %v1148, %v1353
      %v1444 = vadd.f32 %v1149, %v1356
      %v1445 = vadd.f32 %v1150, %v1361
      %v1446 = vadd.f32 %v1151, %v1364
      %v1447 = vadd.f32 %v1152, %v1369
      %v1448 = vadd.f32 %v1153, %v1372
      %v1449 = vadd.f32 %v1154, %v1377
      %v1450 = vadd.f32 %v1155, %v1380
      %v1451 = vadd.f32 %v1156, %v1385
      %v1452 = vadd.f32 %v1157, %v1388
      %v1453 = vadd.f32 %v1158, %v1393
      %v1454 = vadd.f32 %v1159, %v1396
      %v1455 = vadd.f32 %v1160, %v1401
      %v1456 = vadd.f32 %v1161, %v1404
      %v1457 = vadd.f32 %v1162, %v1409
      %v1458 = vadd.f32 %v1163, %v1412
      %v1459 = vadd.f32 %v1164, %v1417
      %v1460 = vadd.f32 %v1165, %v1420
      %v1461 = vadd.f32 %v1166, %v1425
      %v1462 = vadd.f32 %v1167, %v1428
      %v1463 = vld [vmem:[%s1168 + $0x1] sm:$0xff]
      %v1464 = vld [vmem:[%s1168 + $0x9] sm:$0xff]
      %v1465 = vld [vmem:[%s1168 + $0x19] sm:$0xff]
      %v1466 = vld [vmem:[%s1168 + $0x21] sm:$0xff]
      %v1467 = vld [vmem:[%s1168 + $0x31] sm:$0xff]
      %v1468 = vld [vmem:[%s1168 + $0x39] sm:$0xff]
      %v1469 = vld [vmem:[%s1168 + $0x49] sm:$0xff]
      %v1470 = vld [vmem:[%s1168 + $0x51] sm:$0xff]
      %v1471 = vld [vmem:[%s1168 + $0x61] sm:$0xff]
      %v1472 = vld [vmem:[%s1168 + $0x69] sm:$0xff]
      %v1473 = vld [vmem:[%s1168 + $0x79] sm:$0xff]
      %v1474 = vld [vmem:[%s1168 + $0x81] sm:$0xff]
      %v1475 = vld [vmem:[%s1168 + $0x91] sm:$0xff]
      %v1476 = vld [vmem:[%s1168 + $0x99] sm:$0xff]
      %v1477 = vld [vmem:[%s1168 + $0xa9] sm:$0xff]
      %v1478 = vld [vmem:[%s1168 + $0xb1] sm:$0xff]
      %v1479 = vld [vmem:[%s1168 + $0xc1] sm:$0xff]
      %v1480 = vld [vmem:[%s1168 + $0xc9] sm:$0xff]
      %v1481 = vld [vmem:[%s1168 + $0xd9] sm:$0xff]
      %v1482 = vld [vmem:[%s1168 + $0xe1] sm:$0xff]
      %v1483 = vld [vmem:[%s1168 + $0xf1] sm:$0xff]
      %v1484 = vld [vmem:[%s1168 + $0xf9] sm:$0xff]
      %v1485 = vld [vmem:[%s1168 + $0x109] sm:$0xff]
      %v1486 = vld [vmem:[%s1168 + $0x111] sm:$0xff]
      %v1487 = vld [vmem:[%s1168 + $0x121] sm:$0xff]
      %v1488 = vld [vmem:[%s1168 + $0x129] sm:$0xff]
      %v1489 = vld [vmem:[%s1168 + $0x139] sm:$0xff]
      %v1490 = vld [vmem:[%s1168 + $0x141] sm:$0xff]
      %v1491 = vld [vmem:[%s1168 + $0x151] sm:$0xff]
      %v1492 = vld [vmem:[%s1168 + $0x159] sm:$0xff]
      %v1493 = vld [vmem:[%s1168 + $0x169] sm:$0xff]
      %v1494 = vld [vmem:[%s1168 + $0x171] sm:$0xff]
      %v1495 = vpack.c.bf16 %v1464, %v1463
      %v1496 = vpack.c.bf16 %v1466, %v1465
      %v1497 = vpack.c.bf16 %v1468, %v1467
      %v1498 = vpack.c.bf16 %v1470, %v1469
      %v1499 = vpack.c.bf16 %v1472, %v1471
      %v1500 = vpack.c.bf16 %v1474, %v1473
      %v1501 = vpack.c.bf16 %v1476, %v1475
      %v1502 = vpack.c.bf16 %v1478, %v1477
      %v1503 = vpack.c.bf16 %v1480, %v1479
      %v1504 = vpack.c.bf16 %v1482, %v1481
      %v1505 = vpack.c.bf16 %v1484, %v1483
      %v1506 = vpack.c.bf16 %v1486, %v1485
      %v1507 = vpack.c.bf16 %v1488, %v1487
      %v1508 = vpack.c.bf16 %v1490, %v1489
      %v1509 = vpack.c.bf16 %v1492, %v1491
      %v1510 = vpack.c.bf16 %v1494, %v1493
      %s1511 = scalar_lea.vmem %s1, 16
      %v1512 = vld [vmem:[%s1511] sm:$0xf]
      %v1514 = vsel %vm334, %v1495, 0
      %v1517 = vsel %vm334, %v1496, 0
      %v1520 = vsel %vm334, %v1497, 0
      %v1523 = vsel %vm334, %v1498, 0
      %v1526 = vsel %vm334, %v1499, 0
      %v1529 = vsel %vm334, %v1500, 0
      %v1532 = vsel %vm334, %v1501, 0
      %v1535 = vsel %vm334, %v1502, 0
      %v1538 = vsel %vm334, %v1503, 0
      %v1541 = vsel %vm334, %v1504, 0
      %v1544 = vsel %vm334, %v1505, 0
      %v1547 = vsel %vm334, %v1506, 0
      %v1550 = vsel %vm334, %v1507, 0
      %v1553 = vsel %vm334, %v1508, 0
      %v1556 = vsel %vm334, %v1509, 0
      %v1559 = vsel %vm334, %v1510, 0
      %v1562 = vsel %vm383, %v1512, 0
      %1564 = vmatprep.subr.bf16.mxu0 0
      %1565 = vmatpush1.bf16.msra.mxu0 %v1562
      %1566 = vmatprep.subr.bf16.mxu0 0
      %1567 = vmatpush1.bf16.msra.mxu0 0
      %1568 = vmatprep.subr.bf16.mxu0 0
      %1569 = vmatpush1.bf16.msra.mxu0 0
      %1570 = vmatprep.subr.bf16.mxu0 0
      %1571 = vmatpush1.bf16.msra.mxu0 0
      %1572 = vmatprep.subr.bf16.mxu0 0
      %1573 = vmatpush1.bf16.msra.mxu0 0
      %1574 = vmatprep.subr.bf16.mxu0 0
      %1575 = vmatpush1.bf16.msra.mxu0 0
      %1576 = vmatprep.subr.bf16.mxu0 0
      %1577 = vmatpush1.bf16.msra.mxu0 0
      %1578 = vmatprep.subr.bf16.mxu0 0
      %1579 = vmatpush1.bf16.msra.mxu0 0
      %1580 = vmatprep.subr.bf16.mxu0 0
      %1581 = vmatpush1.bf16.msra.mxu0 0
      %1582 = vmatprep.subr.bf16.mxu0 0
      %1583 = vmatpush1.bf16.msra.mxu0 0
      %1584 = vmatprep.subr.bf16.mxu0 0
      %1585 = vmatpush1.bf16.msra.mxu0 0
      %1586 = vmatprep.subr.bf16.mxu0 0
      %1587 = vmatpush1.bf16.msra.mxu0 0
      %1588 = vmatprep.subr.bf16.mxu0 0
      %1589 = vmatpush1.bf16.msra.mxu0 0
      %1590 = vmatprep.subr.bf16.mxu0 0
      %1591 = vmatpush1.bf16.msra.mxu0 0
      %1592 = vmatprep.subr.bf16.mxu0 0
      %1593 = vmatpush1.bf16.msra.mxu0 0
      %1594 = vmatprep.subr.bf16.mxu0 0
      %1595 = vmatpush1.bf16.msra.mxu0 0
      %1596 = vmatprep.mubr.bf16.mxu0 0
      %1597 = vmatmul.mubr.bf16.gmra.mrb[0].mxu0 %v1514
      %v1598 = vpop.f32.mrb[0].mxu0
      %v1599 = vadd.f32 0.0, %v1598
      %v1600 = vpop.f32.mrb[0].mxu0
      %v1601 = vpop.f32.mrb[0].mxu0
      %v1602 = vadd.f32 0.0, %v1601
      %v1603 = vpop.f32.mrb[0].mxu0
      %1604 = vmatprep.mubr.bf16.mxu0 0
      %1605 = vmatmul.mubr.bf16.gmra.mrb[0].mxu0 %v1517
      %v1606 = vpop.f32.mrb[0].mxu0
      %v1607 = vadd.f32 0.0, %v1606
      %v1608 = vpop.f32.mrb[0].mxu0
      %v1609 = vpop.f32.mrb[0].mxu0
      %v1610 = vadd.f32 0.0, %v1609
      %v1611 = vpop.f32.mrb[0].mxu0
      %1612 = vmatprep.mubr.bf16.mxu0 0
      %1613 = vmatmul.mubr.bf16.gmra.mrb[0].mxu0 %v1520
      %v1614 = vpop.f32.mrb[0].mxu0
      %v1615 = vadd.f32 0.0, %v1614
      %v1616 = vpop.f32.mrb[0].mxu0
      %v1617 = vpop.f32.mrb[0].mxu0
      %v1618 = vadd.f32 0.0, %v1617
      %v1619 = vpop.f32.mrb[0].mxu0
      %1620 = vmatprep.mubr.bf16.mxu0 0
      %1621 = vmatmul.mubr.bf16.gmra.mrb[0].mxu0 %v1523
      %v1622 = vpop.f32.mrb[0].mxu0
      %v1623 = vadd.f32 0.0, %v1622
      %v1624 = vpop.f32.mrb[0].mxu0
      %v1625 = vpop.f32.mrb[0].mxu0
      %v1626 = vadd.f32 0.0, %v1625
      %v1627 = vpop.f32.mrb[0].mxu0
      %1628 = vmatprep.mubr.bf16.mxu0 0
      %1629 = vmatmul.mubr.bf16.gmra.mrb[0].mxu0 %v1526
      %v1630 = vpop.f32.mrb[0].mxu0
      %v1631 = vadd.f32 0.0, %v1630
      %v1632 = vpop.f32.mrb[0].mxu0
      %v1633 = vpop.f32.mrb[0].mxu0
      %v1634 = vadd.f32 0.0, %v1633
      %v1635 = vpop.f32.mrb[0].mxu0
      %1636 = vmatprep.mubr.bf16.mxu0 0
      %1637 = vmatmul.mubr.bf16.gmra.mrb[0].mxu0 %v1529
      %v1638 = vpop.f32.mrb[0].mxu0
      %v1639 = vadd.f32 0.0, %v1638
      %v1640 = vpop.f32.mrb[0].mxu0
      %v1641 = vpop.f32.mrb[0].mxu0
      %v1642 = vadd.f32 0.0, %v1641
      %v1643 = vpop.f32.mrb[0].mxu0
      %1644 = vmatprep.mubr.bf16.mxu0 0
      %1645 = vmatmul.mubr.bf16.gmra.mrb[0].mxu0 %v1532
      %v1646 = vpop.f32.mrb[0].mxu0
      %v1647 = vadd.f32 0.0, %v1646
      %v1648 = vpop.f32.mrb[0].mxu0
      %v1649 = vpop.f32.mrb[0].mxu0
      %v1650 = vadd.f32 0.0, %v1649
      %v1651 = vpop.f32.mrb[0].mxu0
      %1652 = vmatprep.mubr.bf16.mxu0 0
      %1653 = vmatmul.mubr.bf16.gmra.mrb[0].mxu0 %v1535
      %v1654 = vpop.f32.mrb[0].mxu0
      %v1655 = vadd.f32 0.0, %v1654
      %v1656 = vpop.f32.mrb[0].mxu0
      %v1657 = vpop.f32.mrb[0].mxu0
      %v1658 = vadd.f32 0.0, %v1657
      %v1659 = vpop.f32.mrb[0].mxu0
      %1660 = vmatprep.mubr.bf16.mxu0 0
      %1661 = vmatmul.mubr.bf16.gmra.mrb[0].mxu0 %v1538
      %v1662 = vpop.f32.mrb[0].mxu0
      %v1663 = vadd.f32 0.0, %v1662
      %v1664 = vpop.f32.mrb[0].mxu0
      %v1665 = vpop.f32.mrb[0].mxu0
      %v1666 = vadd.f32 0.0, %v1665
      %v1667 = vpop.f32.mrb[0].mxu0
      %1668 = vmatprep.mubr.bf16.mxu0 0
      %1669 = vmatmul.mubr.bf16.gmra.mrb[0].mxu0 %v1541
      %v1670 = vpop.f32.mrb[0].mxu0
      %v1671 = vadd.f32 0.0, %v1670
      %v1672 = vpop.f32.mrb[0].mxu0
      %v1673 = vpop.f32.mrb[0].mxu0
      %v1674 = vadd.f32 0.0, %v1673
      %v1675 = vpop.f32.mrb[0].mxu0
      %1676 = vmatprep.mubr.bf16.mxu0 0
      %1677 = vmatmul.mubr.bf16.gmra.mrb[0].mxu0 %v1544
      %v1678 = vpop.f32.mrb[0].mxu0
      %v1679 = vadd.f32 0.0, %v1678
      %v1680 = vpop.f32.mrb[0].mxu0
      %v1681 = vpop.f32.mrb[0].mxu0
      %v1682 = vadd.f32 0.0, %v1681
      %v1683 = vpop.f32.mrb[0].mxu0
      %1684 = vmatprep.mubr.bf16.mxu0 0
      %1685 = vmatmul.mubr.bf16.gmra.mrb[0].mxu0 %v1547
      %v1686 = vpop.f32.mrb[0].mxu0
      %v1687 = vadd.f32 0.0, %v1686
      %v1688 = vpop.f32.mrb[0].mxu0
      %v1689 = vpop.f32.mrb[0].mxu0
      %v1690 = vadd.f32 0.0, %v1689
      %v1691 = vpop.f32.mrb[0].mxu0
      %1692 = vmatprep.mubr.bf16.mxu0 0
      %1693 = vmatmul.mubr.bf16.gmra.mrb[0].mxu0 %v1550
      %v1694 = vpop.f32.mrb[0].mxu0
      %v1695 = vadd.f32 0.0, %v1694
      %v1696 = vpop.f32.mrb[0].mxu0
      %v1697 = vpop.f32.mrb[0].mxu0
      %v1698 = vadd.f32 0.0, %v1697
      %v1699 = vpop.f32.mrb[0].mxu0
      %1700 = vmatprep.mubr.bf16.mxu0 0
      %1701 = vmatmul.mubr.bf16.gmra.mrb[0].mxu0 %v1553
      %v1702 = vpop.f32.mrb[0].mxu0
      %v1703 = vadd.f32 0.0, %v1702
      %v1704 = vpop.f32.mrb[0].mxu0
      %v1705 = vpop.f32.mrb[0].mxu0
      %v1706 = vadd.f32 0.0, %v1705
      %v1707 = vpop.f32.mrb[0].mxu0
      %1708 = vmatprep.mubr.bf16.mxu0 0
      %1709 = vmatmul.mubr.bf16.gmra.mrb[0].mxu0 %v1556
      %v1710 = vpop.f32.mrb[0].mxu0
      %v1711 = vadd.f32 0.0, %v1710
      %v1712 = vpop.f32.mrb[0].mxu0
      %v1713 = vpop.f32.mrb[0].mxu0
      %v1714 = vadd.f32 0.0, %v1713
      %v1715 = vpop.f32.mrb[0].mxu0
      %1716 = vmatprep.mubr.bf16.mxu0 0
      %1717 = vmatmul.mubr.bf16.gmra.mrb[0].mxu0 %v1559
      %v1718 = vpop.f32.mrb[0].mxu0
      %v1719 = vadd.f32 0.0, %v1718
      %v1720 = vpop.f32.mrb[0].mxu0
      %v1721 = vpop.f32.mrb[0].mxu0
      %v1722 = vadd.f32 0.0, %v1721
      %v1723 = vpop.f32.mrb[0].mxu0
      %1724 = vdwg.mxu0
      %v1725 = vadd.f32 %v1431, %v1599
      %v1726 = vadd.f32 %v1432, %v1602
      %v1727 = vadd.f32 %v1433, %v1607
      %v1728 = vadd.f32 %v1434, %v1610
      %v1729 = vadd.f32 %v1435, %v1615
      %v1730 = vadd.f32 %v1436, %v1618
      %v1731 = vadd.f32 %v1437, %v1623
      %v1732 = vadd.f32 %v1438, %v1626
      %v1733 = vadd.f32 %v1439, %v1631
      %v1734 = vadd.f32 %v1440, %v1634
      %v1735 = vadd.f32 %v1441, %v1639
      %v1736 = vadd.f32 %v1442, %v1642
      %v1737 = vadd.f32 %v1443, %v1647
      %v1738 = vadd.f32 %v1444, %v1650
      %v1739 = vadd.f32 %v1445, %v1655
      %v1740 = vadd.f32 %v1446, %v1658
      %v1741 = vadd.f32 %v1447, %v1663
      %v1742 = vadd.f32 %v1448, %v1666
      %v1743 = vadd.f32 %v1449, %v1671
      %v1744 = vadd.f32 %v1450, %v1674
      %v1745 = vadd.f32 %v1451, %v1679
      %v1746 = vadd.f32 %v1452, %v1682
      %v1747 = vadd.f32 %v1453, %v1687
      %v1748 = vadd.f32 %v1454, %v1690
      %v1749 = vadd.f32 %v1455, %v1695
      %v1750 = vadd.f32 %v1456, %v1698
      %v1751 = vadd.f32 %v1457, %v1703
      %v1752 = vadd.f32 %v1458, %v1706
      %v1753 = vadd.f32 %v1459, %v1711
      %v1754 = vadd.f32 %v1460, %v1714
      %v1755 = vadd.f32 %v1461, %v1719
      %v1756 = vadd.f32 %v1462, %v1722
      %v1757 = vld [vmem:[%s1168 + $0x2] sm:$0xff]
      %v1758 = vld [vmem:[%s1168 + $0xa] sm:$0xff]
      %v1759 = vld [vmem:[%s1168 + $0x1a] sm:$0xff]
      %v1760 = vld [vmem:[%s1168 + $0x22] sm:$0xff]
      %v1761 = vld [vmem:[%s1168 + $0x32] sm:$0xff]
      %v1762 = vld [vmem:[%s1168 + $0x3a] sm:$0xff]
      %v1763 = vld [vmem:[%s1168 + $0x4a] sm:$0xff]
      %v1764 = vld [vmem:[%s1168 + $0x52] sm:$0xff]
      %v1765 = vld [vmem:[%s1168 + $0x62] sm:$0xff]
      %v1766 = vld [vmem:[%s1168 + $0x6a] sm:$0xff]
      %v1767 = vld [vmem:[%s1168 + $0x7a] sm:$0xff]
      %v1768 = vld [vmem:[%s1168 + $0x82] sm:$0xff]
      %v1769 = vld [vmem:[%s1168 + $0x92] sm:$0xff]
      %v1770 = vld [vmem:[%s1168 + $0x9a] sm:$0xff]
      %v1771 = vld [vmem:[%s1168 + $0xaa] sm:$0xff]
      %v1772 = vld [vmem:[%s1168 + $0xb2] sm:$0xff]
      %v1773 = vld [vmem:[%s1168 + $0xc2] sm:$0xff]
      %v1774 = vld [vmem:[%s1168 + $0xca] sm:$0xff]
      %v1775 = vld [vmem:[%s1168 + $0xda] sm:$0xff]
      %v1776 = vld [vmem:[%s1168 + $0xe2] sm:$0xff]
      %v1777 = vld [vmem:[%s1168 + $0xf2] sm:$0xff]
      %v1778 = vld [vmem:[%s1168 + $0xfa] sm:$0xff]
      %v1779 = vld [vmem:[%s1168 + $0x10a] sm:$0xff]
      %v1780 = vld [vmem:[%s1168 + $0x112] sm:$0xff]
      %v1781 = vld [vmem:[%s1168 + $0x122] sm:$0xff]
      %v1782 = vld [vmem:[%s1168 + $0x12a] sm:$0xff]
      %v1783 = vld [vmem:[%s1168 + $0x13a] sm:$0xff]
      %v1784 = vld [vmem:[%s1168 + $0x142] sm:$0xff]
      %v1785 = vld [vmem:[%s1168 + $0x152] sm:$0xff]
      %v1786 = vld [vmem:[%s1168 + $0x15a] sm:$0xff]
      %v1787 = vld [vmem:[%s1168 + $0x16a] sm:$0xff]
      %v1788 = vld [vmem:[%s1168 + $0x172] sm:$0xff]
      %v1789 = vpack.c.bf16 %v1758, %v1757
      %v1790 = vpack.c.bf16 %v1760, %v1759
      %v1791 = vpack.c.bf16 %v1762, %v1761
      %v1792 = vpack.c.bf16 %v1764, %v1763
      %v1793 = vpack.c.bf16 %v1766, %v1765
      %v1794 = vpack.c.bf16 %v1768, %v1767
      %v1795 = vpack.c.bf16 %v1770, %v1769
      %v1796 = vpack.c.bf16 %v1772, %v1771
      %v1797 = vpack.c.bf16 %v1774, %v1773
      %v1798 = vpack.c.bf16 %v1776, %v1775
      %v1799 = vpack.c.bf16 %v1778, %v1777
      %v1800 = vpack.c.bf16 %v1780, %v1779
      %v1801 = vpack.c.bf16 %v1782, %v1781
      %v1802 = vpack.c.bf16 %v1784, %v1783
      %v1803 = vpack.c.bf16 %v1786, %v1785
      %v1804 = vpack.c.bf16 %v1788, %v1787
      %s1805 = scalar_lea.vmem %s1, 20
      %v1806 = vld [vmem:[%s1805] sm:$0xf]
      %v1808 = vsel %vm334, %v1789, 0
      %v1811 = vsel %vm334, %v1790, 0
      %v1814 = vsel %vm334, %v1791, 0
      %v1817 = vsel %vm334, %v1792, 0
      %v1820 = vsel %vm334, %v1793, 0
      %v1823 = vsel %vm334, %v1794, 0
      %v1826 = vsel %vm334, %v1795, 0
      %v1829 = vsel %vm334, %v1796, 0
      %v1832 = vsel %vm334, %v1797, 0
      %v1835 = vsel %vm334, %v1798, 0
      %v1838 = vsel %vm334, %v1799, 0
      %v1841 = vsel %vm334, %v1800, 0
      %v1844 = vsel %vm334, %v1801, 0
      %v1847 = vsel %vm334, %v1802, 0
      %v1850 = vsel %vm334, %v1803, 0
      %v1853 = vsel %vm334, %v1804, 0
      %v1856 = vsel %vm383, %v1806, 0
      %1858 = vmatprep.subr.bf16.mxu0 0
      %1859 = vmatpush1.bf16.msra.mxu0 %v1856
      %1860 = vmatprep.subr.bf16.mxu0 0
      %1861 = vmatpush1.bf16.msra.mxu0 0
      %1862 = vmatprep.subr.bf16.mxu0 0
      %1863 = vmatpush1.bf16.msra.mxu0 0
      %1864 = vmatprep.subr.bf16.mxu0 0
      %1865 = vmatpush1.bf16.msra.mxu0 0
      %1866 = vmatprep.subr.bf16.mxu0 0
      %1867 = vmatpush1.bf16.msra.mxu0 0
      %1868 = vmatprep.subr.bf16.mxu0 0
      %1869 = vmatpush1.bf16.msra.mxu0 0
      %1870 = vmatprep.subr.bf16.mxu0 0
      %1871 = vmatpush1.bf16.msra.mxu0 0
      %1872 = vmatprep.subr.bf16.mxu0 0
      %1873 = vmatpush1.bf16.msra.mxu0 0
      %1874 = vmatprep.subr.bf16.mxu0 0
      %1875 = vmatpush1.bf16.msra.mxu0 0
      %1876 = vmatprep.subr.bf16.mxu0 0
      %1877 = vmatpush1.bf16.msra.mxu0 0
      %1878 = vmatprep.subr.bf16.mxu0 0
      %1879 = vmatpush1.bf16.msra.mxu0 0
      %1880 = vmatprep.subr.bf16.mxu0 0
      %1881 = vmatpush1.bf16.msra.mxu0 0
      %1882 = vmatprep.subr.bf16.mxu0 0
      %1883 = vmatpush1.bf16.msra.mxu0 0
      %1884 = vmatprep.subr.bf16.mxu0 0
      %1885 = vmatpush1.bf16.msra.mxu0 0
      %1886 = vmatprep.subr.bf16.mxu0 0
      %1887 = vmatpush1.bf16.msra.mxu0 0
      %1888 = vmatprep.subr.bf16.mxu0 0
      %1889 = vmatpush1.bf16.msra.mxu0 0
      %1890 = vmatprep.mubr.bf16.mxu0 0
      %1891 = vmatmul.mubr.bf16.gmra.mrb[0].mxu0 %v1808
      %v1892 = vpop.f32.mrb[0].mxu0
      %v1893 = vadd.f32 0.0, %v1892
      %v1894 = vpop.f32.mrb[0].mxu0
      %v1895 = vpop.f32.mrb[0].mxu0
      %v1896 = vadd.f32 0.0, %v1895
      %v1897 = vpop.f32.mrb[0].mxu0
      %1898 = vmatprep.mubr.bf16.mxu0 0
      %1899 = vmatmul.mubr.bf16.gmra.mrb[0].mxu0 %v1811
      %v1900 = vpop.f32.mrb[0].mxu0
      %v1901 = vadd.f32 0.0, %v1900
      %v1902 = vpop.f32.mrb[0].mxu0
      %v1903 = vpop.f32.mrb[0].mxu0
      %v1904 = vadd.f32 0.0, %v1903
      %v1905 = vpop.f32.mrb[0].mxu0
      %1906 = vmatprep.mubr.bf16.mxu0 0
      %1907 = vmatmul.mubr.bf16.gmra.mrb[0].mxu0 %v1814
      %v1908 = vpop.f32.mrb[0].mxu0
      %v1909 = vadd.f32 0.0, %v1908
      %v1910 = vpop.f32.mrb[0].mxu0
      %v1911 = vpop.f32.mrb[0].mxu0
      %v1912 = vadd.f32 0.0, %v1911
      %v1913 = vpop.f32.mrb[0].mxu0
      %1914 = vmatprep.mubr.bf16.mxu0 0
      %1915 = vmatmul.mubr.bf16.gmra.mrb[0].mxu0 %v1817
      %v1916 = vpop.f32.mrb[0].mxu0
      %v1917 = vadd.f32 0.0, %v1916
      %v1918 = vpop.f32.mrb[0].mxu0
      %v1919 = vpop.f32.mrb[0].mxu0
      %v1920 = vadd.f32 0.0, %v1919
      %v1921 = vpop.f32.mrb[0].mxu0
      %1922 = vmatprep.mubr.bf16.mxu0 0
      %1923 = vmatmul.mubr.bf16.gmra.mrb[0].mxu0 %v1820
      %v1924 = vpop.f32.mrb[0].mxu0
      %v1925 = vadd.f32 0.0, %v1924
      %v1926 = vpop.f32.mrb[0].mxu0
      %v1927 = vpop.f32.mrb[0].mxu0
      %v1928 = vadd.f32 0.0, %v1927
      %v1929 = vpop.f32.mrb[0].mxu0
      %1930 = vmatprep.mubr.bf16.mxu0 0
      %1931 = vmatmul.mubr.bf16.gmra.mrb[0].mxu0 %v1823
      %v1932 = vpop.f32.mrb[0].mxu0
      %v1933 = vadd.f32 0.0, %v1932
      %v1934 = vpop.f32.mrb[0].mxu0
      %v1935 = vpop.f32.mrb[0].mxu0
      %v1936 = vadd.f32 0.0, %v1935
      %v1937 = vpop.f32.mrb[0].mxu0
      %1938 = vmatprep.mubr.bf16.mxu0 0
      %1939 = vmatmul.mubr.bf16.gmra.mrb[0].mxu0 %v1826
      %v1940 = vpop.f32.mrb[0].mxu0
      %v1941 = vadd.f32 0.0, %v1940
      %v1942 = vpop.f32.mrb[0].mxu0
      %v1943 = vpop.f32.mrb[0].mxu0
      %v1944 = vadd.f32 0.0, %v1943
      %v1945 = vpop.f32.mrb[0].mxu0
      %1946 = vmatprep.mubr.bf16.mxu0 0
      %1947 = vmatmul.mubr.bf16.gmra.mrb[0].mxu0 %v1829
      %v1948 = vpop.f32.mrb[0].mxu0
      %v1949 = vadd.f32 0.0, %v1948
      %v1950 = vpop.f32.mrb[0].mxu0
      %v1951 = vpop.f32.mrb[0].mxu0
      %v1952 = vadd.f32 0.0, %v1951
      %v1953 = vpop.f32.mrb[0].mxu0
      %1954 = vmatprep.mubr.bf16.mxu0 0
      %1955 = vmatmul.mubr.bf16.gmra.mrb[0].mxu0 %v1832
      %v1956 = vpop.f32.mrb[0].mxu0
      %v1957 = vadd.f32 0.0, %v1956
      %v1958 = vpop.f32.mrb[0].mxu0
      %v1959 = vpop.f32.mrb[0].mxu0
      %v1960 = vadd.f32 0.0, %v1959
      %v1961 = vpop.f32.mrb[0].mxu0
      %1962 = vmatprep.mubr.bf16.mxu0 0
      %1963 = vmatmul.mubr.bf16.gmra.mrb[0].mxu0 %v1835
      %v1964 = vpop.f32.mrb[0].mxu0
      %v1965 = vadd.f32 0.0, %v1964
      %v1966 = vpop.f32.mrb[0].mxu0
      %v1967 = vpop.f32.mrb[0].mxu0
      %v1968 = vadd.f32 0.0, %v1967
      %v1969 = vpop.f32.mrb[0].mxu0
      %1970 = vmatprep.mubr.bf16.mxu0 0
      %1971 = vmatmul.mubr.bf16.gmra.mrb[0].mxu0 %v1838
      %v1972 = vpop.f32.mrb[0].mxu0
      %v1973 = vadd.f32 0.0, %v1972
      %v1974 = vpop.f32.mrb[0].mxu0
      %v1975 = vpop.f32.mrb[0].mxu0
      %v1976 = vadd.f32 0.0, %v1975
      %v1977 = vpop.f32.mrb[0].mxu0
      %1978 = vmatprep.mubr.bf16.mxu0 0
      %1979 = vmatmul.mubr.bf16.gmra.mrb[0].mxu0 %v1841
      %v1980 = vpop.f32.mrb[0].mxu0
      %v1981 = vadd.f32 0.0, %v1980
      %v1982 = vpop.f32.mrb[0].mxu0
      %v1983 = vpop.f32.mrb[0].mxu0
      %v1984 = vadd.f32 0.0, %v1983
      %v1985 = vpop.f32.mrb[0].mxu0
      %1986 = vmatprep.mubr.bf16.mxu0 0
      %1987 = vmatmul.mubr.bf16.gmra.mrb[0].mxu0 %v1844
      %v1988 = vpop.f32.mrb[0].mxu0
      %v1989 = vadd.f32 0.0, %v1988
      %v1990 = vpop.f32.mrb[0].mxu0
      %v1991 = vpop.f32.mrb[0].mxu0
      %v1992 = vadd.f32 0.0, %v1991
      %v1993 = vpop.f32.mrb[0].mxu0
      %1994 = vmatprep.mubr.bf16.mxu0 0
      %1995 = vmatmul.mubr.bf16.gmra.mrb[0].mxu0 %v1847
      %v1996 = vpop.f32.mrb[0].mxu0
      %v1997 = vadd.f32 0.0, %v1996
      %v1998 = vpop.f32.mrb[0].mxu0
      %v1999 = vpop.f32.mrb[0].mxu0
      %v2000 = vadd.f32 0.0, %v1999
      %v2001 = vpop.f32.mrb[0].mxu0
      %2002 = vmatprep.mubr.bf16.mxu0 0
      %2003 = vmatmul.mubr.bf16.gmra.mrb[0].mxu0 %v1850
      %v2004 = vpop.f32.mrb[0].mxu0
      %v2005 = vadd.f32 0.0, %v2004
      %v2006 = vpop.f32.mrb[0].mxu0
      %v2007 = vpop.f32.mrb[0].mxu0
      %v2008 = vadd.f32 0.0, %v2007
      %v2009 = vpop.f32.mrb[0].mxu0
      %2010 = vmatprep.mubr.bf16.mxu0 0
      %2011 = vmatmul.mubr.bf16.gmra.mrb[0].mxu0 %v1853
      %v2012 = vpop.f32.mrb[0].mxu0
      %v2013 = vadd.f32 0.0, %v2012
      %v2014 = vpop.f32.mrb[0].mxu0
      %v2015 = vpop.f32.mrb[0].mxu0
      %v2016 = vadd.f32 0.0, %v2015
      %v2017 = vpop.f32.mrb[0].mxu0
      %2018 = vdwg.mxu0
      %v2019 = vadd.f32 %v1725, %v1893
      %v2020 = vadd.f32 %v1726, %v1896
      %v2021 = vadd.f32 %v1727, %v1901
      %v2022 = vadd.f32 %v1728, %v1904
      %v2023 = vadd.f32 %v1729, %v1909
      %v2024 = vadd.f32 %v1730, %v1912
      %v2025 = vadd.f32 %v1731, %v1917
      %v2026 = vadd.f32 %v1732, %v1920
      %v2027 = vadd.f32 %v1733, %v1925
      %v2028 = vadd.f32 %v1734, %v1928
      %v2029 = vadd.f32 %v1735, %v1933
      %v2030 = vadd.f32 %v1736, %v1936
      %v2031 = vadd.f32 %v1737, %v1941
      %v2032 = vadd.f32 %v1738, %v1944
      %v2033 = vadd.f32 %v1739, %v1949
      %v2034 = vadd.f32 %v1740, %v1952
      %v2035 = vadd.f32 %v1741, %v1957
      %v2036 = vadd.f32 %v1742, %v1960
      %v2037 = vadd.f32 %v1743, %v1965
      %v2038 = vadd.f32 %v1744, %v1968
      %v2039 = vadd.f32 %v1745, %v1973
      %v2040 = vadd.f32 %v1746, %v1976
      %v2041 = vadd.f32 %v1747, %v1981
      %v2042 = vadd.f32 %v1748, %v1984
      %v2043 = vadd.f32 %v1749, %v1989
      %v2044 = vadd.f32 %v1750, %v1992
      %v2045 = vadd.f32 %v1751, %v1997
      %v2046 = vadd.f32 %v1752, %v2000
      %v2047 = vadd.f32 %v1753, %v2005
      %v2048 = vadd.f32 %v1754, %v2008
      %v2049 = vadd.f32 %v1755, %v2013
      %v2050 = vadd.f32 %v1756, %v2016
      %s2051 = scalar_lea.vmem %s272, 48
      %v2052 = vld [vmem:[%s2051] sm:$0xff]
      %v2053 = vld [vmem:[%s2051 + $0x8] sm:$0xff]
      %v2054 = vld [vmem:[%s2051 + $0x18] sm:$0xff]
      %v2055 = vld [vmem:[%s2051 + $0x20] sm:$0xff]
      %v2056 = vld [vmem:[%s2051 + $0x30] sm:$0xff]
      %v2057 = vld [vmem:[%s2051 + $0x38] sm:$0xff]
      %v2058 = vld [vmem:[%s2051 + $0x48] sm:$0xff]
      %v2059 = vld [vmem:[%s2051 + $0x50] sm:$0xff]
      %v2060 = vld [vmem:[%s2051 + $0x60] sm:$0xff]
      %v2061 = vld [vmem:[%s2051 + $0x68] sm:$0xff]
      %v2062 = vld [vmem:[%s2051 + $0x78] sm:$0xff]
      %v2063 = vld [vmem:[%s2051 + $0x80] sm:$0xff]
      %v2064 = vld [vmem:[%s2051 + $0x90] sm:$0xff]
      %v2065 = vld [vmem:[%s2051 + $0x98] sm:$0xff]
      %v2066 = vld [vmem:[%s2051 + $0xa8] sm:$0xff]
      %v2067 = vld [vmem:[%s2051 + $0xb0] sm:$0xff]
      %v2068 = vld [vmem:[%s2051 + $0xc0] sm:$0xff]
      %v2069 = vld [vmem:[%s2051 + $0xc8] sm:$0xff]
      %v2070 = vld [vmem:[%s2051 + $0xd8] sm:$0xff]
      %v2071 = vld [vmem:[%s2051 + $0xe0] sm:$0xff]
      %v2072 = vld [vmem:[%s2051 + $0xf0] sm:$0xff]
      %v2073 = vld [vmem:[%s2051 + $0xf8] sm:$0xff]
      %v2074 = vld [vmem:[%s2051 + $0x108] sm:$0xff]
      %v2075 = vld [vmem:[%s2051 + $0x110] sm:$0xff]
      %v2076 = vld [vmem:[%s2051 + $0x120] sm:$0xff]
      %v2077 = vld [vmem:[%s2051 + $0x128] sm:$0xff]
      %v2078 = vld [vmem:[%s2051 + $0x138] sm:$0xff]
      %v2079 = vld [vmem:[%s2051 + $0x140] sm:$0xff]
      %v2080 = vld [vmem:[%s2051 + $0x150] sm:$0xff]
      %v2081 = vld [vmem:[%s2051 + $0x158] sm:$0xff]
      %v2082 = vld [vmem:[%s2051 + $0x168] sm:$0xff]
      %v2083 = vld [vmem:[%s2051 + $0x170] sm:$0xff]
      %v2084 = vpack.c.bf16 %v2053, %v2052
      %v2085 = vpack.c.bf16 %v2055, %v2054
      %v2086 = vpack.c.bf16 %v2057, %v2056
      %v2087 = vpack.c.bf16 %v2059, %v2058
      %v2088 = vpack.c.bf16 %v2061, %v2060
      %v2089 = vpack.c.bf16 %v2063, %v2062
      %v2090 = vpack.c.bf16 %v2065, %v2064
      %v2091 = vpack.c.bf16 %v2067, %v2066
      %v2092 = vpack.c.bf16 %v2069, %v2068
      %v2093 = vpack.c.bf16 %v2071, %v2070
      %v2094 = vpack.c.bf16 %v2073, %v2072
      %v2095 = vpack.c.bf16 %v2075, %v2074
      %v2096 = vpack.c.bf16 %v2077, %v2076
      %v2097 = vpack.c.bf16 %v2079, %v2078
      %v2098 = vpack.c.bf16 %v2081, %v2080
      %v2099 = vpack.c.bf16 %v2083, %v2082
      %s2100 = scalar_lea.vmem %s1, 24
      %v2101 = vld [vmem:[%s2100] sm:$0xf]
      %v2103 = vsel %vm334, %v2084, 0
      %v2106 = vsel %vm334, %v2085, 0
      %v2109 = vsel %vm334, %v2086, 0
      %v2112 = vsel %vm334, %v2087, 0
      %v2115 = vsel %vm334, %v2088, 0
      %v2118 = vsel %vm334, %v2089, 0
      %v2121 = vsel %vm334, %v2090, 0
      %v2124 = vsel %vm334, %v2091, 0
      %v2127 = vsel %vm334, %v2092, 0
      %v2130 = vsel %vm334, %v2093, 0
      %v2133 = vsel %vm334, %v2094, 0
      %v2136 = vsel %vm334, %v2095, 0
      %v2139 = vsel %vm334, %v2096, 0
      %v2142 = vsel %vm334, %v2097, 0
      %v2145 = vsel %vm334, %v2098, 0
      %v2148 = vsel %vm334, %v2099, 0
      %v2151 = vsel %vm383, %v2101, 0
      %2153 = vmatprep.subr.bf16.mxu0 0
      %2154 = vmatpush1.bf16.msra.mxu0 %v2151
      %2155 = vmatprep.subr.bf16.mxu0 0
      %2156 = vmatpush1.bf16.msra.mxu0 0
      %2157 = vmatprep.subr.bf16.mxu0 0
      %2158 = vmatpush1.bf16.msra.mxu0 0
      %2159 = vmatprep.subr.bf16.mxu0 0
      %2160 = vmatpush1.bf16.msra.mxu0 0
      %2161 = vmatprep.subr.bf16.mxu0 0
      %2162 = vmatpush1.bf16.msra.mxu0 0
      %2163 = vmatprep.subr.bf16.mxu0 0
      %2164 = vmatpush1.bf16.msra.mxu0 0
      %2165 = vmatprep.subr.bf16.mxu0 0
      %2166 = vmatpush1.bf16.msra.mxu0 0
      %2167 = vmatprep.subr.bf16.mxu0 0
      %2168 = vmatpush1.bf16.msra.mxu0 0
      %2169 = vmatprep.subr.bf16.mxu0 0
      %2170 = vmatpush1.bf16.msra.mxu0 0
      %2171 = vmatprep.subr.bf16.mxu0 0
      %2172 = vmatpush1.bf16.msra.mxu0 0
      %2173 = vmatprep.subr.bf16.mxu0 0
      %2174 = vmatpush1.bf16.msra.mxu0 0
      %2175 = vmatprep.subr.bf16.mxu0 0
      %2176 = vmatpush1.bf16.msra.mxu0 0
      %2177 = vmatprep.subr.bf16.mxu0 0
      %2178 = vmatpush1.bf16.msra.mxu0 0
      %2179 = vmatprep.subr.bf16.mxu0 0
      %2180 = vmatpush1.bf16.msra.mxu0 0
      %2181 = vmatprep.subr.bf16.mxu0 0
      %2182 = vmatpush1.bf16.msra.mxu0 0
      %2183 = vmatprep.subr.bf16.mxu0 0
      %2184 = vmatpush1.bf16.msra.mxu0 0
      %2185 = vmatprep.mubr.bf16.mxu0 0
      %2186 = vmatmul.mubr.bf16.gmra.mrb[0].mxu0 %v2103
      %v2187 = vpop.f32.mrb[0].mxu0
      %v2188 = vadd.f32 0.0, %v2187
      %v2189 = vpop.f32.mrb[0].mxu0
      %v2190 = vpop.f32.mrb[0].mxu0
      %v2191 = vadd.f32 0.0, %v2190
      %v2192 = vpop.f32.mrb[0].mxu0
      %2193 = vmatprep.mubr.bf16.mxu0 0
      %2194 = vmatmul.mubr.bf16.gmra.mrb[0].mxu0 %v2106
      %v2195 = vpop.f32.mrb[0].mxu0
      %v2196 = vadd.f32 0.0, %v2195
      %v2197 = vpop.f32.mrb[0].mxu0
      %v2198 = vpop.f32.mrb[0].mxu0
      %v2199 = vadd.f32 0.0, %v2198
      %v2200 = vpop.f32.mrb[0].mxu0
      %2201 = vmatprep.mubr.bf16.mxu0 0
      %2202 = vmatmul.mubr.bf16.gmra.mrb[0].mxu0 %v2109
      %v2203 = vpop.f32.mrb[0].mxu0
      %v2204 = vadd.f32 0.0, %v2203
      %v2205 = vpop.f32.mrb[0].mxu0
      %v2206 = vpop.f32.mrb[0].mxu0
      %v2207 = vadd.f32 0.0, %v2206
      %v2208 = vpop.f32.mrb[0].mxu0
      %2209 = vmatprep.mubr.bf16.mxu0 0
      %2210 = vmatmul.mubr.bf16.gmra.mrb[0].mxu0 %v2112
      %v2211 = vpop.f32.mrb[0].mxu0
      %v2212 = vadd.f32 0.0, %v2211
      %v2213 = vpop.f32.mrb[0].mxu0
      %v2214 = vpop.f32.mrb[0].mxu0
      %v2215 = vadd.f32 0.0, %v2214
      %v2216 = vpop.f32.mrb[0].mxu0
      %2217 = vmatprep.mubr.bf16.mxu0 0
      %2218 = vmatmul.mubr.bf16.gmra.mrb[0].mxu0 %v2115
      %v2219 = vpop.f32.mrb[0].mxu0
      %v2220 = vadd.f32 0.0, %v2219
      %v2221 = vpop.f32.mrb[0].mxu0
      %v2222 = vpop.f32.mrb[0].mxu0
      %v2223 = vadd.f32 0.0, %v2222
      %v2224 = vpop.f32.mrb[0].mxu0
      %2225 = vmatprep.mubr.bf16.mxu0 0
      %2226 = vmatmul.mubr.bf16.gmra.mrb[0].mxu0 %v2118
      %v2227 = vpop.f32.mrb[0].mxu0
      %v2228 = vadd.f32 0.0, %v2227
      %v2229 = vpop.f32.mrb[0].mxu0
      %v2230 = vpop.f32.mrb[0].mxu0
      %v2231 = vadd.f32 0.0, %v2230
      %v2232 = vpop.f32.mrb[0].mxu0
      %2233 = vmatprep.mubr.bf16.mxu0 0
      %2234 = vmatmul.mubr.bf16.gmra.mrb[0].mxu0 %v2121
      %v2235 = vpop.f32.mrb[0].mxu0
      %v2236 = vadd.f32 0.0, %v2235
      %v2237 = vpop.f32.mrb[0].mxu0
      %v2238 = vpop.f32.mrb[0].mxu0
      %v2239 = vadd.f32 0.0, %v2238
      %v2240 = vpop.f32.mrb[0].mxu0
      %2241 = vmatprep.mubr.bf16.mxu0 0
      %2242 = vmatmul.mubr.bf16.gmra.mrb[0].mxu0 %v2124
      %v2243 = vpop.f32.mrb[0].mxu0
      %v2244 = vadd.f32 0.0, %v2243
      %v2245 = vpop.f32.mrb[0].mxu0
      %v2246 = vpop.f32.mrb[0].mxu0
      %v2247 = vadd.f32 0.0, %v2246
      %v2248 = vpop.f32.mrb[0].mxu0
      %2249 = vmatprep.mubr.bf16.mxu0 0
      %2250 = vmatmul.mubr.bf16.gmra.mrb[0].mxu0 %v2127
      %v2251 = vpop.f32.mrb[0].mxu0
      %v2252 = vadd.f32 0.0, %v2251
      %v2253 = vpop.f32.mrb[0].mxu0
      %v2254 = vpop.f32.mrb[0].mxu0
      %v2255 = vadd.f32 0.0, %v2254
      %v2256 = vpop.f32.mrb[0].mxu0
      %2257 = vmatprep.mubr.bf16.mxu0 0
      %2258 = vmatmul.mubr.bf16.gmra.mrb[0].mxu0 %v2130
      %v2259 = vpop.f32.mrb[0].mxu0
      %v2260 = vadd.f32 0.0, %v2259
      %v2261 = vpop.f32.mrb[0].mxu0
      %v2262 = vpop.f32.mrb[0].mxu0
      %v2263 = vadd.f32 0.0, %v2262
      %v2264 = vpop.f32.mrb[0].mxu0
      %2265 = vmatprep.mubr.bf16.mxu0 0
      %2266 = vmatmul.mubr.bf16.gmra.mrb[0].mxu0 %v2133
      %v2267 = vpop.f32.mrb[0].mxu0
      %v2268 = vadd.f32 0.0, %v2267
      %v2269 = vpop.f32.mrb[0].mxu0
      %v2270 = vpop.f32.mrb[0].mxu0
      %v2271 = vadd.f32 0.0, %v2270
      %v2272 = vpop.f32.mrb[0].mxu0
      %2273 = vmatprep.mubr.bf16.mxu0 0
      %2274 = vmatmul.mubr.bf16.gmra.mrb[0].mxu0 %v2136
      %v2275 = vpop.f32.mrb[0].mxu0
      %v2276 = vadd.f32 0.0, %v2275
      %v2277 = vpop.f32.mrb[0].mxu0
      %v2278 = vpop.f32.mrb[0].mxu0
      %v2279 = vadd.f32 0.0, %v2278
      %v2280 = vpop.f32.mrb[0].mxu0
      %2281 = vmatprep.mubr.bf16.mxu0 0
      %2282 = vmatmul.mubr.bf16.gmra.mrb[0].mxu0 %v2139
      %v2283 = vpop.f32.mrb[0].mxu0
      %v2284 = vadd.f32 0.0, %v2283
      %v2285 = vpop.f32.mrb[0].mxu0
      %v2286 = vpop.f32.mrb[0].mxu0
      %v2287 = vadd.f32 0.0, %v2286
      %v2288 = vpop.f32.mrb[0].mxu0
      %2289 = vmatprep.mubr.bf16.mxu0 0
      %2290 = vmatmul.mubr.bf16.gmra.mrb[0].mxu0 %v2142
      %v2291 = vpop.f32.mrb[0].mxu0
      %v2292 = vadd.f32 0.0, %v2291
      %v2293 = vpop.f32.mrb[0].mxu0
      %v2294 = vpop.f32.mrb[0].mxu0
      %v2295 = vadd.f32 0.0, %v2294
      %v2296 = vpop.f32.mrb[0].mxu0
      %2297 = vmatprep.mubr.bf16.mxu0 0
      %2298 = vmatmul.mubr.bf16.gmra.mrb[0].mxu0 %v2145
      %v2299 = vpop.f32.mrb[0].mxu0
      %v2300 = vadd.f32 0.0, %v2299
      %v2301 = vpop.f32.mrb[0].mxu0
      %v2302 = vpop.f32.mrb[0].mxu0
      %v2303 = vadd.f32 0.0, %v2302
      %v2304 = vpop.f32.mrb[0].mxu0
      %2305 = vmatprep.mubr.bf16.mxu0 0
      %2306 = vmatmul.mubr.bf16.gmra.mrb[0].mxu0 %v2148
      %v2307 = vpop.f32.mrb[0].mxu0
      %v2308 = vadd.f32 0.0, %v2307
      %v2309 = vpop.f32.mrb[0].mxu0
      %v2310 = vpop.f32.mrb[0].mxu0
      %v2311 = vadd.f32 0.0, %v2310
      %v2312 = vpop.f32.mrb[0].mxu0
      %2313 = vdwg.mxu0
      %v2314 = vadd.f32 %v2019, %v2188
      %v2315 = vadd.f32 %v2020, %v2191
      %v2316 = vadd.f32 %v2021, %v2196
      %v2317 = vadd.f32 %v2022, %v2199
      %v2318 = vadd.f32 %v2023, %v2204
      %v2319 = vadd.f32 %v2024, %v2207
      %v2320 = vadd.f32 %v2025, %v2212
      %v2321 = vadd.f32 %v2026, %v2215
      %v2322 = vadd.f32 %v2027, %v2220
      %v2323 = vadd.f32 %v2028, %v2223
      %v2324 = vadd.f32 %v2029, %v2228
      %v2325 = vadd.f32 %v2030, %v2231
      %v2326 = vadd.f32 %v2031, %v2236
      %v2327 = vadd.f32 %v2032, %v2239
      %v2328 = vadd.f32 %v2033, %v2244
      %v2329 = vadd.f32 %v2034, %v2247
      %v2330 = vadd.f32 %v2035, %v2252
      %v2331 = vadd.f32 %v2036, %v2255
      %v2332 = vadd.f32 %v2037, %v2260
      %v2333 = vadd.f32 %v2038, %v2263
      %v2334 = vadd.f32 %v2039, %v2268
      %v2335 = vadd.f32 %v2040, %v2271
      %v2336 = vadd.f32 %v2041, %v2276
      %v2337 = vadd.f32 %v2042, %v2279
      %v2338 = vadd.f32 %v2043, %v2284
      %v2339 = vadd.f32 %v2044, %v2287
      %v2340 = vadd.f32 %v2045, %v2292
      %v2341 = vadd.f32 %v2046, %v2295
      %v2342 = vadd.f32 %v2047, %v2300
      %v2343 = vadd.f32 %v2048, %v2303
      %v2344 = vadd.f32 %v2049, %v2308
      %v2345 = vadd.f32 %v2050, %v2311
      %v2346 = vld [vmem:[%s2051 + $0x1] sm:$0xff]
      %v2347 = vld [vmem:[%s2051 + $0x9] sm:$0xff]
      %v2348 = vld [vmem:[%s2051 + $0x19] sm:$0xff]
      %v2349 = vld [vmem:[%s2051 + $0x21] sm:$0xff]
      %v2350 = vld [vmem:[%s2051 + $0x31] sm:$0xff]
      %v2351 = vld [vmem:[%s2051 + $0x39] sm:$0xff]
      %v2352 = vld [vmem:[%s2051 + $0x49] sm:$0xff]
      %v2353 = vld [vmem:[%s2051 + $0x51] sm:$0xff]
      %v2354 = vld [vmem:[%s2051 + $0x61] sm:$0xff]
      %v2355 = vld [vmem:[%s2051 + $0x69] sm:$0xff]
      %v2356 = vld [vmem:[%s2051 + $0x79] sm:$0xff]
      %v2357 = vld [vmem:[%s2051 + $0x81] sm:$0xff]
      %v2358 = vld [vmem:[%s2051 + $0x91] sm:$0xff]
      %v2359 = vld [vmem:[%s2051 + $0x99] sm:$0xff]
      %v2360 = vld [vmem:[%s2051 + $0xa9] sm:$0xff]
      %v2361 = vld [vmem:[%s2051 + $0xb1] sm:$0xff]
      %v2362 = vld [vmem:[%s2051 + $0xc1] sm:$0xff]
      %v2363 = vld [vmem:[%s2051 + $0xc9] sm:$0xff]
      %v2364 = vld [vmem:[%s2051 + $0xd9] sm:$0xff]
      %v2365 = vld [vmem:[%s2051 + $0xe1] sm:$0xff]
      %v2366 = vld [vmem:[%s2051 + $0xf1] sm:$0xff]
      %v2367 = vld [vmem:[%s2051 + $0xf9] sm:$0xff]
      %v2368 = vld [vmem:[%s2051 + $0x109] sm:$0xff]
      %v2369 = vld [vmem:[%s2051 + $0x111] sm:$0xff]
      %v2370 = vld [vmem:[%s2051 + $0x121] sm:$0xff]
      %v2371 = vld [vmem:[%s2051 + $0x129] sm:$0xff]
      %v2372 = vld [vmem:[%s2051 + $0x139] sm:$0xff]
      %v2373 = vld [vmem:[%s2051 + $0x141] sm:$0xff]
      %v2374 = vld [vmem:[%s2051 + $0x151] sm:$0xff]
      %v2375 = vld [vmem:[%s2051 + $0x159] sm:$0xff]
      %v2376 = vld [vmem:[%s2051 + $0x169] sm:$0xff]
      %v2377 = vld [vmem:[%s2051 + $0x171] sm:$0xff]
      %v2378 = vpack.c.bf16 %v2347, %v2346
      %v2379 = vpack.c.bf16 %v2349, %v2348
      %v2380 = vpack.c.bf16 %v2351, %v2350
      %v2381 = vpack.c.bf16 %v2353, %v2352
      %v2382 = vpack.c.bf16 %v2355, %v2354
      %v2383 = vpack.c.bf16 %v2357, %v2356
      %v2384 = vpack.c.bf16 %v2359, %v2358
      %v2385 = vpack.c.bf16 %v2361, %v2360
      %v2386 = vpack.c.bf16 %v2363, %v2362
      %v2387 = vpack.c.bf16 %v2365, %v2364
      %v2388 = vpack.c.bf16 %v2367, %v2366
      %v2389 = vpack.c.bf16 %v2369, %v2368
      %v2390 = vpack.c.bf16 %v2371, %v2370
      %v2391 = vpack.c.bf16 %v2373, %v2372
      %v2392 = vpack.c.bf16 %v2375, %v2374
      %v2393 = vpack.c.bf16 %v2377, %v2376
      %s2394 = scalar_lea.vmem %s1, 28
      %v2395 = vld [vmem:[%s2394] sm:$0xf]
      %v2397 = vsel %vm334, %v2378, 0
      %v2400 = vsel %vm334, %v2379, 0
      %v2403 = vsel %vm334, %v2380, 0
      %v2406 = vsel %vm334, %v2381, 0
      %v2409 = vsel %vm334, %v2382, 0
      %v2412 = vsel %vm334, %v2383, 0
      %v2415 = vsel %vm334, %v2384, 0
      %v2418 = vsel %vm334, %v2385, 0
      %v2421 = vsel %vm334, %v2386, 0
      %v2424 = vsel %vm334, %v2387, 0
      %v2427 = vsel %vm334, %v2388, 0
      %v2430 = vsel %vm334, %v2389, 0
      %v2433 = vsel %vm334, %v2390, 0
      %v2436 = vsel %vm334, %v2391, 0
      %v2439 = vsel %vm334, %v2392, 0
      %v2442 = vsel %vm334, %v2393, 0
      %v2445 = vsel %vm383, %v2395, 0
      %2447 = vmatprep.subr.bf16.mxu0 0
      %2448 = vmatpush1.bf16.msra.mxu0 %v2445
      %2449 = vmatprep.subr.bf16.mxu0 0
      %2450 = vmatpush1.bf16.msra.mxu0 0
      %2451 = vmatprep.subr.bf16.mxu0 0
      %2452 = vmatpush1.bf16.msra.mxu0 0
      %2453 = vmatprep.subr.bf16.mxu0 0
      %2454 = vmatpush1.bf16.msra.mxu0 0
      %2455 = vmatprep.subr.bf16.mxu0 0
      %2456 = vmatpush1.bf16.msra.mxu0 0
      %2457 = vmatprep.subr.bf16.mxu0 0
      %2458 = vmatpush1.bf16.msra.mxu0 0
      %2459 = vmatprep.subr.bf16.mxu0 0
      %2460 = vmatpush1.bf16.msra.mxu0 0
      %2461 = vmatprep.subr.bf16.mxu0 0
      %2462 = vmatpush1.bf16.msra.mxu0 0
      %2463 = vmatprep.subr.bf16.mxu0 0
      %2464 = vmatpush1.bf16.msra.mxu0 0
      %2465 = vmatprep.subr.bf16.mxu0 0
      %2466 = vmatpush1.bf16.msra.mxu0 0
      %2467 = vmatprep.subr.bf16.mxu0 0
      %2468 = vmatpush1.bf16.msra.mxu0 0
      %2469 = vmatprep.subr.bf16.mxu0 0
      %2470 = vmatpush1.bf16.msra.mxu0 0
      %2471 = vmatprep.subr.bf16.mxu0 0
      %2472 = vmatpush1.bf16.msra.mxu0 0
      %2473 = vmatprep.subr.bf16.mxu0 0
      %2474 = vmatpush1.bf16.msra.mxu0 0
      %2475 = vmatprep.subr.bf16.mxu0 0
      %2476 = vmatpush1.bf16.msra.mxu0 0
      %2477 = vmatprep.subr.bf16.mxu0 0
      %2478 = vmatpush1.bf16.msra.mxu0 0
      %2479 = vmatprep.mubr.bf16.mxu0 0
      %2480 = vmatmul.mubr.bf16.gmra.mrb[0].mxu0 %v2397
      %v2481 = vpop.f32.mrb[0].mxu0
      %v2482 = vadd.f32 0.0, %v2481
      %v2483 = vpop.f32.mrb[0].mxu0
      %v2484 = vpop.f32.mrb[0].mxu0
      %v2485 = vadd.f32 0.0, %v2484
      %v2486 = vpop.f32.mrb[0].mxu0
      %2487 = vmatprep.mubr.bf16.mxu0 0
      %2488 = vmatmul.mubr.bf16.gmra.mrb[0].mxu0 %v2400
      %v2489 = vpop.f32.mrb[0].mxu0
      %v2490 = vadd.f32 0.0, %v2489
      %v2491 = vpop.f32.mrb[0].mxu0
      %v2492 = vpop.f32.mrb[0].mxu0
      %v2493 = vadd.f32 0.0, %v2492
      %v2494 = vpop.f32.mrb[0].mxu0
      %2495 = vmatprep.mubr.bf16.mxu0 0
      %2496 = vmatmul.mubr.bf16.gmra.mrb[0].mxu0 %v2403
      %v2497 = vpop.f32.mrb[0].mxu0
      %v2498 = vadd.f32 0.0, %v2497
      %v2499 = vpop.f32.mrb[0].mxu0
      %v2500 = vpop.f32.mrb[0].mxu0
      %v2501 = vadd.f32 0.0, %v2500
      %v2502 = vpop.f32.mrb[0].mxu0
      %2503 = vmatprep.mubr.bf16.mxu0 0
      %2504 = vmatmul.mubr.bf16.gmra.mrb[0].mxu0 %v2406
      %v2505 = vpop.f32.mrb[0].mxu0
      %v2506 = vadd.f32 0.0, %v2505
      %v2507 = vpop.f32.mrb[0].mxu0
      %v2508 = vpop.f32.mrb[0].mxu0
      %v2509 = vadd.f32 0.0, %v2508
      %v2510 = vpop.f32.mrb[0].mxu0
      %2511 = vmatprep.mubr.bf16.mxu0 0
      %2512 = vmatmul.mubr.bf16.gmra.mrb[0].mxu0 %v2409
      %v2513 = vpop.f32.mrb[0].mxu0
      %v2514 = vadd.f32 0.0, %v2513
      %v2515 = vpop.f32.mrb[0].mxu0
      %v2516 = vpop.f32.mrb[0].mxu0
      %v2517 = vadd.f32 0.0, %v2516
      %v2518 = vpop.f32.mrb[0].mxu0
      %2519 = vmatprep.mubr.bf16.mxu0 0
      %2520 = vmatmul.mubr.bf16.gmra.mrb[0].mxu0 %v2412
      %v2521 = vpop.f32.mrb[0].mxu0
      %v2522 = vadd.f32 0.0, %v2521
      %v2523 = vpop.f32.mrb[0].mxu0
      %v2524 = vpop.f32.mrb[0].mxu0
      %v2525 = vadd.f32 0.0, %v2524
      %v2526 = vpop.f32.mrb[0].mxu0
      %2527 = vmatprep.mubr.bf16.mxu0 0
      %2528 = vmatmul.mubr.bf16.gmra.mrb[0].mxu0 %v2415
      %v2529 = vpop.f32.mrb[0].mxu0
      %v2530 = vadd.f32 0.0, %v2529
      %v2531 = vpop.f32.mrb[0].mxu0
      %v2532 = vpop.f32.mrb[0].mxu0
      %v2533 = vadd.f32 0.0, %v2532
      %v2534 = vpop.f32.mrb[0].mxu0
      %2535 = vmatprep.mubr.bf16.mxu0 0
      %2536 = vmatmul.mubr.bf16.gmra.mrb[0].mxu0 %v2418
      %v2537 = vpop.f32.mrb[0].mxu0
      %v2538 = vadd.f32 0.0, %v2537
      %v2539 = vpop.f32.mrb[0].mxu0
      %v2540 = vpop.f32.mrb[0].mxu0
      %v2541 = vadd.f32 0.0, %v2540
      %v2542 = vpop.f32.mrb[0].mxu0
      %2543 = vmatprep.mubr.bf16.mxu0 0
      %2544 = vmatmul.mubr.bf16.gmra.mrb[0].mxu0 %v2421
      %v2545 = vpop.f32.mrb[0].mxu0
      %v2546 = vadd.f32 0.0, %v2545
      %v2547 = vpop.f32.mrb[0].mxu0
      %v2548 = vpop.f32.mrb[0].mxu0
      %v2549 = vadd.f32 0.0, %v2548
      %v2550 = vpop.f32.mrb[0].mxu0
      %2551 = vmatprep.mubr.bf16.mxu0 0
      %2552 = vmatmul.mubr.bf16.gmra.mrb[0].mxu0 %v2424
      %v2553 = vpop.f32.mrb[0].mxu0
      %v2554 = vadd.f32 0.0, %v2553
      %v2555 = vpop.f32.mrb[0].mxu0
      %v2556 = vpop.f32.mrb[0].mxu0
      %v2557 = vadd.f32 0.0, %v2556
      %v2558 = vpop.f32.mrb[0].mxu0
      %2559 = vmatprep.mubr.bf16.mxu0 0
      %2560 = vmatmul.mubr.bf16.gmra.mrb[0].mxu0 %v2427
      %v2561 = vpop.f32.mrb[0].mxu0
      %v2562 = vadd.f32 0.0, %v2561
      %v2563 = vpop.f32.mrb[0].mxu0
      %v2564 = vpop.f32.mrb[0].mxu0
      %v2565 = vadd.f32 0.0, %v2564
      %v2566 = vpop.f32.mrb[0].mxu0
      %2567 = vmatprep.mubr.bf16.mxu0 0
      %2568 = vmatmul.mubr.bf16.gmra.mrb[0].mxu0 %v2430
      %v2569 = vpop.f32.mrb[0].mxu0
      %v2570 = vadd.f32 0.0, %v2569
      %v2571 = vpop.f32.mrb[0].mxu0
      %v2572 = vpop.f32.mrb[0].mxu0
      %v2573 = vadd.f32 0.0, %v2572
      %v2574 = vpop.f32.mrb[0].mxu0
      %2575 = vmatprep.mubr.bf16.mxu0 0
      %2576 = vmatmul.mubr.bf16.gmra.mrb[0].mxu0 %v2433
      %v2577 = vpop.f32.mrb[0].mxu0
      %v2578 = vadd.f32 0.0, %v2577
      %v2579 = vpop.f32.mrb[0].mxu0
      %v2580 = vpop.f32.mrb[0].mxu0
      %v2581 = vadd.f32 0.0, %v2580
      %v2582 = vpop.f32.mrb[0].mxu0
      %2583 = vmatprep.mubr.bf16.mxu0 0
      %2584 = vmatmul.mubr.bf16.gmra.mrb[0].mxu0 %v2436
      %v2585 = vpop.f32.mrb[0].mxu0
      %v2586 = vadd.f32 0.0, %v2585
      %v2587 = vpop.f32.mrb[0].mxu0
      %v2588 = vpop.f32.mrb[0].mxu0
      %v2589 = vadd.f32 0.0, %v2588
      %v2590 = vpop.f32.mrb[0].mxu0
      %2591 = vmatprep.mubr.bf16.mxu0 0
      %2592 = vmatmul.mubr.bf16.gmra.mrb[0].mxu0 %v2439
      %v2593 = vpop.f32.mrb[0].mxu0
      %v2594 = vadd.f32 0.0, %v2593
      %v2595 = vpop.f32.mrb[0].mxu0
      %v2596 = vpop.f32.mrb[0].mxu0
      %v2597 = vadd.f32 0.0, %v2596
      %v2598 = vpop.f32.mrb[0].mxu0
      %2599 = vmatprep.mubr.bf16.mxu0 0
      %2600 = vmatmul.mubr.bf16.gmra.mrb[0].mxu0 %v2442
      %v2601 = vpop.f32.mrb[0].mxu0
      %v2602 = vadd.f32 0.0, %v2601
      %v2603 = vpop.f32.mrb[0].mxu0
      %v2604 = vpop.f32.mrb[0].mxu0
      %v2605 = vadd.f32 0.0, %v2604
      %v2606 = vpop.f32.mrb[0].mxu0
      %2607 = vdwg.mxu0
      %v2608 = vadd.f32 %v2314, %v2482
      %v2609 = vadd.f32 %v2315, %v2485
      %v2610 = vadd.f32 %v2316, %v2490
      %v2611 = vadd.f32 %v2317, %v2493
      %v2612 = vadd.f32 %v2318, %v2498
      %v2613 = vadd.f32 %v2319, %v2501
      %v2614 = vadd.f32 %v2320, %v2506
      %v2615 = vadd.f32 %v2321, %v2509
      %v2616 = vadd.f32 %v2322, %v2514
      %v2617 = vadd.f32 %v2323, %v2517
      %v2618 = vadd.f32 %v2324, %v2522
      %v2619 = vadd.f32 %v2325, %v2525
      %v2620 = vadd.f32 %v2326, %v2530
      %v2621 = vadd.f32 %v2327, %v2533
      %v2622 = vadd.f32 %v2328, %v2538
      %v2623 = vadd.f32 %v2329, %v2541
      %v2624 = vadd.f32 %v2330, %v2546
      %v2625 = vadd.f32 %v2331, %v2549
      %v2626 = vadd.f32 %v2332, %v2554
      %v2627 = vadd.f32 %v2333, %v2557
      %v2628 = vadd.f32 %v2334, %v2562
      %v2629 = vadd.f32 %v2335, %v2565
      %v2630 = vadd.f32 %v2336, %v2570
      %v2631 = vadd.f32 %v2337, %v2573
      %v2632 = vadd.f32 %v2338, %v2578
      %v2633 = vadd.f32 %v2339, %v2581
      %v2634 = vadd.f32 %v2340, %v2586
      %v2635 = vadd.f32 %v2341, %v2589
      %v2636 = vadd.f32 %v2342, %v2594
      %v2637 = vadd.f32 %v2343, %v2597
      %v2638 = vadd.f32 %v2344, %v2602
      %v2639 = vadd.f32 %v2345, %v2605
      %v2640 = vld [vmem:[%s2051 + $0x2] sm:$0xff]
      %v2641 = vld [vmem:[%s2051 + $0xa] sm:$0xff]
      %v2642 = vld [vmem:[%s2051 + $0x1a] sm:$0xff]
      %v2643 = vld [vmem:[%s2051 + $0x22] sm:$0xff]
      %v2644 = vld [vmem:[%s2051 + $0x32] sm:$0xff]
      %v2645 = vld [vmem:[%s2051 + $0x3a] sm:$0xff]
      %v2646 = vld [vmem:[%s2051 + $0x4a] sm:$0xff]
      %v2647 = vld [vmem:[%s2051 + $0x52] sm:$0xff]
      %v2648 = vld [vmem:[%s2051 + $0x62] sm:$0xff]
      %v2649 = vld [vmem:[%s2051 + $0x6a] sm:$0xff]
      %v2650 = vld [vmem:[%s2051 + $0x7a] sm:$0xff]
      %v2651 = vld [vmem:[%s2051 + $0x82] sm:$0xff]
      %v2652 = vld [vmem:[%s2051 + $0x92] sm:$0xff]
      %v2653 = vld [vmem:[%s2051 + $0x9a] sm:$0xff]
      %v2654 = vld [vmem:[%s2051 + $0xaa] sm:$0xff]
      %v2655 = vld [vmem:[%s2051 + $0xb2] sm:$0xff]
      %v2656 = vld [vmem:[%s2051 + $0xc2] sm:$0xff]
      %v2657 = vld [vmem:[%s2051 + $0xca] sm:$0xff]
      %v2658 = vld [vmem:[%s2051 + $0xda] sm:$0xff]
      %v2659 = vld [vmem:[%s2051 + $0xe2] sm:$0xff]
      %v2660 = vld [vmem:[%s2051 + $0xf2] sm:$0xff]
      %v2661 = vld [vmem:[%s2051 + $0xfa] sm:$0xff]
      %v2662 = vld [vmem:[%s2051 + $0x10a] sm:$0xff]
      %v2663 = vld [vmem:[%s2051 + $0x112] sm:$0xff]
      %v2664 = vld [vmem:[%s2051 + $0x122] sm:$0xff]
      %v2665 = vld [vmem:[%s2051 + $0x12a] sm:$0xff]
      %v2666 = vld [vmem:[%s2051 + $0x13a] sm:$0xff]
      %v2667 = vld [vmem:[%s2051 + $0x142] sm:$0xff]
      %v2668 = vld [vmem:[%s2051 + $0x152] sm:$0xff]
      %v2669 = vld [vmem:[%s2051 + $0x15a] sm:$0xff]
      %v2670 = vld [vmem:[%s2051 + $0x16a] sm:$0xff]
      %v2671 = vld [vmem:[%s2051 + $0x172] sm:$0xff]
      %v2672 = vpack.c.bf16 %v2641, %v2640
      %v2673 = vpack.c.bf16 %v2643, %v2642
      %v2674 = vpack.c.bf16 %v2645, %v2644
      %v2675 = vpack.c.bf16 %v2647, %v2646
      %v2676 = vpack.c.bf16 %v2649, %v2648
      %v2677 = vpack.c.bf16 %v2651, %v2650
      %v2678 = vpack.c.bf16 %v2653, %v2652
      %v2679 = vpack.c.bf16 %v2655, %v2654
      %v2680 = vpack.c.bf16 %v2657, %v2656
      %v2681 = vpack.c.bf16 %v2659, %v2658
      %v2682 = vpack.c.bf16 %v2661, %v2660
      %v2683 = vpack.c.bf16 %v2663, %v2662
      %v2684 = vpack.c.bf16 %v2665, %v2664
      %v2685 = vpack.c.bf16 %v2667, %v2666
      %v2686 = vpack.c.bf16 %v2669, %v2668
      %v2687 = vpack.c.bf16 %v2671, %v2670
      %s2688 = scalar_lea.vmem %s1, 32
      %v2689 = vld [vmem:[%s2688] sm:$0xf]
      %v2691 = vsel %vm334, %v2672, 0
      %v2694 = vsel %vm334, %v2673, 0
      %v2697 = vsel %vm334, %v2674, 0
      %v2700 = vsel %vm334, %v2675, 0
      %v2703 = vsel %vm334, %v2676, 0
      %v2706 = vsel %vm334, %v2677, 0
      %v2709 = vsel %vm334, %v2678, 0
      %v2712 = vsel %vm334, %v2679, 0
      %v2715 = vsel %vm334, %v2680, 0
      %v2718 = vsel %vm334, %v2681, 0
      %v2721 = vsel %vm334, %v2682, 0
      %v2724 = vsel %vm334, %v2683, 0
      %v2727 = vsel %vm334, %v2684, 0
      %v2730 = vsel %vm334, %v2685, 0
      %v2733 = vsel %vm334, %v2686, 0
      %v2736 = vsel %vm334, %v2687, 0
      %v2739 = vsel %vm383, %v2689, 0
      %2741 = vmatprep.subr.bf16.mxu0 0
      %2742 = vmatpush1.bf16.msra.mxu0 %v2739
      %2743 = vmatprep.subr.bf16.mxu0 0
      %2744 = vmatpush1.bf16.msra.mxu0 0
      %2745 = vmatprep.subr.bf16.mxu0 0
      %2746 = vmatpush1.bf16.msra.mxu0 0
      %2747 = vmatprep.subr.bf16.mxu0 0
      %2748 = vmatpush1.bf16.msra.mxu0 0
      %2749 = vmatprep.subr.bf16.mxu0 0
      %2750 = vmatpush1.bf16.msra.mxu0 0
      %2751 = vmatprep.subr.bf16.mxu0 0
      %2752 = vmatpush1.bf16.msra.mxu0 0
      %2753 = vmatprep.subr.bf16.mxu0 0
      %2754 = vmatpush1.bf16.msra.mxu0 0
      %2755 = vmatprep.subr.bf16.mxu0 0
      %2756 = vmatpush1.bf16.msra.mxu0 0
      %2757 = vmatprep.subr.bf16.mxu0 0
      %2758 = vmatpush1.bf16.msra.mxu0 0
      %2759 = vmatprep.subr.bf16.mxu0 0
      %2760 = vmatpush1.bf16.msra.mxu0 0
      %2761 = vmatprep.subr.bf16.mxu0 0
      %2762 = vmatpush1.bf16.msra.mxu0 0
      %2763 = vmatprep.subr.bf16.mxu0 0
      %2764 = vmatpush1.bf16.msra.mxu0 0
      %2765 = vmatprep.subr.bf16.mxu0 0
      %2766 = vmatpush1.bf16.msra.mxu0 0
      %2767 = vmatprep.subr.bf16.mxu0 0
      %2768 = vmatpush1.bf16.msra.mxu0 0
      %2769 = vmatprep.subr.bf16.mxu0 0
      %2770 = vmatpush1.bf16.msra.mxu0 0
      %2771 = vmatprep.subr.bf16.mxu0 0
      %2772 = vmatpush1.bf16.msra.mxu0 0
      %2773 = vmatprep.mubr.bf16.mxu0 0
      %2774 = vmatmul.mubr.bf16.gmra.mrb[0].mxu0 %v2691
      %v2775 = vpop.f32.mrb[0].mxu0
      %v2776 = vadd.f32 0.0, %v2775
      %v2777 = vpop.f32.mrb[0].mxu0
      %v2778 = vpop.f32.mrb[0].mxu0
      %v2779 = vadd.f32 0.0, %v2778
      %v2780 = vpop.f32.mrb[0].mxu0
      %2781 = vmatprep.mubr.bf16.mxu0 0
      %2782 = vmatmul.mubr.bf16.gmra.mrb[0].mxu0 %v2694
      %v2783 = vpop.f32.mrb[0].mxu0
      %v2784 = vadd.f32 0.0, %v2783
      %v2785 = vpop.f32.mrb[0].mxu0
      %v2786 = vpop.f32.mrb[0].mxu0
      %v2787 = vadd.f32 0.0, %v2786
      %v2788 = vpop.f32.mrb[0].mxu0
      %2789 = vmatprep.mubr.bf16.mxu0 0
      %2790 = vmatmul.mubr.bf16.gmra.mrb[0].mxu0 %v2697
      %v2791 = vpop.f32.mrb[0].mxu0
      %v2792 = vadd.f32 0.0, %v2791
      %v2793 = vpop.f32.mrb[0].mxu0
      %v2794 = vpop.f32.mrb[0].mxu0
      %v2795 = vadd.f32 0.0, %v2794
      %v2796 = vpop.f32.mrb[0].mxu0
      %2797 = vmatprep.mubr.bf16.mxu0 0
      %2798 = vmatmul.mubr.bf16.gmra.mrb[0].mxu0 %v2700
      %v2799 = vpop.f32.mrb[0].mxu0
      %v2800 = vadd.f32 0.0, %v2799
      %v2801 = vpop.f32.mrb[0].mxu0
      %v2802 = vpop.f32.mrb[0].mxu0
      %v2803 = vadd.f32 0.0, %v2802
      %v2804 = vpop.f32.mrb[0].mxu0
      %2805 = vmatprep.mubr.bf16.mxu0 0
      %2806 = vmatmul.mubr.bf16.gmra.mrb[0].mxu0 %v2703
      %v2807 = vpop.f32.mrb[0].mxu0
      %v2808 = vadd.f32 0.0, %v2807
      %v2809 = vpop.f32.mrb[0].mxu0
      %v2810 = vpop.f32.mrb[0].mxu0
      %v2811 = vadd.f32 0.0, %v2810
      %v2812 = vpop.f32.mrb[0].mxu0
      %2813 = vmatprep.mubr.bf16.mxu0 0
      %2814 = vmatmul.mubr.bf16.gmra.mrb[0].mxu0 %v2706
      %v2815 = vpop.f32.mrb[0].mxu0
      %v2816 = vadd.f32 0.0, %v2815
      %v2817 = vpop.f32.mrb[0].mxu0
      %v2818 = vpop.f32.mrb[0].mxu0
      %v2819 = vadd.f32 0.0, %v2818
      %v2820 = vpop.f32.mrb[0].mxu0
      %2821 = vmatprep.mubr.bf16.mxu0 0
      %2822 = vmatmul.mubr.bf16.gmra.mrb[0].mxu0 %v2709
      %v2823 = vpop.f32.mrb[0].mxu0
      %v2824 = vadd.f32 0.0, %v2823
      %v2825 = vpop.f32.mrb[0].mxu0
      %v2826 = vpop.f32.mrb[0].mxu0
      %v2827 = vadd.f32 0.0, %v2826
      %v2828 = vpop.f32.mrb[0].mxu0
      %2829 = vmatprep.mubr.bf16.mxu0 0
      %2830 = vmatmul.mubr.bf16.gmra.mrb[0].mxu0 %v2712
      %v2831 = vpop.f32.mrb[0].mxu0
      %v2832 = vadd.f32 0.0, %v2831
      %v2833 = vpop.f32.mrb[0].mxu0
      %v2834 = vpop.f32.mrb[0].mxu0
      %v2835 = vadd.f32 0.0, %v2834
      %v2836 = vpop.f32.mrb[0].mxu0
      %2837 = vmatprep.mubr.bf16.mxu0 0
      %2838 = vmatmul.mubr.bf16.gmra.mrb[0].mxu0 %v2715
      %v2839 = vpop.f32.mrb[0].mxu0
      %v2840 = vadd.f32 0.0, %v2839
      %v2841 = vpop.f32.mrb[0].mxu0
      %v2842 = vpop.f32.mrb[0].mxu0
      %v2843 = vadd.f32 0.0, %v2842
      %v2844 = vpop.f32.mrb[0].mxu0
      %2845 = vmatprep.mubr.bf16.mxu0 0
      %2846 = vmatmul.mubr.bf16.gmra.mrb[0].mxu0 %v2718
      %v2847 = vpop.f32.mrb[0].mxu0
      %v2848 = vadd.f32 0.0, %v2847
      %v2849 = vpop.f32.mrb[0].mxu0
      %v2850 = vpop.f32.mrb[0].mxu0
      %v2851 = vadd.f32 0.0, %v2850
      %v2852 = vpop.f32.mrb[0].mxu0
      %2853 = vmatprep.mubr.bf16.mxu0 0
      %2854 = vmatmul.mubr.bf16.gmra.mrb[0].mxu0 %v2721
      %v2855 = vpop.f32.mrb[0].mxu0
      %v2856 = vadd.f32 0.0, %v2855
      %v2857 = vpop.f32.mrb[0].mxu0
      %v2858 = vpop.f32.mrb[0].mxu0
      %v2859 = vadd.f32 0.0, %v2858
      %v2860 = vpop.f32.mrb[0].mxu0
      %2861 = vmatprep.mubr.bf16.mxu0 0
      %2862 = vmatmul.mubr.bf16.gmra.mrb[0].mxu0 %v2724
      %v2863 = vpop.f32.mrb[0].mxu0
      %v2864 = vadd.f32 0.0, %v2863
      %v2865 = vpop.f32.mrb[0].mxu0
      %v2866 = vpop.f32.mrb[0].mxu0
      %v2867 = vadd.f32 0.0, %v2866
      %v2868 = vpop.f32.mrb[0].mxu0
      %2869 = vmatprep.mubr.bf16.mxu0 0
      %2870 = vmatmul.mubr.bf16.gmra.mrb[0].mxu0 %v2727
      %v2871 = vpop.f32.mrb[0].mxu0
      %v2872 = vadd.f32 0.0, %v2871
      %v2873 = vpop.f32.mrb[0].mxu0
      %v2874 = vpop.f32.mrb[0].mxu0
      %v2875 = vadd.f32 0.0, %v2874
      %v2876 = vpop.f32.mrb[0].mxu0
      %2877 = vmatprep.mubr.bf16.mxu0 0
      %2878 = vmatmul.mubr.bf16.gmra.mrb[0].mxu0 %v2730
      %v2879 = vpop.f32.mrb[0].mxu0
      %v2880 = vadd.f32 0.0, %v2879
      %v2881 = vpop.f32.mrb[0].mxu0
      %v2882 = vpop.f32.mrb[0].mxu0
      %v2883 = vadd.f32 0.0, %v2882
      %v2884 = vpop.f32.mrb[0].mxu0
      %2885 = vmatprep.mubr.bf16.mxu0 0
      %2886 = vmatmul.mubr.bf16.gmra.mrb[0].mxu0 %v2733
      %v2887 = vpop.f32.mrb[0].mxu0
      %v2888 = vadd.f32 0.0, %v2887
      %v2889 = vpop.f32.mrb[0].mxu0
      %v2890 = vpop.f32.mrb[0].mxu0
      %v2891 = vadd.f32 0.0, %v2890
      %v2892 = vpop.f32.mrb[0].mxu0
      %2893 = vmatprep.mubr.bf16.mxu0 0
      %2894 = vmatmul.mubr.bf16.gmra.mrb[0].mxu0 %v2736
      %v2895 = vpop.f32.mrb[0].mxu0
      %v2896 = vadd.f32 0.0, %v2895
      %v2897 = vpop.f32.mrb[0].mxu0
      %v2898 = vpop.f32.mrb[0].mxu0
      %v2899 = vadd.f32 0.0, %v2898
      %v2900 = vpop.f32.mrb[0].mxu0
      %2901 = vdwg.mxu0
      %v2902 = vadd.f32 %v2608, %v2776
      %v2903 = vadd.f32 %v2609, %v2779
      %v2904 = vadd.f32 %v2610, %v2784
      %v2905 = vadd.f32 %v2611, %v2787
      %v2906 = vadd.f32 %v2612, %v2792
      %v2907 = vadd.f32 %v2613, %v2795
      %v2908 = vadd.f32 %v2614, %v2800
      %v2909 = vadd.f32 %v2615, %v2803
      %v2910 = vadd.f32 %v2616, %v2808
      %v2911 = vadd.f32 %v2617, %v2811
      %v2912 = vadd.f32 %v2618, %v2816
      %v2913 = vadd.f32 %v2619, %v2819
      %v2914 = vadd.f32 %v2620, %v2824
      %v2915 = vadd.f32 %v2621, %v2827
      %v2916 = vadd.f32 %v2622, %v2832
      %v2917 = vadd.f32 %v2623, %v2835
      %v2918 = vadd.f32 %v2624, %v2840
      %v2919 = vadd.f32 %v2625, %v2843
      %v2920 = vadd.f32 %v2626, %v2848
      %v2921 = vadd.f32 %v2627, %v2851
      %v2922 = vadd.f32 %v2628, %v2856
      %v2923 = vadd.f32 %v2629, %v2859
      %v2924 = vadd.f32 %v2630, %v2864
      %v2925 = vadd.f32 %v2631, %v2867
      %v2926 = vadd.f32 %v2632, %v2872
      %v2927 = vadd.f32 %v2633, %v2875
      %v2928 = vadd.f32 %v2634, %v2880
      %v2929 = vadd.f32 %v2635, %v2883
      %v2930 = vadd.f32 %v2636, %v2888
      %v2931 = vadd.f32 %v2637, %v2891
      %v2932 = vadd.f32 %v2638, %v2896
      %v2933 = vadd.f32 %v2639, %v2899
      %v2934 = vmax.f32 %v2902, 0.0
      %v2935 = vmax.f32 %v2903, 0.0
      %v2936 = vmax.f32 %v2904, 0.0
      %v2937 = vmax.f32 %v2905, 0.0
      %v2938 = vmax.f32 %v2906, 0.0
      %v2939 = vmax.f32 %v2907, 0.0
      %v2940 = vmax.f32 %v2908, 0.0
      %v2941 = vmax.f32 %v2909, 0.0
      %v2942 = vmax.f32 %v2910, 0.0
      %v2943 = vmax.f32 %v2911, 0.0
      %v2944 = vmax.f32 %v2912, 0.0
      %v2945 = vmax.f32 %v2913, 0.0
      %v2946 = vmax.f32 %v2914, 0.0
      %v2947 = vmax.f32 %v2915, 0.0
      %v2948 = vmax.f32 %v2916, 0.0
      %v2949 = vmax.f32 %v2917, 0.0
      %v2950 = vmax.f32 %v2918, 0.0
      %v2951 = vmax.f32 %v2919, 0.0
      %v2952 = vmax.f32 %v2920, 0.0
      %v2953 = vmax.f32 %v2921, 0.0
      %v2954 = vmax.f32 %v2922, 0.0
      %v2955 = vmax.f32 %v2923, 0.0
      %v2956 = vmax.f32 %v2924, 0.0
      %v2957 = vmax.f32 %v2925, 0.0
      %v2958 = vmax.f32 %v2926, 0.0
      %v2959 = vmax.f32 %v2927, 0.0
      %v2960 = vmax.f32 %v2928, 0.0
      %v2961 = vmax.f32 %v2929, 0.0
      %v2962 = vmax.f32 %v2930, 0.0
      %v2963 = vmax.f32 %v2931, 0.0
      %v2964 = vmax.f32 %v2932, 0.0
      %v2965 = vmax.f32 %v2933, 0.0
      %2966 = vst [vmem:[#allocation2] sm:$0xff] 0.0
      %2967 = vst [vmem:[#allocation2 + $0x8] sm:$0xff] 0.0
      %2968 = vst [vmem:[#allocation2 + $0x10] sm:$0x3] 0.0
      %2969 = vst [vmem:[#allocation2 + $0x18] sm:$0xff] 0.0
      %2970 = vst [vmem:[#allocation2 + $0x20] sm:$0xff] 0.0
      %2971 = vst [vmem:[#allocation2 + $0x28] sm:$0x3] 0.0
      %2972 = vst [vmem:[#allocation2 + $0x30] sm:$0xff] 0.0
      %2973 = vst [vmem:[#allocation2 + $0x38] sm:$0xff] 0.0
      %2974 = vst [vmem:[#allocation2 + $0x40] sm:$0x3] 0.0
      %2975 = vst [vmem:[#allocation2 + $0x48] sm:$0xff] 0.0
      %2976 = vst [vmem:[#allocation2 + $0x50] sm:$0xff] 0.0
      %2977 = vst [vmem:[#allocation2 + $0x58] sm:$0x3] 0.0
      %2978 = vst [vmem:[#allocation2 + $0x60] sm:$0xff] 0.0
      %2979 = vst [vmem:[#allocation2 + $0x68] sm:$0xff] 0.0
      %2980 = vst [vmem:[#allocation2 + $0x70] sm:$0x3] 0.0
      %2981 = vst [vmem:[#allocation2 + $0x78] sm:$0xff] 0.0
      %2982 = vst [vmem:[#allocation2 + $0x80] sm:$0xff] 0.0
      %2983 = vst [vmem:[#allocation2 + $0x88] sm:$0x3] 0.0
      %2984 = vst [vmem:[#allocation2 + $0x90] sm:$0xff] 0.0
      %2985 = vst [vmem:[#allocation2 + $0x98] sm:$0xff] 0.0
      %2986 = vst [vmem:[#allocation2 + $0xa0] sm:$0x3] 0.0
      %2987 = vst [vmem:[#allocation2 + $0xa8] sm:$0xff] 0.0
      %2988 = vst [vmem:[#allocation2 + $0xb0] sm:$0xff] 0.0
      %2989 = vst [vmem:[#allocation2 + $0xb8] sm:$0x3] 0.0
      %2990 = vst [vmem:[#allocation2 + $0xc0] sm:$0xff] 0.0
      %2991 = vst [vmem:[#allocation2 + $0xc8] sm:$0xff] 0.0
      %2992 = vst [vmem:[#allocation2 + $0xd0] sm:$0x3] 0.0
      %2993 = vst [vmem:[#allocation2 + $0xd8] sm:$0xff] 0.0
      %2994 = vst [vmem:[#allocation2 + $0xe0] sm:$0xff] 0.0
      %2995 = vst [vmem:[#allocation2 + $0xe8] sm:$0x3] 0.0
      %2996 = vst [vmem:[#allocation2 + $0xf0] sm:$0xff] 0.0
      %2997 = vst [vmem:[#allocation2 + $0xf8] sm:$0xff] 0.0
      %2998 = vst [vmem:[#allocation2 + $0x100] sm:$0x3] 0.0
      %2999 = vst [vmem:[#allocation2 + $0x108] sm:$0xff] 0.0
      %3000 = vst [vmem:[#allocation2 + $0x110] sm:$0xff] 0.0
      %3001 = vst [vmem:[#allocation2 + $0x118] sm:$0x3] 0.0
      %3002 = vst [vmem:[#allocation2 + $0x120] sm:$0xff] 0.0
      %3003 = vst [vmem:[#allocation2 + $0x128] sm:$0xff] 0.0
      %3004 = vst [vmem:[#allocation2 + $0x130] sm:$0x3] 0.0
      %3005 = vst [vmem:[#allocation2 + $0x138] sm:$0xff] 0.0
      %3006 = vst [vmem:[#allocation2 + $0x140] sm:$0xff] 0.0
      %3007 = vst [vmem:[#allocation2 + $0x148] sm:$0x3] 0.0
      %3008 = vst [vmem:[#allocation2 + $0x150] sm:$0xff] 0.0
      %3009 = vst [vmem:[#allocation2 + $0x158] sm:$0xff] 0.0
      %3010 = vst [vmem:[#allocation2 + $0x160] sm:$0x3] 0.0
      %3011 = vst [vmem:[#allocation2 + $0x168] sm:$0xff] 0.0
      %3012 = vst [vmem:[#allocation2 + $0x170] sm:$0xff] 0.0
      %3013 = vst [vmem:[#allocation2 + $0x178] sm:$0x3] 0.0
      %3014 = vst [vmem:[#allocation2 + $0x180] sm:$0xff] 0.0
      %3015 = vst [vmem:[#allocation2 + $0x188] sm:$0xff] 0.0
      %3016 = vst [vmem:[#allocation2 + $0x190] sm:$0x3] 0.0
      %3017 = vst [vmem:[#allocation2 + $0x198] sm:$0xff] 0.0
      %3018 = vst [vmem:[#allocation2 + $0x1a0] sm:$0xff] 0.0
      %3019 = vst [vmem:[#allocation2 + $0x1a8] sm:$0x3] 0.0
      %s3020 = scalar_lea.vmem [#allocation2], 24
      %3021 = vst [vmem:[%s3020 + $0x1] sm:$0xff] %v2934
      %3022 = vst [vmem:[%s3020 + $0x9] sm:$0xff] %v2935
      %3023 = vst [vmem:[%s3020 + $0x19] sm:$0xff] %v2936
      %3024 = vst [vmem:[%s3020 + $0x21] sm:$0xff] %v2937
      %3025 = vst [vmem:[%s3020 + $0x31] sm:$0xff] %v2938
      %3026 = vst [vmem:[%s3020 + $0x39] sm:$0xff] %v2939
      %3027 = vst [vmem:[%s3020 + $0x49] sm:$0xff] %v2940
      %3028 = vst [vmem:[%s3020 + $0x51] sm:$0xff] %v2941
      %3029 = vst [vmem:[%s3020 + $0x61] sm:$0xff] %v2942
      %3030 = vst [vmem:[%s3020 + $0x69] sm:$0xff] %v2943
      %3031 = vst [vmem:[%s3020 + $0x79] sm:$0xff] %v2944
      %3032 = vst [vmem:[%s3020 + $0x81] sm:$0xff] %v2945
      %3033 = vst [vmem:[%s3020 + $0x91] sm:$0xff] %v2946
      %3034 = vst [vmem:[%s3020 + $0x99] sm:$0xff] %v2947
      %3035 = vst [vmem:[%s3020 + $0xa9] sm:$0xff] %v2948
      %3036 = vst [vmem:[%s3020 + $0xb1] sm:$0xff] %v2949
      %3037 = vst [vmem:[%s3020 + $0xc1] sm:$0xff] %v2950
      %3038 = vst [vmem:[%s3020 + $0xc9] sm:$0xff] %v2951
      %3039 = vst [vmem:[%s3020 + $0xd9] sm:$0xff] %v2952
      %3040 = vst [vmem:[%s3020 + $0xe1] sm:$0xff] %v2953
      %3041 = vst [vmem:[%s3020 + $0xf1] sm:$0xff] %v2954
      %3042 = vst [vmem:[%s3020 + $0xf9] sm:$0xff] %v2955
      %3043 = vst [vmem:[%s3020 + $0x109] sm:$0xff] %v2956
      %3044 = vst [vmem:[%s3020 + $0x111] sm:$0xff] %v2957
      %3045 = vst [vmem:[%s3020 + $0x121] sm:$0xff] %v2958
      %3046 = vst [vmem:[%s3020 + $0x129] sm:$0xff] %v2959
      %3047 = vst [vmem:[%s3020 + $0x139] sm:$0xff] %v2960
      %3048 = vst [vmem:[%s3020 + $0x141] sm:$0xff] %v2961
      %3049 = vst [vmem:[%s3020 + $0x151] sm:$0xff] %v2962
      %3050 = vst [vmem:[%s3020 + $0x159] sm:$0xff] %v2963
      %3051 = vst [vmem:[%s3020 + $0x169] sm:$0xff] %v2964
      %3052 = vst [vmem:[%s3020 + $0x171] sm:$0xff] %v2965
      %v3053 = vld [vmem:[%s4] sm:$0x1]
      %v3055 = vlaneseq
      %v3056 = vshrl.u32 %v3055, 7
      %v3057 = vsub.s32 0, %v3056
      %v3058 = vrot.slane %v3053, %v3057
      %v3060 = vld [vmem:[#allocation2] sm:$0xff]
      %v3061 = vld [vmem:[#allocation2 + $0x8] sm:$0xff]
      %v3062 = vld [vmem:[#allocation2 + $0x18] sm:$0xff]
      %v3063 = vld [vmem:[#allocation2 + $0x20] sm:$0xff]
      %v3064 = vld [vmem:[#allocation2 + $0x30] sm:$0xff]
      %v3065 = vld [vmem:[#allocation2 + $0x38] sm:$0xff]
      %v3066 = vld [vmem:[#allocation2 + $0x48] sm:$0xff]
      %v3067 = vld [vmem:[#allocation2 + $0x50] sm:$0xff]
      %v3068 = vld [vmem:[#allocation2 + $0x60] sm:$0xff]
      %v3069 = vld [vmem:[#allocation2 + $0x68] sm:$0xff]
      %v3070 = vld [vmem:[#allocation2 + $0x78] sm:$0xff]
      %v3071 = vld [vmem:[#allocation2 + $0x80] sm:$0xff]
      %v3072 = vld [vmem:[#allocation2 + $0x90] sm:$0xff]
      %v3073 = vld [vmem:[#allocation2 + $0x98] sm:$0xff]
      %v3074 = vld [vmem:[#allocation2 + $0xa8] sm:$0xff]
      %v3075 = vld [vmem:[#allocation2 + $0xb0] sm:$0xff]
      %v3076 = vld [vmem:[#allocation2 + $0xc0] sm:$0xff]
      %v3077 = vld [vmem:[#allocation2 + $0xc8] sm:$0xff]
      %v3078 = vld [vmem:[#allocation2 + $0xd8] sm:$0xff]
      %v3079 = vld [vmem:[#allocation2 + $0xe0] sm:$0xff]
      %v3080 = vld [vmem:[#allocation2 + $0xf0] sm:$0xff]
      %v3081 = vld [vmem:[#allocation2 + $0xf8] sm:$0xff]
      %v3082 = vld [vmem:[#allocation2 + $0x108] sm:$0xff]
      %v3083 = vld [vmem:[#allocation2 + $0x110] sm:$0xff]
      %v3084 = vld [vmem:[#allocation2 + $0x120] sm:$0xff]
      %v3085 = vld [vmem:[#allocation2 + $0x128] sm:$0xff]
      %v3086 = vld [vmem:[#allocation2 + $0x138] sm:$0xff]
      %v3087 = vld [vmem:[#allocation2 + $0x140] sm:$0xff]
      %v3088 = vld [vmem:[#allocation2 + $0x150] sm:$0xff]
      %v3089 = vld [vmem:[#allocation2 + $0x158] sm:$0xff]
      %v3090 = vld [vmem:[#allocation2 + $0x168] sm:$0xff]
      %v3091 = vld [vmem:[#allocation2 + $0x170] sm:$0xff]
      %v3092 = vpack.c.bf16 %v3061, %v3060
      %v3093 = vpack.c.bf16 %v3063, %v3062
      %v3094 = vpack.c.bf16 %v3065, %v3064
      %v3095 = vpack.c.bf16 %v3067, %v3066
      %v3096 = vpack.c.bf16 %v3069, %v3068
      %v3097 = vpack.c.bf16 %v3071, %v3070
      %v3098 = vpack.c.bf16 %v3073, %v3072
      %v3099 = vpack.c.bf16 %v3075, %v3074
      %v3100 = vpack.c.bf16 %v3077, %v3076
      %v3101 = vpack.c.bf16 %v3079, %v3078
      %v3102 = vpack.c.bf16 %v3081, %v3080
      %v3103 = vpack.c.bf16 %v3083, %v3082
      %v3104 = vpack.c.bf16 %v3085, %v3084
      %v3105 = vpack.c.bf16 %v3087, %v3086
      %v3106 = vpack.c.bf16 %v3089, %v3088
      %v3107 = vpack.c.bf16 %v3091, %v3090
      %v3108 = vld [vmem:[%s3] sm:$0xf]
      %v3109 = vld [vmem:[%s3 + $0x4] sm:$0xf]
      %v3110 = vld [vmem:[%s3 + $0x8] sm:$0xf]
      %v3111 = vld [vmem:[%s3 + $0xc] sm:$0xf]
      %v3112 = vld [vmem:[%s3 + $0x10] sm:$0xf]
      %v3113 = vld [vmem:[%s3 + $0x14] sm:$0xf]
      %v3114 = vld [vmem:[%s3 + $0x18] sm:$0xf]
      %v3115 = vld [vmem:[%s3 + $0x1c] sm:$0xf]
      %v3116 = vld [vmem:[%s3 + $0x20] sm:$0xf]
      %v3117 = vld [vmem:[%s3 + $0x24] sm:$0xf]
      %v3118 = vld [vmem:[%s3 + $0x28] sm:$0xf]
      %v3119 = vld [vmem:[%s3 + $0x2c] sm:$0xf]
      %v3120 = vld [vmem:[%s3 + $0x30] sm:$0xf]
      %v3121 = vld [vmem:[%s3 + $0x34] sm:$0xf]
      %v3122 = vld [vmem:[%s3 + $0x38] sm:$0xf]
      %v3123 = vld [vmem:[%s3 + $0x3c] sm:$0xf]
      %v3140 = vunpack.c.l.b16 %v3108
      %v3141 = vunpack.c.l.b16 %v3109
      %v3142 = vunpack.c.l.b16 %v3110
      %v3143 = vunpack.c.l.b16 %v3111
      %v3144 = vunpack.c.l.b16 %v3112
      %v3145 = vunpack.c.l.b16 %v3113
      %v3146 = vunpack.c.l.b16 %v3114
      %v3147 = vunpack.c.l.b16 %v3115
      %v3148 = vunpack.c.l.b16 %v3116
      %v3149 = vunpack.c.l.b16 %v3117
      %v3150 = vunpack.c.l.b16 %v3118
      %v3151 = vunpack.c.l.b16 %v3119
      %v3152 = vunpack.c.l.b16 %v3120
      %v3153 = vunpack.c.l.b16 %v3121
      %v3154 = vunpack.c.l.b16 %v3122
      %v3155 = vunpack.c.l.b16 %v3123
      %v3156 = vpack.c.b16 %v3141, %v3140
      %v3157 = vpack.c.b16 %v3143, %v3142
      %v3158 = vpack.c.b16 %v3145, %v3144
      %v3159 = vpack.c.b16 %v3147, %v3146
      %v3160 = vpack.c.b16 %v3149, %v3148
      %v3161 = vpack.c.b16 %v3151, %v3150
      %v3162 = vpack.c.b16 %v3153, %v3152
      %v3163 = vpack.c.b16 %v3155, %v3154
      %3172 = vmatprep.subr.bf16.mxu0 0
      %3173 = vmatpush1.bf16.msra.mxu0 %v3156
      %3174 = vmatprep.subr.bf16.mxu0 0
      %3175 = vmatpush1.bf16.msra.mxu0 %v3157
      %3176 = vmatprep.subr.bf16.mxu0 0
      %3177 = vmatpush1.bf16.msra.mxu0 %v3158
      %3178 = vmatprep.subr.bf16.mxu0 0
      %3179 = vmatpush1.bf16.msra.mxu0 %v3159
      %3180 = vmatprep.subr.bf16.mxu0 0
      %3181 = vmatpush1.bf16.msra.mxu0 %v3160
      %3182 = vmatprep.subr.bf16.mxu0 0
      %3183 = vmatpush1.bf16.msra.mxu0 %v3161
      %3184 = vmatprep.subr.bf16.mxu0 0
      %3185 = vmatpush1.bf16.msra.mxu0 %v3162
      %3186 = vmatprep.subr.bf16.mxu0 0
      %3187 = vmatpush1.bf16.msra.mxu0 %v3163
      %3188 = vmatprep.subr.bf16.mxu0 0
      %3189 = vmatpush1.bf16.msra.mxu0 0
      %3190 = vmatprep.subr.bf16.mxu0 0
      %3191 = vmatpush1.bf16.msra.mxu0 0
      %3192 = vmatprep.subr.bf16.mxu0 0
      %3193 = vmatpush1.bf16.msra.mxu0 0
      %3194 = vmatprep.subr.bf16.mxu0 0
      %3195 = vmatpush1.bf16.msra.mxu0 0
      %3196 = vmatprep.subr.bf16.mxu0 0
      %3197 = vmatpush1.bf16.msra.mxu0 0
      %3198 = vmatprep.subr.bf16.mxu0 0
      %3199 = vmatpush1.bf16.msra.mxu0 0
      %3200 = vmatprep.subr.bf16.mxu0 0
      %3201 = vmatpush1.bf16.msra.mxu0 0
      %3202 = vmatprep.subr.bf16.mxu0 0
      %3203 = vmatpush1.bf16.msra.mxu0 0
      %3204 = vmatprep.mubr.bf16.mxu0 0
      %3205 = vmatmul.mubr.bf16.gmra.mrb[0].mxu0 %v3092
      %v3206 = vpop.f32.mrb[0].mxu0
      %v3207 = vadd.f32 0.0, %v3206
      %v3208 = vpop.f32.mrb[0].mxu0
      %v3209 = vpop.f32.mrb[0].mxu0
      %v3210 = vadd.f32 0.0, %v3209
      %v3211 = vpop.f32.mrb[0].mxu0
      %3212 = vmatprep.mubr.bf16.mxu0 0
      %3213 = vmatmul.mubr.bf16.gmra.mrb[0].mxu0 %v3093
      %v3214 = vpop.f32.mrb[0].mxu0
      %v3215 = vadd.f32 0.0, %v3214
      %v3216 = vpop.f32.mrb[0].mxu0
      %v3217 = vpop.f32.mrb[0].mxu0
      %v3218 = vadd.f32 0.0, %v3217
      %v3219 = vpop.f32.mrb[0].mxu0
      %3220 = vmatprep.mubr.bf16.mxu0 0
      %3221 = vmatmul.mubr.bf16.gmra.mrb[0].mxu0 %v3094
      %v3222 = vpop.f32.mrb[0].mxu0
      %v3223 = vadd.f32 0.0, %v3222
      %v3224 = vpop.f32.mrb[0].mxu0
      %v3225 = vpop.f32.mrb[0].mxu0
      %v3226 = vadd.f32 0.0, %v3225
      %v3227 = vpop.f32.mrb[0].mxu0
      %3228 = vmatprep.mubr.bf16.mxu0 0
      %3229 = vmatmul.mubr.bf16.gmra.mrb[0].mxu0 %v3095
      %v3230 = vpop.f32.mrb[0].mxu0
      %v3231 = vadd.f32 0.0, %v3230
      %v3232 = vpop.f32.mrb[0].mxu0
      %v3233 = vpop.f32.mrb[0].mxu0
      %v3234 = vadd.f32 0.0, %v3233
      %v3235 = vpop.f32.mrb[0].mxu0
      %3236 = vmatprep.mubr.bf16.mxu0 0
      %3237 = vmatmul.mubr.bf16.gmra.mrb[0].mxu0 %v3096
      %v3238 = vpop.f32.mrb[0].mxu0
      %v3239 = vadd.f32 0.0, %v3238
      %v3240 = vpop.f32.mrb[0].mxu0
      %v3241 = vpop.f32.mrb[0].mxu0
      %v3242 = vadd.f32 0.0, %v3241
      %v3243 = vpop.f32.mrb[0].mxu0
      %3244 = vmatprep.mubr.bf16.mxu0 0
      %3245 = vmatmul.mubr.bf16.gmra.mrb[0].mxu0 %v3097
      %v3246 = vpop.f32.mrb[0].mxu0
      %v3247 = vadd.f32 0.0, %v3246
      %v3248 = vpop.f32.mrb[0].mxu0
      %v3249 = vpop.f32.mrb[0].mxu0
      %v3250 = vadd.f32 0.0, %v3249
      %v3251 = vpop.f32.mrb[0].mxu0
      %3252 = vmatprep.mubr.bf16.mxu0 0
      %3253 = vmatmul.mubr.bf16.gmra.mrb[0].mxu0 %v3098
      %v3254 = vpop.f32.mrb[0].mxu0
      %v3255 = vadd.f32 0.0, %v3254
      %v3256 = vpop.f32.mrb[0].mxu0
      %v3257 = vpop.f32.mrb[0].mxu0
      %v3258 = vadd.f32 0.0, %v3257
      %v3259 = vpop.f32.mrb[0].mxu0
      %3260 = vmatprep.mubr.bf16.mxu0 0
      %3261 = vmatmul.mubr.bf16.gmra.mrb[0].mxu0 %v3099
      %v3262 = vpop.f32.mrb[0].mxu0
      %v3263 = vadd.f32 0.0, %v3262
      %v3264 = vpop.f32.mrb[0].mxu0
      %v3265 = vpop.f32.mrb[0].mxu0
      %v3266 = vadd.f32 0.0, %v3265
      %v3267 = vpop.f32.mrb[0].mxu0
      %3268 = vmatprep.mubr.bf16.mxu0 0
      %3269 = vmatmul.mubr.bf16.gmra.mrb[0].mxu0 %v3100
      %v3270 = vpop.f32.mrb[0].mxu0
      %v3271 = vadd.f32 0.0, %v3270
      %v3272 = vpop.f32.mrb[0].mxu0
      %v3273 = vpop.f32.mrb[0].mxu0
      %v3274 = vadd.f32 0.0, %v3273
      %v3275 = vpop.f32.mrb[0].mxu0
      %3276 = vmatprep.mubr.bf16.mxu0 0
      %3277 = vmatmul.mubr.bf16.gmra.mrb[0].mxu0 %v3101
      %v3278 = vpop.f32.mrb[0].mxu0
      %v3279 = vadd.f32 0.0, %v3278
      %v3280 = vpop.f32.mrb[0].mxu0
      %v3281 = vpop.f32.mrb[0].mxu0
      %v3282 = vadd.f32 0.0, %v3281
      %v3283 = vpop.f32.mrb[0].mxu0
      %3284 = vmatprep.mubr.bf16.mxu0 0
      %3285 = vmatmul.mubr.bf16.gmra.mrb[0].mxu0 %v3102
      %v3286 = vpop.f32.mrb[0].mxu0
      %v3287 = vadd.f32 0.0, %v3286
      %v3288 = vpop.f32.mrb[0].mxu0
      %v3289 = vpop.f32.mrb[0].mxu0
      %v3290 = vadd.f32 0.0, %v3289
      %v3291 = vpop.f32.mrb[0].mxu0
      %3292 = vmatprep.mubr.bf16.mxu0 0
      %3293 = vmatmul.mubr.bf16.gmra.mrb[0].mxu0 %v3103
      %v3294 = vpop.f32.mrb[0].mxu0
      %v3295 = vadd.f32 0.0, %v3294
      %v3296 = vpop.f32.mrb[0].mxu0
      %v3297 = vpop.f32.mrb[0].mxu0
      %v3298 = vadd.f32 0.0, %v3297
      %v3299 = vpop.f32.mrb[0].mxu0
      %3300 = vmatprep.mubr.bf16.mxu0 0
      %3301 = vmatmul.mubr.bf16.gmra.mrb[0].mxu0 %v3104
      %v3302 = vpop.f32.mrb[0].mxu0
      %v3303 = vadd.f32 0.0, %v3302
      %v3304 = vpop.f32.mrb[0].mxu0
      %v3305 = vpop.f32.mrb[0].mxu0
      %v3306 = vadd.f32 0.0, %v3305
      %v3307 = vpop.f32.mrb[0].mxu0
      %3308 = vmatprep.mubr.bf16.mxu0 0
      %3309 = vmatmul.mubr.bf16.gmra.mrb[0].mxu0 %v3105
      %v3310 = vpop.f32.mrb[0].mxu0
      %v3311 = vadd.f32 0.0, %v3310
      %v3312 = vpop.f32.mrb[0].mxu0
      %v3313 = vpop.f32.mrb[0].mxu0
      %v3314 = vadd.f32 0.0, %v3313
      %v3315 = vpop.f32.mrb[0].mxu0
      %3316 = vmatprep.mubr.bf16.mxu0 0
      %3317 = vmatmul.mubr.bf16.gmra.mrb[0].mxu0 %v3106
      %v3318 = vpop.f32.mrb[0].mxu0
      %v3319 = vadd.f32 0.0, %v3318
      %v3320 = vpop.f32.mrb[0].mxu0
      %v3321 = vpop.f32.mrb[0].mxu0
      %v3322 = vadd.f32 0.0, %v3321
      %v3323 = vpop.f32.mrb[0].mxu0
      %3324 = vmatprep.mubr.bf16.mxu0 0
      %3325 = vmatmul.mubr.bf16.gmra.mrb[0].mxu0 %v3107
      %v3326 = vpop.f32.mrb[0].mxu0
      %v3327 = vadd.f32 0.0, %v3326
      %v3328 = vpop.f32.mrb[0].mxu0
      %v3329 = vpop.f32.mrb[0].mxu0
      %v3330 = vadd.f32 0.0, %v3329
      %v3331 = vpop.f32.mrb[0].mxu0
      %3332 = vdwg.mxu0
      %v3333 = vadd.f32 %v3058, %v3207
      %v3334 = vadd.f32 %v3058, %v3210
      %v3335 = vadd.f32 %v3058, %v3215
      %v3336 = vadd.f32 %v3058, %v3218
      %v3337 = vadd.f32 %v3058, %v3223
      %v3338 = vadd.f32 %v3058, %v3226
      %v3339 = vadd.f32 %v3058, %v3231
      %v3340 = vadd.f32 %v3058, %v3234
      %v3341 = vadd.f32 %v3058, %v3239
      %v3342 = vadd.f32 %v3058, %v3242
      %v3343 = vadd.f32 %v3058, %v3247
      %v3344 = vadd.f32 %v3058, %v3250
      %v3345 = vadd.f32 %v3058, %v3255
      %v3346 = vadd.f32 %v3058, %v3258
      %v3347 = vadd.f32 %v3058, %v3263
      %v3348 = vadd.f32 %v3058, %v3266
      %v3349 = vadd.f32 %v3058, %v3271
      %v3350 = vadd.f32 %v3058, %v3274
      %v3351 = vadd.f32 %v3058, %v3279
      %v3352 = vadd.f32 %v3058, %v3282
      %v3353 = vadd.f32 %v3058, %v3287
      %v3354 = vadd.f32 %v3058, %v3290
      %v3355 = vadd.f32 %v3058, %v3295
      %v3356 = vadd.f32 %v3058, %v3298
      %v3357 = vadd.f32 %v3058, %v3303
      %v3358 = vadd.f32 %v3058, %v3306
      %v3359 = vadd.f32 %v3058, %v3311
      %v3360 = vadd.f32 %v3058, %v3314
      %v3361 = vadd.f32 %v3058, %v3319
      %v3362 = vadd.f32 %v3058, %v3322
      %v3363 = vadd.f32 %v3058, %v3327
      %v3364 = vadd.f32 %v3058, %v3330
      %v3365 = vld [vmem:[#allocation2 + $0x1] sm:$0xff]
      %v3366 = vld [vmem:[#allocation2 + $0x9] sm:$0xff]
      %v3367 = vld [vmem:[#allocation2 + $0x19] sm:$0xff]
      %v3368 = vld [vmem:[#allocation2 + $0x21] sm:$0xff]
      %v3369 = vld [vmem:[#allocation2 + $0x31] sm:$0xff]
      %v3370 = vld [vmem:[#allocation2 + $0x39] sm:$0xff]
      %v3371 = vld [vmem:[#allocation2 + $0x49] sm:$0xff]
      %v3372 = vld [vmem:[#allocation2 + $0x51] sm:$0xff]
      %v3373 = vld [vmem:[#allocation2 + $0x61] sm:$0xff]
      %v3374 = vld [vmem:[#allocation2 + $0x69] sm:$0xff]
      %v3375 = vld [vmem:[#allocation2 + $0x79] sm:$0xff]
      %v3376 = vld [vmem:[#allocation2 + $0x81] sm:$0xff]
      %v3377 = vld [vmem:[#allocation2 + $0x91] sm:$0xff]
      %v3378 = vld [vmem:[#allocation2 + $0x99] sm:$0xff]
      %v3379 = vld [vmem:[#allocation2 + $0xa9] sm:$0xff]
      %v3380 = vld [vmem:[#allocation2 + $0xb1] sm:$0xff]
      %v3381 = vld [vmem:[#allocation2 + $0xc1] sm:$0xff]
      %v3382 = vld [vmem:[#allocation2 + $0xc9] sm:$0xff]
      %v3383 = vld [vmem:[#allocation2 + $0xd9] sm:$0xff]
      %v3384 = vld [vmem:[#allocation2 + $0xe1] sm:$0xff]
      %v3385 = vld [vmem:[#allocation2 + $0xf1] sm:$0xff]
      %v3386 = vld [vmem:[#allocation2 + $0xf9] sm:$0xff]
      %v3387 = vld [vmem:[#allocation2 + $0x109] sm:$0xff]
      %v3388 = vld [vmem:[#allocation2 + $0x111] sm:$0xff]
      %v3389 = vld [vmem:[#allocation2 + $0x121] sm:$0xff]
      %v3390 = vld [vmem:[#allocation2 + $0x129] sm:$0xff]
      %v3391 = vld [vmem:[#allocation2 + $0x139] sm:$0xff]
      %v3392 = vld [vmem:[#allocation2 + $0x141] sm:$0xff]
      %v3393 = vld [vmem:[#allocation2 + $0x151] sm:$0xff]
      %v3394 = vld [vmem:[#allocation2 + $0x159] sm:$0xff]
      %v3395 = vld [vmem:[#allocation2 + $0x169] sm:$0xff]
      %v3396 = vld [vmem:[#allocation2 + $0x171] sm:$0xff]
      %v3397 = vpack.c.bf16 %v3366, %v3365
      %v3398 = vpack.c.bf16 %v3368, %v3367
      %v3399 = vpack.c.bf16 %v3370, %v3369
      %v3400 = vpack.c.bf16 %v3372, %v3371
      %v3401 = vpack.c.bf16 %v3374, %v3373
      %v3402 = vpack.c.bf16 %v3376, %v3375
      %v3403 = vpack.c.bf16 %v3378, %v3377
      %v3404 = vpack.c.bf16 %v3380, %v3379
      %v3405 = vpack.c.bf16 %v3382, %v3381
      %v3406 = vpack.c.bf16 %v3384, %v3383
      %v3407 = vpack.c.bf16 %v3386, %v3385
      %v3408 = vpack.c.bf16 %v3388, %v3387
      %v3409 = vpack.c.bf16 %v3390, %v3389
      %v3410 = vpack.c.bf16 %v3392, %v3391
      %v3411 = vpack.c.bf16 %v3394, %v3393
      %v3412 = vpack.c.bf16 %v3396, %v3395
      %s3413 = scalar_lea.vmem %s3, 64
      %v3414 = vld [vmem:[%s3413] sm:$0xf]
      %v3415 = vld [vmem:[%s3413 + $0x4] sm:$0xf]
      %v3416 = vld [vmem:[%s3413 + $0x8] sm:$0xf]
      %v3417 = vld [vmem:[%s3413 + $0xc] sm:$0xf]
      %v3418 = vld [vmem:[%s3413 + $0x10] sm:$0xf]
      %v3419 = vld [vmem:[%s3413 + $0x14] sm:$0xf]
      %v3420 = vld [vmem:[%s3413 + $0x18] sm:$0xf]
      %v3421 = vld [vmem:[%s3413 + $0x1c] sm:$0xf]
      %v3422 = vld [vmem:[%s3413 + $0x20] sm:$0xf]
      %v3423 = vld [vmem:[%s3413 + $0x24] sm:$0xf]
      %v3424 = vld [vmem:[%s3413 + $0x28] sm:$0xf]
      %v3425 = vld [vmem:[%s3413 + $0x2c] sm:$0xf]
      %v3426 = vld [vmem:[%s3413 + $0x30] sm:$0xf]
      %v3427 = vld [vmem:[%s3413 + $0x34] sm:$0xf]
      %v3428 = vld [vmem:[%s3413 + $0x38] sm:$0xf]
      %v3429 = vld [vmem:[%s3413 + $0x3c] sm:$0xf]
      %v3446 = vunpack.c.l.b16 %v3414
      %v3447 = vunpack.c.l.b16 %v3415
      %v3448 = vunpack.c.l.b16 %v3416
      %v3449 = vunpack.c.l.b16 %v3417
      %v3450 = vunpack.c.l.b16 %v3418
      %v3451 = vunpack.c.l.b16 %v3419
      %v3452 = vunpack.c.l.b16 %v3420
      %v3453 = vunpack.c.l.b16 %v3421
      %v3454 = vunpack.c.l.b16 %v3422
      %v3455 = vunpack.c.l.b16 %v3423
      %v3456 = vunpack.c.l.b16 %v3424
      %v3457 = vunpack.c.l.b16 %v3425
      %v3458 = vunpack.c.l.b16 %v3426
      %v3459 = vunpack.c.l.b16 %v3427
      %v3460 = vunpack.c.l.b16 %v3428
      %v3461 = vunpack.c.l.b16 %v3429
      %v3462 = vpack.c.b16 %v3447, %v3446
      %v3463 = vpack.c.b16 %v3449, %v3448
      %v3464 = vpack.c.b16 %v3451, %v3450
      %v3465 = vpack.c.b16 %v3453, %v3452
      %v3466 = vpack.c.b16 %v3455, %v3454
      %v3467 = vpack.c.b16 %v3457, %v3456
      %v3468 = vpack.c.b16 %v3459, %v3458
      %v3469 = vpack.c.b16 %v3461, %v3460
      %3478 = vmatprep.subr.bf16.mxu0 0
      %3479 = vmatpush1.bf16.msra.mxu0 %v3462
      %3480 = vmatprep.subr.bf16.mxu0 0
      %3481 = vmatpush1.bf16.msra.mxu0 %v3463
      %3482 = vmatprep.subr.bf16.mxu0 0
      %3483 = vmatpush1.bf16.msra.mxu0 %v3464
      %3484 = vmatprep.subr.bf16.mxu0 0
      %3485 = vmatpush1.bf16.msra.mxu0 %v3465
      %3486 = vmatprep.subr.bf16.mxu0 0
      %3487 = vmatpush1.bf16.msra.mxu0 %v3466
      %3488 = vmatprep.subr.bf16.mxu0 0
      %3489 = vmatpush1.bf16.msra.mxu0 %v3467
      %3490 = vmatprep.subr.bf16.mxu0 0
      %3491 = vmatpush1.bf16.msra.mxu0 %v3468
      %3492 = vmatprep.subr.bf16.mxu0 0
      %3493 = vmatpush1.bf16.msra.mxu0 %v3469
      %3494 = vmatprep.subr.bf16.mxu0 0
      %3495 = vmatpush1.bf16.msra.mxu0 0
      %3496 = vmatprep.subr.bf16.mxu0 0
      %3497 = vmatpush1.bf16.msra.mxu0 0
      %3498 = vmatprep.subr.bf16.mxu0 0
      %3499 = vmatpush1.bf16.msra.mxu0 0
      %3500 = vmatprep.subr.bf16.mxu0 0
      %3501 = vmatpush1.bf16.msra.mxu0 0
      %3502 = vmatprep.subr.bf16.mxu0 0
      %3503 = vmatpush1.bf16.msra.mxu0 0
      %3504 = vmatprep.subr.bf16.mxu0 0
      %3505 = vmatpush1.bf16.msra.mxu0 0
      %3506 = vmatprep.subr.bf16.mxu0 0
      %3507 = vmatpush1.bf16.msra.mxu0 0
      %3508 = vmatprep.subr.bf16.mxu0 0
      %3509 = vmatpush1.bf16.msra.mxu0 0
      %3510 = vmatprep.mubr.bf16.mxu0 0
      %3511 = vmatmul.mubr.bf16.gmra.mrb[0].mxu0 %v3397
      %v3512 = vpop.f32.mrb[0].mxu0
      %v3513 = vadd.f32 0.0, %v3512
      %v3514 = vpop.f32.mrb[0].mxu0
      %v3515 = vpop.f32.mrb[0].mxu0
      %v3516 = vadd.f32 0.0, %v3515
      %v3517 = vpop.f32.mrb[0].mxu0
      %3518 = vmatprep.mubr.bf16.mxu0 0
      %3519 = vmatmul.mubr.bf16.gmra.mrb[0].mxu0 %v3398
      %v3520 = vpop.f32.mrb[0].mxu0
      %v3521 = vadd.f32 0.0, %v3520
      %v3522 = vpop.f32.mrb[0].mxu0
      %v3523 = vpop.f32.mrb[0].mxu0
      %v3524 = vadd.f32 0.0, %v3523
      %v3525 = vpop.f32.mrb[0].mxu0
      %3526 = vmatprep.mubr.bf16.mxu0 0
      %3527 = vmatmul.mubr.bf16.gmra.mrb[0].mxu0 %v3399
      %v3528 = vpop.f32.mrb[0].mxu0
      %v3529 = vadd.f32 0.0, %v3528
      %v3530 = vpop.f32.mrb[0].mxu0
      %v3531 = vpop.f32.mrb[0].mxu0
      %v3532 = vadd.f32 0.0, %v3531
      %v3533 = vpop.f32.mrb[0].mxu0
      %3534 = vmatprep.mubr.bf16.mxu0 0
      %3535 = vmatmul.mubr.bf16.gmra.mrb[0].mxu0 %v3400
      %v3536 = vpop.f32.mrb[0].mxu0
      %v3537 = vadd.f32 0.0, %v3536
      %v3538 = vpop.f32.mrb[0].mxu0
      %v3539 = vpop.f32.mrb[0].mxu0
      %v3540 = vadd.f32 0.0, %v3539
      %v3541 = vpop.f32.mrb[0].mxu0
      %3542 = vmatprep.mubr.bf16.mxu0 0
      %3543 = vmatmul.mubr.bf16.gmra.mrb[0].mxu0 %v3401
      %v3544 = vpop.f32.mrb[0].mxu0
      %v3545 = vadd.f32 0.0, %v3544
      %v3546 = vpop.f32.mrb[0].mxu0
      %v3547 = vpop.f32.mrb[0].mxu0
      %v3548 = vadd.f32 0.0, %v3547
      %v3549 = vpop.f32.mrb[0].mxu0
      %3550 = vmatprep.mubr.bf16.mxu0 0
      %3551 = vmatmul.mubr.bf16.gmra.mrb[0].mxu0 %v3402
      %v3552 = vpop.f32.mrb[0].mxu0
      %v3553 = vadd.f32 0.0, %v3552
      %v3554 = vpop.f32.mrb[0].mxu0
      %v3555 = vpop.f32.mrb[0].mxu0
      %v3556 = vadd.f32 0.0, %v3555
      %v3557 = vpop.f32.mrb[0].mxu0
      %3558 = vmatprep.mubr.bf16.mxu0 0
      %3559 = vmatmul.mubr.bf16.gmra.mrb[0].mxu0 %v3403
      %v3560 = vpop.f32.mrb[0].mxu0
      %v3561 = vadd.f32 0.0, %v3560
      %v3562 = vpop.f32.mrb[0].mxu0
      %v3563 = vpop.f32.mrb[0].mxu0
      %v3564 = vadd.f32 0.0, %v3563
      %v3565 = vpop.f32.mrb[0].mxu0
      %3566 = vmatprep.mubr.bf16.mxu0 0
      %3567 = vmatmul.mubr.bf16.gmra.mrb[0].mxu0 %v3404
      %v3568 = vpop.f32.mrb[0].mxu0
      %v3569 = vadd.f32 0.0, %v3568
      %v3570 = vpop.f32.mrb[0].mxu0
      %v3571 = vpop.f32.mrb[0].mxu0
      %v3572 = vadd.f32 0.0, %v3571
      %v3573 = vpop.f32.mrb[0].mxu0
      %3574 = vmatprep.mubr.bf16.mxu0 0
      %3575 = vmatmul.mubr.bf16.gmra.mrb[0].mxu0 %v3405
      %v3576 = vpop.f32.mrb[0].mxu0
      %v3577 = vadd.f32 0.0, %v3576
      %v3578 = vpop.f32.mrb[0].mxu0
      %v3579 = vpop.f32.mrb[0].mxu0
      %v3580 = vadd.f32 0.0, %v3579
      %v3581 = vpop.f32.mrb[0].mxu0
      %3582 = vmatprep.mubr.bf16.mxu0 0
      %3583 = vmatmul.mubr.bf16.gmra.mrb[0].mxu0 %v3406
      %v3584 = vpop.f32.mrb[0].mxu0
      %v3585 = vadd.f32 0.0, %v3584
      %v3586 = vpop.f32.mrb[0].mxu0
      %v3587 = vpop.f32.mrb[0].mxu0
      %v3588 = vadd.f32 0.0, %v3587
      %v3589 = vpop.f32.mrb[0].mxu0
      %3590 = vmatprep.mubr.bf16.mxu0 0
      %3591 = vmatmul.mubr.bf16.gmra.mrb[0].mxu0 %v3407
      %v3592 = vpop.f32.mrb[0].mxu0
      %v3593 = vadd.f32 0.0, %v3592
      %v3594 = vpop.f32.mrb[0].mxu0
      %v3595 = vpop.f32.mrb[0].mxu0
      %v3596 = vadd.f32 0.0, %v3595
      %v3597 = vpop.f32.mrb[0].mxu0
      %3598 = vmatprep.mubr.bf16.mxu0 0
      %3599 = vmatmul.mubr.bf16.gmra.mrb[0].mxu0 %v3408
      %v3600 = vpop.f32.mrb[0].mxu0
      %v3601 = vadd.f32 0.0, %v3600
      %v3602 = vpop.f32.mrb[0].mxu0
      %v3603 = vpop.f32.mrb[0].mxu0
      %v3604 = vadd.f32 0.0, %v3603
      %v3605 = vpop.f32.mrb[0].mxu0
      %3606 = vmatprep.mubr.bf16.mxu0 0
      %3607 = vmatmul.mubr.bf16.gmra.mrb[0].mxu0 %v3409
      %v3608 = vpop.f32.mrb[0].mxu0
      %v3609 = vadd.f32 0.0, %v3608
      %v3610 = vpop.f32.mrb[0].mxu0
      %v3611 = vpop.f32.mrb[0].mxu0
      %v3612 = vadd.f32 0.0, %v3611
      %v3613 = vpop.f32.mrb[0].mxu0
      %3614 = vmatprep.mubr.bf16.mxu0 0
      %3615 = vmatmul.mubr.bf16.gmra.mrb[0].mxu0 %v3410
      %v3616 = vpop.f32.mrb[0].mxu0
      %v3617 = vadd.f32 0.0, %v3616
      %v3618 = vpop.f32.mrb[0].mxu0
      %v3619 = vpop.f32.mrb[0].mxu0
      %v3620 = vadd.f32 0.0, %v3619
      %v3621 = vpop.f32.mrb[0].mxu0
      %3622 = vmatprep.mubr.bf16.mxu0 0
      %3623 = vmatmul.mubr.bf16.gmra.mrb[0].mxu0 %v3411
      %v3624 = vpop.f32.mrb[0].mxu0
      %v3625 = vadd.f32 0.0, %v3624
      %v3626 = vpop.f32.mrb[0].mxu0
      %v3627 = vpop.f32.mrb[0].mxu0
      %v3628 = vadd.f32 0.0, %v3627
      %v3629 = vpop.f32.mrb[0].mxu0
      %3630 = vmatprep.mubr.bf16.mxu0 0
      %3631 = vmatmul.mubr.bf16.gmra.mrb[0].mxu0 %v3412
      %v3632 = vpop.f32.mrb[0].mxu0
      %v3633 = vadd.f32 0.0, %v3632
      %v3634 = vpop.f32.mrb[0].mxu0
      %v3635 = vpop.f32.mrb[0].mxu0
      %v3636 = vadd.f32 0.0, %v3635
      %v3637 = vpop.f32.mrb[0].mxu0
      %3638 = vdwg.mxu0
      %v3639 = vadd.f32 %v3333, %v3513
      %v3640 = vadd.f32 %v3334, %v3516
      %v3641 = vadd.f32 %v3335, %v3521
      %v3642 = vadd.f32 %v3336, %v3524
      %v3643 = vadd.f32 %v3337, %v3529
      %v3644 = vadd.f32 %v3338, %v3532
      %v3645 = vadd.f32 %v3339, %v3537
      %v3646 = vadd.f32 %v3340, %v3540
      %v3647 = vadd.f32 %v3341, %v3545
      %v3648 = vadd.f32 %v3342, %v3548
      %v3649 = vadd.f32 %v3343, %v3553
      %v3650 = vadd.f32 %v3344, %v3556
      %v3651 = vadd.f32 %v3345, %v3561
      %v3652 = vadd.f32 %v3346, %v3564
      %v3653 = vadd.f32 %v3347, %v3569
      %v3654 = vadd.f32 %v3348, %v3572
      %v3655 = vadd.f32 %v3349, %v3577
      %v3656 = vadd.f32 %v3350, %v3580
      %v3657 = vadd.f32 %v3351, %v3585
      %v3658 = vadd.f32 %v3352, %v3588
      %v3659 = vadd.f32 %v3353, %v3593
      %v3660 = vadd.f32 %v3354, %v3596
      %v3661 = vadd.f32 %v3355, %v3601
      %v3662 = vadd.f32 %v3356, %v3604
      %v3663 = vadd.f32 %v3357, %v3609
      %v3664 = vadd.f32 %v3358, %v3612
      %v3665 = vadd.f32 %v3359, %v3617
      %v3666 = vadd.f32 %v3360, %v3620
      %v3667 = vadd.f32 %v3361, %v3625
      %v3668 = vadd.f32 %v3362, %v3628
      %v3669 = vadd.f32 %v3363, %v3633
      %v3670 = vadd.f32 %v3364, %v3636
      %v3671 = vld [vmem:[#allocation2 + $0x2] sm:$0xff]
      %v3672 = vld [vmem:[#allocation2 + $0xa] sm:$0xff]
      %v3673 = vld [vmem:[#allocation2 + $0x1a] sm:$0xff]
      %v3674 = vld [vmem:[#allocation2 + $0x22] sm:$0xff]
      %v3675 = vld [vmem:[#allocation2 + $0x32] sm:$0xff]
      %v3676 = vld [vmem:[#allocation2 + $0x3a] sm:$0xff]
      %v3677 = vld [vmem:[#allocation2 + $0x4a] sm:$0xff]
      %v3678 = vld [vmem:[#allocation2 + $0x52] sm:$0xff]
      %v3679 = vld [vmem:[#allocation2 + $0x62] sm:$0xff]
      %v3680 = vld [vmem:[#allocation2 + $0x6a] sm:$0xff]
      %v3681 = vld [vmem:[#allocation2 + $0x7a] sm:$0xff]
      %v3682 = vld [vmem:[#allocation2 + $0x82] sm:$0xff]
      %v3683 = vld [vmem:[#allocation2 + $0x92] sm:$0xff]
      %v3684 = vld [vmem:[#allocation2 + $0x9a] sm:$0xff]
      %v3685 = vld [vmem:[#allocation2 + $0xaa] sm:$0xff]
      %v3686 = vld [vmem:[#allocation2 + $0xb2] sm:$0xff]
      %v3687 = vld [vmem:[#allocation2 + $0xc2] sm:$0xff]
      %v3688 = vld [vmem:[#allocation2 + $0xca] sm:$0xff]
      %v3689 = vld [vmem:[#allocation2 + $0xda] sm:$0xff]
      %v3690 = vld [vmem:[#allocation2 + $0xe2] sm:$0xff]
      %v3691 = vld [vmem:[#allocation2 + $0xf2] sm:$0xff]
      %v3692 = vld [vmem:[#allocation2 + $0xfa] sm:$0xff]
      %v3693 = vld [vmem:[#allocation2 + $0x10a] sm:$0xff]
      %v3694 = vld [vmem:[#allocation2 + $0x112] sm:$0xff]
      %v3695 = vld [vmem:[#allocation2 + $0x122] sm:$0xff]
      %v3696 = vld [vmem:[#allocation2 + $0x12a] sm:$0xff]
      %v3697 = vld [vmem:[#allocation2 + $0x13a] sm:$0xff]
      %v3698 = vld [vmem:[#allocation2 + $0x142] sm:$0xff]
      %v3699 = vld [vmem:[#allocation2 + $0x152] sm:$0xff]
      %v3700 = vld [vmem:[#allocation2 + $0x15a] sm:$0xff]
      %v3701 = vld [vmem:[#allocation2 + $0x16a] sm:$0xff]
      %v3702 = vld [vmem:[#allocation2 + $0x172] sm:$0xff]
      %v3703 = vpack.c.bf16 %v3672, %v3671
      %v3704 = vpack.c.bf16 %v3674, %v3673
      %v3705 = vpack.c.bf16 %v3676, %v3675
      %v3706 = vpack.c.bf16 %v3678, %v3677
      %v3707 = vpack.c.bf16 %v3680, %v3679
      %v3708 = vpack.c.bf16 %v3682, %v3681
      %v3709 = vpack.c.bf16 %v3684, %v3683
      %v3710 = vpack.c.bf16 %v3686, %v3685
      %v3711 = vpack.c.bf16 %v3688, %v3687
      %v3712 = vpack.c.bf16 %v3690, %v3689
      %v3713 = vpack.c.bf16 %v3692, %v3691
      %v3714 = vpack.c.bf16 %v3694, %v3693
      %v3715 = vpack.c.bf16 %v3696, %v3695
      %v3716 = vpack.c.bf16 %v3698, %v3697
      %v3717 = vpack.c.bf16 %v3700, %v3699
      %v3718 = vpack.c.bf16 %v3702, %v3701
      %s3719 = scalar_lea.vmem %s3, 128
      %v3720 = vld [vmem:[%s3719] sm:$0xf]
      %v3721 = vld [vmem:[%s3719 + $0x4] sm:$0xf]
      %v3722 = vld [vmem:[%s3719 + $0x8] sm:$0xf]
      %v3723 = vld [vmem:[%s3719 + $0xc] sm:$0xf]
      %v3724 = vld [vmem:[%s3719 + $0x10] sm:$0xf]
      %v3725 = vld [vmem:[%s3719 + $0x14] sm:$0xf]
      %v3726 = vld [vmem:[%s3719 + $0x18] sm:$0xf]
      %v3727 = vld [vmem:[%s3719 + $0x1c] sm:$0xf]
      %v3728 = vld [vmem:[%s3719 + $0x20] sm:$0xf]
      %v3729 = vld [vmem:[%s3719 + $0x24] sm:$0xf]
      %v3730 = vld [vmem:[%s3719 + $0x28] sm:$0xf]
      %v3731 = vld [vmem:[%s3719 + $0x2c] sm:$0xf]
      %v3732 = vld [vmem:[%s3719 + $0x30] sm:$0xf]
      %v3733 = vld [vmem:[%s3719 + $0x34] sm:$0xf]
      %v3734 = vld [vmem:[%s3719 + $0x38] sm:$0xf]
      %v3735 = vld [vmem:[%s3719 + $0x3c] sm:$0xf]
      %v3752 = vunpack.c.l.b16 %v3720
      %v3753 = vunpack.c.l.b16 %v3721
      %v3754 = vunpack.c.l.b16 %v3722
      %v3755 = vunpack.c.l.b16 %v3723
      %v3756 = vunpack.c.l.b16 %v3724
      %v3757 = vunpack.c.l.b16 %v3725
      %v3758 = vunpack.c.l.b16 %v3726
      %v3759 = vunpack.c.l.b16 %v3727
      %v3760 = vunpack.c.l.b16 %v3728
      %v3761 = vunpack.c.l.b16 %v3729
      %v3762 = vunpack.c.l.b16 %v3730
      %v3763 = vunpack.c.l.b16 %v3731
      %v3764 = vunpack.c.l.b16 %v3732
      %v3765 = vunpack.c.l.b16 %v3733
      %v3766 = vunpack.c.l.b16 %v3734
      %v3767 = vunpack.c.l.b16 %v3735
      %v3768 = vpack.c.b16 %v3753, %v3752
      %v3769 = vpack.c.b16 %v3755, %v3754
      %v3770 = vpack.c.b16 %v3757, %v3756
      %v3771 = vpack.c.b16 %v3759, %v3758
      %v3772 = vpack.c.b16 %v3761, %v3760
      %v3773 = vpack.c.b16 %v3763, %v3762
      %v3774 = vpack.c.b16 %v3765, %v3764
      %v3775 = vpack.c.b16 %v3767, %v3766
      %3784 = vmatprep.subr.bf16.mxu0 0
      %3785 = vmatpush1.bf16.msra.mxu0 %v3768
      %3786 = vmatprep.subr.bf16.mxu0 0
      %3787 = vmatpush1.bf16.msra.mxu0 %v3769
      %3788 = vmatprep.subr.bf16.mxu0 0
      %3789 = vmatpush1.bf16.msra.mxu0 %v3770
      %3790 = vmatprep.subr.bf16.mxu0 0
      %3791 = vmatpush1.bf16.msra.mxu0 %v3771
      %3792 = vmatprep.subr.bf16.mxu0 0
      %3793 = vmatpush1.bf16.msra.mxu0 %v3772
      %3794 = vmatprep.subr.bf16.mxu0 0
      %3795 = vmatpush1.bf16.msra.mxu0 %v3773
      %3796 = vmatprep.subr.bf16.mxu0 0
      %3797 = vmatpush1.bf16.msra.mxu0 %v3774
      %3798 = vmatprep.subr.bf16.mxu0 0
      %3799 = vmatpush1.bf16.msra.mxu0 %v3775
      %3800 = vmatprep.subr.bf16.mxu0 0
      %3801 = vmatpush1.bf16.msra.mxu0 0
      %3802 = vmatprep.subr.bf16.mxu0 0
      %3803 = vmatpush1.bf16.msra.mxu0 0
      %3804 = vmatprep.subr.bf16.mxu0 0
      %3805 = vmatpush1.bf16.msra.mxu0 0
      %3806 = vmatprep.subr.bf16.mxu0 0
      %3807 = vmatpush1.bf16.msra.mxu0 0
      %3808 = vmatprep.subr.bf16.mxu0 0
      %3809 = vmatpush1.bf16.msra.mxu0 0
      %3810 = vmatprep.subr.bf16.mxu0 0
      %3811 = vmatpush1.bf16.msra.mxu0 0
      %3812 = vmatprep.subr.bf16.mxu0 0
      %3813 = vmatpush1.bf16.msra.mxu0 0
      %3814 = vmatprep.subr.bf16.mxu0 0
      %3815 = vmatpush1.bf16.msra.mxu0 0
      %3816 = vmatprep.mubr.bf16.mxu0 0
      %3817 = vmatmul.mubr.bf16.gmra.mrb[0].mxu0 %v3703
      %v3818 = vpop.f32.mrb[0].mxu0
      %v3819 = vadd.f32 0.0, %v3818
      %v3820 = vpop.f32.mrb[0].mxu0
      %v3821 = vpop.f32.mrb[0].mxu0
      %v3822 = vadd.f32 0.0, %v3821
      %v3823 = vpop.f32.mrb[0].mxu0
      %3824 = vmatprep.mubr.bf16.mxu0 0
      %3825 = vmatmul.mubr.bf16.gmra.mrb[0].mxu0 %v3704
      %v3826 = vpop.f32.mrb[0].mxu0
      %v3827 = vadd.f32 0.0, %v3826
      %v3828 = vpop.f32.mrb[0].mxu0
      %v3829 = vpop.f32.mrb[0].mxu0
      %v3830 = vadd.f32 0.0, %v3829
      %v3831 = vpop.f32.mrb[0].mxu0
      %3832 = vmatprep.mubr.bf16.mxu0 0
      %3833 = vmatmul.mubr.bf16.gmra.mrb[0].mxu0 %v3705
      %v3834 = vpop.f32.mrb[0].mxu0
      %v3835 = vadd.f32 0.0, %v3834
      %v3836 = vpop.f32.mrb[0].mxu0
      %v3837 = vpop.f32.mrb[0].mxu0
      %v3838 = vadd.f32 0.0, %v3837
      %v3839 = vpop.f32.mrb[0].mxu0
      %3840 = vmatprep.mubr.bf16.mxu0 0
      %3841 = vmatmul.mubr.bf16.gmra.mrb[0].mxu0 %v3706
      %v3842 = vpop.f32.mrb[0].mxu0
      %v3843 = vadd.f32 0.0, %v3842
      %v3844 = vpop.f32.mrb[0].mxu0
      %v3845 = vpop.f32.mrb[0].mxu0
      %v3846 = vadd.f32 0.0, %v3845
      %v3847 = vpop.f32.mrb[0].mxu0
      %3848 = vmatprep.mubr.bf16.mxu0 0
      %3849 = vmatmul.mubr.bf16.gmra.mrb[0].mxu0 %v3707
      %v3850 = vpop.f32.mrb[0].mxu0
      %v3851 = vadd.f32 0.0, %v3850
      %v3852 = vpop.f32.mrb[0].mxu0
      %v3853 = vpop.f32.mrb[0].mxu0
      %v3854 = vadd.f32 0.0, %v3853
      %v3855 = vpop.f32.mrb[0].mxu0
      %3856 = vmatprep.mubr.bf16.mxu0 0
      %3857 = vmatmul.mubr.bf16.gmra.mrb[0].mxu0 %v3708
      %v3858 = vpop.f32.mrb[0].mxu0
      %v3859 = vadd.f32 0.0, %v3858
      %v3860 = vpop.f32.mrb[0].mxu0
      %v3861 = vpop.f32.mrb[0].mxu0
      %v3862 = vadd.f32 0.0, %v3861
      %v3863 = vpop.f32.mrb[0].mxu0
      %3864 = vmatprep.mubr.bf16.mxu0 0
      %3865 = vmatmul.mubr.bf16.gmra.mrb[0].mxu0 %v3709
      %v3866 = vpop.f32.mrb[0].mxu0
      %v3867 = vadd.f32 0.0, %v3866
      %v3868 = vpop.f32.mrb[0].mxu0
      %v3869 = vpop.f32.mrb[0].mxu0
      %v3870 = vadd.f32 0.0, %v3869
      %v3871 = vpop.f32.mrb[0].mxu0
      %3872 = vmatprep.mubr.bf16.mxu0 0
      %3873 = vmatmul.mubr.bf16.gmra.mrb[0].mxu0 %v3710
      %v3874 = vpop.f32.mrb[0].mxu0
      %v3875 = vadd.f32 0.0, %v3874
      %v3876 = vpop.f32.mrb[0].mxu0
      %v3877 = vpop.f32.mrb[0].mxu0
      %v3878 = vadd.f32 0.0, %v3877
      %v3879 = vpop.f32.mrb[0].mxu0
      %3880 = vmatprep.mubr.bf16.mxu0 0
      %3881 = vmatmul.mubr.bf16.gmra.mrb[0].mxu0 %v3711
      %v3882 = vpop.f32.mrb[0].mxu0
      %v3883 = vadd.f32 0.0, %v3882
      %v3884 = vpop.f32.mrb[0].mxu0
      %v3885 = vpop.f32.mrb[0].mxu0
      %v3886 = vadd.f32 0.0, %v3885
      %v3887 = vpop.f32.mrb[0].mxu0
      %3888 = vmatprep.mubr.bf16.mxu0 0
      %3889 = vmatmul.mubr.bf16.gmra.mrb[0].mxu0 %v3712
      %v3890 = vpop.f32.mrb[0].mxu0
      %v3891 = vadd.f32 0.0, %v3890
      %v3892 = vpop.f32.mrb[0].mxu0
      %v3893 = vpop.f32.mrb[0].mxu0
      %v3894 = vadd.f32 0.0, %v3893
      %v3895 = vpop.f32.mrb[0].mxu0
      %3896 = vmatprep.mubr.bf16.mxu0 0
      %3897 = vmatmul.mubr.bf16.gmra.mrb[0].mxu0 %v3713
      %v3898 = vpop.f32.mrb[0].mxu0
      %v3899 = vadd.f32 0.0, %v3898
      %v3900 = vpop.f32.mrb[0].mxu0
      %v3901 = vpop.f32.mrb[0].mxu0
      %v3902 = vadd.f32 0.0, %v3901
      %v3903 = vpop.f32.mrb[0].mxu0
      %3904 = vmatprep.mubr.bf16.mxu0 0
      %3905 = vmatmul.mubr.bf16.gmra.mrb[0].mxu0 %v3714
      %v3906 = vpop.f32.mrb[0].mxu0
      %v3907 = vadd.f32 0.0, %v3906
      %v3908 = vpop.f32.mrb[0].mxu0
      %v3909 = vpop.f32.mrb[0].mxu0
      %v3910 = vadd.f32 0.0, %v3909
      %v3911 = vpop.f32.mrb[0].mxu0
      %3912 = vmatprep.mubr.bf16.mxu0 0
      %3913 = vmatmul.mubr.bf16.gmra.mrb[0].mxu0 %v3715
      %v3914 = vpop.f32.mrb[0].mxu0
      %v3915 = vadd.f32 0.0, %v3914
      %v3916 = vpop.f32.mrb[0].mxu0
      %v3917 = vpop.f32.mrb[0].mxu0
      %v3918 = vadd.f32 0.0, %v3917
      %v3919 = vpop.f32.mrb[0].mxu0
      %3920 = vmatprep.mubr.bf16.mxu0 0
      %3921 = vmatmul.mubr.bf16.gmra.mrb[0].mxu0 %v3716
      %v3922 = vpop.f32.mrb[0].mxu0
      %v3923 = vadd.f32 0.0, %v3922
      %v3924 = vpop.f32.mrb[0].mxu0
      %v3925 = vpop.f32.mrb[0].mxu0
      %v3926 = vadd.f32 0.0, %v3925
      %v3927 = vpop.f32.mrb[0].mxu0
      %3928 = vmatprep.mubr.bf16.mxu0 0
      %3929 = vmatmul.mubr.bf16.gmra.mrb[0].mxu0 %v3717
      %v3930 = vpop.f32.mrb[0].mxu0
      %v3931 = vadd.f32 0.0, %v3930
      %v3932 = vpop.f32.mrb[0].mxu0
      %v3933 = vpop.f32.mrb[0].mxu0
      %v3934 = vadd.f32 0.0, %v3933
      %v3935 = vpop.f32.mrb[0].mxu0
      %3936 = vmatprep.mubr.bf16.mxu0 0
      %3937 = vmatmul.mubr.bf16.gmra.mrb[0].mxu0 %v3718
      %v3938 = vpop.f32.mrb[0].mxu0
      %v3939 = vadd.f32 0.0, %v3938
      %v3940 = vpop.f32.mrb[0].mxu0
      %v3941 = vpop.f32.mrb[0].mxu0
      %v3942 = vadd.f32 0.0, %v3941
      %v3943 = vpop.f32.mrb[0].mxu0
      %3944 = vdwg.mxu0
      %v3945 = vadd.f32 %v3639, %v3819
      %v3946 = vadd.f32 %v3640, %v3822
      %v3947 = vadd.f32 %v3641, %v3827
      %v3948 = vadd.f32 %v3642, %v3830
      %v3949 = vadd.f32 %v3643, %v3835
      %v3950 = vadd.f32 %v3644, %v3838
      %v3951 = vadd.f32 %v3645, %v3843
      %v3952 = vadd.f32 %v3646, %v3846
      %v3953 = vadd.f32 %v3647, %v3851
      %v3954 = vadd.f32 %v3648, %v3854
      %v3955 = vadd.f32 %v3649, %v3859
      %v3956 = vadd.f32 %v3650, %v3862
      %v3957 = vadd.f32 %v3651, %v3867
      %v3958 = vadd.f32 %v3652, %v3870
      %v3959 = vadd.f32 %v3653, %v3875
      %v3960 = vadd.f32 %v3654, %v3878
      %v3961 = vadd.f32 %v3655, %v3883
      %v3962 = vadd.f32 %v3656, %v3886
      %v3963 = vadd.f32 %v3657, %v3891
      %v3964 = vadd.f32 %v3658, %v3894
      %v3965 = vadd.f32 %v3659, %v3899
      %v3966 = vadd.f32 %v3660, %v3902
      %v3967 = vadd.f32 %v3661, %v3907
      %v3968 = vadd.f32 %v3662, %v3910
      %v3969 = vadd.f32 %v3663, %v3915
      %v3970 = vadd.f32 %v3664, %v3918
      %v3971 = vadd.f32 %v3665, %v3923
      %v3972 = vadd.f32 %v3666, %v3926
      %v3973 = vadd.f32 %v3667, %v3931
      %v3974 = vadd.f32 %v3668, %v3934
      %v3975 = vadd.f32 %v3669, %v3939
      %v3976 = vadd.f32 %v3670, %v3942
      %v3977 = vld [vmem:[%s3020] sm:$0xff]
      %v3978 = vld [vmem:[%s3020 + $0x8] sm:$0xff]
      %v3979 = vld [vmem:[%s3020 + $0x18] sm:$0xff]
      %v3980 = vld [vmem:[%s3020 + $0x20] sm:$0xff]
      %v3981 = vld [vmem:[%s3020 + $0x30] sm:$0xff]
      %v3982 = vld [vmem:[%s3020 + $0x38] sm:$0xff]
      %v3983 = vld [vmem:[%s3020 + $0x48] sm:$0xff]
      %v3984 = vld [vmem:[%s3020 + $0x50] sm:$0xff]
      %v3985 = vld [vmem:[%s3020 + $0x60] sm:$0xff]
      %v3986 = vld [vmem:[%s3020 + $0x68] sm:$0xff]
      %v3987 = vld [vmem:[%s3020 + $0x78] sm:$0xff]
      %v3988 = vld [vmem:[%s3020 + $0x80] sm:$0xff]
      %v3989 = vld [vmem:[%s3020 + $0x90] sm:$0xff]
      %v3990 = vld [vmem:[%s3020 + $0x98] sm:$0xff]
      %v3991 = vld [vmem:[%s3020 + $0xa8] sm:$0xff]
      %v3992 = vld [vmem:[%s3020 + $0xb0] sm:$0xff]
      %v3993 = vld [vmem:[%s3020 + $0xc0] sm:$0xff]
      %v3994 = vld [vmem:[%s3020 + $0xc8] sm:$0xff]
      %v3995 = vld [vmem:[%s3020 + $0xd8] sm:$0xff]
      %v3996 = vld [vmem:[%s3020 + $0xe0] sm:$0xff]
      %v3997 = vld [vmem:[%s3020 + $0xf0] sm:$0xff]
      %v3998 = vld [vmem:[%s3020 + $0xf8] sm:$0xff]
      %v3999 = vld [vmem:[%s3020 + $0x108] sm:$0xff]
      %v4000 = vld [vmem:[%s3020 + $0x110] sm:$0xff]
      %v4001 = vld [vmem:[%s3020 + $0x120] sm:$0xff]
      %v4002 = vld [vmem:[%s3020 + $0x128] sm:$0xff]
      %v4003 = vld [vmem:[%s3020 + $0x138] sm:$0xff]
      %v4004 = vld [vmem:[%s3020 + $0x140] sm:$0xff]
      %v4005 = vld [vmem:[%s3020 + $0x150] sm:$0xff]
      %v4006 = vld [vmem:[%s3020 + $0x158] sm:$0xff]
      %v4007 = vld [vmem:[%s3020 + $0x168] sm:$0xff]
      %v4008 = vld [vmem:[%s3020 + $0x170] sm:$0xff]
      %v4009 = vpack.c.bf16 %v3978, %v3977
      %v4010 = vpack.c.bf16 %v3980, %v3979
      %v4011 = vpack.c.bf16 %v3982, %v3981
      %v4012 = vpack.c.bf16 %v3984, %v3983
      %v4013 = vpack.c.bf16 %v3986, %v3985
      %v4014 = vpack.c.bf16 %v3988, %v3987
      %v4015 = vpack.c.bf16 %v3990, %v3989
      %v4016 = vpack.c.bf16 %v3992, %v3991
      %v4017 = vpack.c.bf16 %v3994, %v3993
      %v4018 = vpack.c.bf16 %v3996, %v3995
      %v4019 = vpack.c.bf16 %v3998, %v3997
      %v4020 = vpack.c.bf16 %v4000, %v3999
      %v4021 = vpack.c.bf16 %v4002, %v4001
      %v4022 = vpack.c.bf16 %v4004, %v4003
      %v4023 = vpack.c.bf16 %v4006, %v4005
      %v4024 = vpack.c.bf16 %v4008, %v4007
      %s4025 = scalar_lea.vmem %s3, 192
      %v4026 = vld [vmem:[%s4025] sm:$0xf]
      %v4027 = vld [vmem:[%s4025 + $0x4] sm:$0xf]
      %v4028 = vld [vmem:[%s4025 + $0x8] sm:$0xf]
      %v4029 = vld [vmem:[%s4025 + $0xc] sm:$0xf]
      %v4030 = vld [vmem:[%s4025 + $0x10] sm:$0xf]
      %v4031 = vld [vmem:[%s4025 + $0x14] sm:$0xf]
      %v4032 = vld [vmem:[%s4025 + $0x18] sm:$0xf]
      %v4033 = vld [vmem:[%s4025 + $0x1c] sm:$0xf]
      %v4034 = vld [vmem:[%s4025 + $0x20] sm:$0xf]
      %v4035 = vld [vmem:[%s4025 + $0x24] sm:$0xf]
      %v4036 = vld [vmem:[%s4025 + $0x28] sm:$0xf]
      %v4037 = vld [vmem:[%s4025 + $0x2c] sm:$0xf]
      %v4038 = vld [vmem:[%s4025 + $0x30] sm:$0xf]
      %v4039 = vld [vmem:[%s4025 + $0x34] sm:$0xf]
      %v4040 = vld [vmem:[%s4025 + $0x38] sm:$0xf]
      %v4041 = vld [vmem:[%s4025 + $0x3c] sm:$0xf]
      %v4058 = vunpack.c.l.b16 %v4026
      %v4059 = vunpack.c.l.b16 %v4027
      %v4060 = vunpack.c.l.b16 %v4028
      %v4061 = vunpack.c.l.b16 %v4029
      %v4062 = vunpack.c.l.b16 %v4030
      %v4063 = vunpack.c.l.b16 %v4031
      %v4064 = vunpack.c.l.b16 %v4032
      %v4065 = vunpack.c.l.b16 %v4033
      %v4066 = vunpack.c.l.b16 %v4034
      %v4067 = vunpack.c.l.b16 %v4035
      %v4068 = vunpack.c.l.b16 %v4036
      %v4069 = vunpack.c.l.b16 %v4037
      %v4070 = vunpack.c.l.b16 %v4038
      %v4071 = vunpack.c.l.b16 %v4039
      %v4072 = vunpack.c.l.b16 %v4040
      %v4073 = vunpack.c.l.b16 %v4041
      %v4074 = vpack.c.b16 %v4059, %v4058
      %v4075 = vpack.c.b16 %v4061, %v4060
      %v4076 = vpack.c.b16 %v4063, %v4062
      %v4077 = vpack.c.b16 %v4065, %v4064
      %v4078 = vpack.c.b16 %v4067, %v4066
      %v4079 = vpack.c.b16 %v4069, %v4068
      %v4080 = vpack.c.b16 %v4071, %v4070
      %v4081 = vpack.c.b16 %v4073, %v4072
      %4090 = vmatprep.subr.bf16.mxu0 0
      %4091 = vmatpush1.bf16.msra.mxu0 %v4074
      %4092 = vmatprep.subr.bf16.mxu0 0
      %4093 = vmatpush1.bf16.msra.mxu0 %v4075
      %4094 = vmatprep.subr.bf16.mxu0 0
      %4095 = vmatpush1.bf16.msra.mxu0 %v4076
      %4096 = vmatprep.subr.bf16.mxu0 0
      %4097 = vmatpush1.bf16.msra.mxu0 %v4077
      %4098 = vmatprep.subr.bf16.mxu0 0
      %4099 = vmatpush1.bf16.msra.mxu0 %v4078
      %4100 = vmatprep.subr.bf16.mxu0 0
      %4101 = vmatpush1.bf16.msra.mxu0 %v4079
      %4102 = vmatprep.subr.bf16.mxu0 0
      %4103 = vmatpush1.bf16.msra.mxu0 %v4080
      %4104 = vmatprep.subr.bf16.mxu0 0
      %4105 = vmatpush1.bf16.msra.mxu0 %v4081
      %4106 = vmatprep.subr.bf16.mxu0 0
      %4107 = vmatpush1.bf16.msra.mxu0 0
      %4108 = vmatprep.subr.bf16.mxu0 0
      %4109 = vmatpush1.bf16.msra.mxu0 0
      %4110 = vmatprep.subr.bf16.mxu0 0
      %4111 = vmatpush1.bf16.msra.mxu0 0
      %4112 = vmatprep.subr.bf16.mxu0 0
      %4113 = vmatpush1.bf16.msra.mxu0 0
      %4114 = vmatprep.subr.bf16.mxu0 0
      %4115 = vmatpush1.bf16.msra.mxu0 0
      %4116 = vmatprep.subr.bf16.mxu0 0
      %4117 = vmatpush1.bf16.msra.mxu0 0
      %4118 = vmatprep.subr.bf16.mxu0 0
      %4119 = vmatpush1.bf16.msra.mxu0 0
      %4120 = vmatprep.subr.bf16.mxu0 0
      %4121 = vmatpush1.bf16.msra.mxu0 0
      %4122 = vmatprep.mubr.bf16.mxu0 0
      %4123 = vmatmul.mubr.bf16.gmra.mrb[0].mxu0 %v4009
      %v4124 = vpop.f32.mrb[0].mxu0
      %v4125 = vadd.f32 0.0, %v4124
      %v4126 = vpop.f32.mrb[0].mxu0
      %v4127 = vpop.f32.mrb[0].mxu0
      %v4128 = vadd.f32 0.0, %v4127
      %v4129 = vpop.f32.mrb[0].mxu0
      %4130 = vmatprep.mubr.bf16.mxu0 0
      %4131 = vmatmul.mubr.bf16.gmra.mrb[0].mxu0 %v4010
      %v4132 = vpop.f32.mrb[0].mxu0
      %v4133 = vadd.f32 0.0, %v4132
      %v4134 = vpop.f32.mrb[0].mxu0
      %v4135 = vpop.f32.mrb[0].mxu0
      %v4136 = vadd.f32 0.0, %v4135
      %v4137 = vpop.f32.mrb[0].mxu0
      %4138 = vmatprep.mubr.bf16.mxu0 0
      %4139 = vmatmul.mubr.bf16.gmra.mrb[0].mxu0 %v4011
      %v4140 = vpop.f32.mrb[0].mxu0
      %v4141 = vadd.f32 0.0, %v4140
      %v4142 = vpop.f32.mrb[0].mxu0
      %v4143 = vpop.f32.mrb[0].mxu0
      %v4144 = vadd.f32 0.0, %v4143
      %v4145 = vpop.f32.mrb[0].mxu0
      %4146 = vmatprep.mubr.bf16.mxu0 0
      %4147 = vmatmul.mubr.bf16.gmra.mrb[0].mxu0 %v4012
      %v4148 = vpop.f32.mrb[0].mxu0
      %v4149 = vadd.f32 0.0, %v4148
      %v4150 = vpop.f32.mrb[0].mxu0
      %v4151 = vpop.f32.mrb[0].mxu0
      %v4152 = vadd.f32 0.0, %v4151
      %v4153 = vpop.f32.mrb[0].mxu0
      %4154 = vmatprep.mubr.bf16.mxu0 0
      %4155 = vmatmul.mubr.bf16.gmra.mrb[0].mxu0 %v4013
      %v4156 = vpop.f32.mrb[0].mxu0
      %v4157 = vadd.f32 0.0, %v4156
      %v4158 = vpop.f32.mrb[0].mxu0
      %v4159 = vpop.f32.mrb[0].mxu0
      %v4160 = vadd.f32 0.0, %v4159
      %v4161 = vpop.f32.mrb[0].mxu0
      %4162 = vmatprep.mubr.bf16.mxu0 0
      %4163 = vmatmul.mubr.bf16.gmra.mrb[0].mxu0 %v4014
      %v4164 = vpop.f32.mrb[0].mxu0
      %v4165 = vadd.f32 0.0, %v4164
      %v4166 = vpop.f32.mrb[0].mxu0
      %v4167 = vpop.f32.mrb[0].mxu0
      %v4168 = vadd.f32 0.0, %v4167
      %v4169 = vpop.f32.mrb[0].mxu0
      %4170 = vmatprep.mubr.bf16.mxu0 0
      %4171 = vmatmul.mubr.bf16.gmra.mrb[0].mxu0 %v4015
      %v4172 = vpop.f32.mrb[0].mxu0
      %v4173 = vadd.f32 0.0, %v4172
      %v4174 = vpop.f32.mrb[0].mxu0
      %v4175 = vpop.f32.mrb[0].mxu0
      %v4176 = vadd.f32 0.0, %v4175
      %v4177 = vpop.f32.mrb[0].mxu0
      %4178 = vmatprep.mubr.bf16.mxu0 0
      %4179 = vmatmul.mubr.bf16.gmra.mrb[0].mxu0 %v4016
      %v4180 = vpop.f32.mrb[0].mxu0
      %v4181 = vadd.f32 0.0, %v4180
      %v4182 = vpop.f32.mrb[0].mxu0
      %v4183 = vpop.f32.mrb[0].mxu0
      %v4184 = vadd.f32 0.0, %v4183
      %v4185 = vpop.f32.mrb[0].mxu0
      %4186 = vmatprep.mubr.bf16.mxu0 0
      %4187 = vmatmul.mubr.bf16.gmra.mrb[0].mxu0 %v4017
      %v4188 = vpop.f32.mrb[0].mxu0
      %v4189 = vadd.f32 0.0, %v4188
      %v4190 = vpop.f32.mrb[0].mxu0
      %v4191 = vpop.f32.mrb[0].mxu0
      %v4192 = vadd.f32 0.0, %v4191
      %v4193 = vpop.f32.mrb[0].mxu0
      %4194 = vmatprep.mubr.bf16.mxu0 0
      %4195 = vmatmul.mubr.bf16.gmra.mrb[0].mxu0 %v4018
      %v4196 = vpop.f32.mrb[0].mxu0
      %v4197 = vadd.f32 0.0, %v4196
      %v4198 = vpop.f32.mrb[0].mxu0
      %v4199 = vpop.f32.mrb[0].mxu0
      %v4200 = vadd.f32 0.0, %v4199
      %v4201 = vpop.f32.mrb[0].mxu0
      %4202 = vmatprep.mubr.bf16.mxu0 0
      %4203 = vmatmul.mubr.bf16.gmra.mrb[0].mxu0 %v4019
      %v4204 = vpop.f32.mrb[0].mxu0
      %v4205 = vadd.f32 0.0, %v4204
      %v4206 = vpop.f32.mrb[0].mxu0
      %v4207 = vpop.f32.mrb[0].mxu0
      %v4208 = vadd.f32 0.0, %v4207
      %v4209 = vpop.f32.mrb[0].mxu0
      %4210 = vmatprep.mubr.bf16.mxu0 0
      %4211 = vmatmul.mubr.bf16.gmra.mrb[0].mxu0 %v4020
      %v4212 = vpop.f32.mrb[0].mxu0
      %v4213 = vadd.f32 0.0, %v4212
      %v4214 = vpop.f32.mrb[0].mxu0
      %v4215 = vpop.f32.mrb[0].mxu0
      %v4216 = vadd.f32 0.0, %v4215
      %v4217 = vpop.f32.mrb[0].mxu0
      %4218 = vmatprep.mubr.bf16.mxu0 0
      %4219 = vmatmul.mubr.bf16.gmra.mrb[0].mxu0 %v4021
      %v4220 = vpop.f32.mrb[0].mxu0
      %v4221 = vadd.f32 0.0, %v4220
      %v4222 = vpop.f32.mrb[0].mxu0
      %v4223 = vpop.f32.mrb[0].mxu0
      %v4224 = vadd.f32 0.0, %v4223
      %v4225 = vpop.f32.mrb[0].mxu0
      %4226 = vmatprep.mubr.bf16.mxu0 0
      %4227 = vmatmul.mubr.bf16.gmra.mrb[0].mxu0 %v4022
      %v4228 = vpop.f32.mrb[0].mxu0
      %v4229 = vadd.f32 0.0, %v4228
      %v4230 = vpop.f32.mrb[0].mxu0
      %v4231 = vpop.f32.mrb[0].mxu0
      %v4232 = vadd.f32 0.0, %v4231
      %v4233 = vpop.f32.mrb[0].mxu0
      %4234 = vmatprep.mubr.bf16.mxu0 0
      %4235 = vmatmul.mubr.bf16.gmra.mrb[0].mxu0 %v4023
      %v4236 = vpop.f32.mrb[0].mxu0
      %v4237 = vadd.f32 0.0, %v4236
      %v4238 = vpop.f32.mrb[0].mxu0
      %v4239 = vpop.f32.mrb[0].mxu0
      %v4240 = vadd.f32 0.0, %v4239
      %v4241 = vpop.f32.mrb[0].mxu0
      %4242 = vmatprep.mubr.bf16.mxu0 0
      %4243 = vmatmul.mubr.bf16.gmra.mrb[0].mxu0 %v4024
      %v4244 = vpop.f32.mrb[0].mxu0
      %v4245 = vadd.f32 0.0, %v4244
      %v4246 = vpop.f32.mrb[0].mxu0
      %v4247 = vpop.f32.mrb[0].mxu0
      %v4248 = vadd.f32 0.0, %v4247
      %v4249 = vpop.f32.mrb[0].mxu0
      %4250 = vdwg.mxu0
      %v4251 = vadd.f32 %v3945, %v4125
      %v4252 = vadd.f32 %v3946, %v4128
      %v4253 = vadd.f32 %v3947, %v4133
      %v4254 = vadd.f32 %v3948, %v4136
      %v4255 = vadd.f32 %v3949, %v4141
      %v4256 = vadd.f32 %v3950, %v4144
      %v4257 = vadd.f32 %v3951, %v4149
      %v4258 = vadd.f32 %v3952, %v4152
      %v4259 = vadd.f32 %v3953, %v4157
      %v4260 = vadd.f32 %v3954, %v4160
      %v4261 = vadd.f32 %v3955, %v4165
      %v4262 = vadd.f32 %v3956, %v4168
      %v4263 = vadd.f32 %v3957, %v4173
      %v4264 = vadd.f32 %v3958, %v4176
      %v4265 = vadd.f32 %v3959, %v4181
      %v4266 = vadd.f32 %v3960, %v4184
      %v4267 = vadd.f32 %v3961, %v4189
      %v4268 = vadd.f32 %v3962, %v4192
      %v4269 = vadd.f32 %v3963, %v4197
      %v4270 = vadd.f32 %v3964, %v4200
      %v4271 = vadd.f32 %v3965, %v4205
      %v4272 = vadd.f32 %v3966, %v4208
      %v4273 = vadd.f32 %v3967, %v4213
      %v4274 = vadd.f32 %v3968, %v4216
      %v4275 = vadd.f32 %v3969, %v4221
      %v4276 = vadd.f32 %v3970, %v4224
      %v4277 = vadd.f32 %v3971, %v4229
      %v4278 = vadd.f32 %v3972, %v4232
      %v4279 = vadd.f32 %v3973, %v4237
      %v4280 = vadd.f32 %v3974, %v4240
      %v4281 = vadd.f32 %v3975, %v4245
      %v4282 = vadd.f32 %v3976, %v4248
      %v4283 = vld [vmem:[%s3020 + $0x1] sm:$0xff]
      %v4284 = vld [vmem:[%s3020 + $0x9] sm:$0xff]
      %v4285 = vld [vmem:[%s3020 + $0x19] sm:$0xff]
      %v4286 = vld [vmem:[%s3020 + $0x21] sm:$0xff]
      %v4287 = vld [vmem:[%s3020 + $0x31] sm:$0xff]
      %v4288 = vld [vmem:[%s3020 + $0x39] sm:$0xff]
      %v4289 = vld [vmem:[%s3020 + $0x49] sm:$0xff]
      %v4290 = vld [vmem:[%s3020 + $0x51] sm:$0xff]
      %v4291 = vld [vmem:[%s3020 + $0x61] sm:$0xff]
      %v4292 = vld [vmem:[%s3020 + $0x69] sm:$0xff]
      %v4293 = vld [vmem:[%s3020 + $0x79] sm:$0xff]
      %v4294 = vld [vmem:[%s3020 + $0x81] sm:$0xff]
      %v4295 = vld [vmem:[%s3020 + $0x91] sm:$0xff]
      %v4296 = vld [vmem:[%s3020 + $0x99] sm:$0xff]
      %v4297 = vld [vmem:[%s3020 + $0xa9] sm:$0xff]
      %v4298 = vld [vmem:[%s3020 + $0xb1] sm:$0xff]
      %v4299 = vld [vmem:[%s3020 + $0xc1] sm:$0xff]
      %v4300 = vld [vmem:[%s3020 + $0xc9] sm:$0xff]
      %v4301 = vld [vmem:[%s3020 + $0xd9] sm:$0xff]
      %v4302 = vld [vmem:[%s3020 + $0xe1] sm:$0xff]
      %v4303 = vld [vmem:[%s3020 + $0xf1] sm:$0xff]
      %v4304 = vld [vmem:[%s3020 + $0xf9] sm:$0xff]
      %v4305 = vld [vmem:[%s3020 + $0x109] sm:$0xff]
      %v4306 = vld [vmem:[%s3020 + $0x111] sm:$0xff]
      %v4307 = vld [vmem:[%s3020 + $0x121] sm:$0xff]
      %v4308 = vld [vmem:[%s3020 + $0x129] sm:$0xff]
      %v4309 = vld [vmem:[%s3020 + $0x139] sm:$0xff]
      %v4310 = vld [vmem:[%s3020 + $0x141] sm:$0xff]
      %v4311 = vld [vmem:[%s3020 + $0x151] sm:$0xff]
      %v4312 = vld [vmem:[%s3020 + $0x159] sm:$0xff]
      %v4313 = vld [vmem:[%s3020 + $0x169] sm:$0xff]
      %v4314 = vld [vmem:[%s3020 + $0x171] sm:$0xff]
      %v4315 = vpack.c.bf16 %v4284, %v4283
      %v4316 = vpack.c.bf16 %v4286, %v4285
      %v4317 = vpack.c.bf16 %v4288, %v4287
      %v4318 = vpack.c.bf16 %v4290, %v4289
      %v4319 = vpack.c.bf16 %v4292, %v4291
      %v4320 = vpack.c.bf16 %v4294, %v4293
      %v4321 = vpack.c.bf16 %v4296, %v4295
      %v4322 = vpack.c.bf16 %v4298, %v4297
      %v4323 = vpack.c.bf16 %v4300, %v4299
      %v4324 = vpack.c.bf16 %v4302, %v4301
      %v4325 = vpack.c.bf16 %v4304, %v4303
      %v4326 = vpack.c.bf16 %v4306, %v4305
      %v4327 = vpack.c.bf16 %v4308, %v4307
      %v4328 = vpack.c.bf16 %v4310, %v4309
      %v4329 = vpack.c.bf16 %v4312, %v4311
      %v4330 = vpack.c.bf16 %v4314, %v4313
      %s4331 = scalar_lea.vmem %s3, 256
      %v4332 = vld [vmem:[%s4331] sm:$0xf]
      %v4333 = vld [vmem:[%s4331 + $0x4] sm:$0xf]
      %v4334 = vld [vmem:[%s4331 + $0x8] sm:$0xf]
      %v4335 = vld [vmem:[%s4331 + $0xc] sm:$0xf]
      %v4336 = vld [vmem:[%s4331 + $0x10] sm:$0xf]
      %v4337 = vld [vmem:[%s4331 + $0x14] sm:$0xf]
      %v4338 = vld [vmem:[%s4331 + $0x18] sm:$0xf]
      %v4339 = vld [vmem:[%s4331 + $0x1c] sm:$0xf]
      %v4340 = vld [vmem:[%s4331 + $0x20] sm:$0xf]
      %v4341 = vld [vmem:[%s4331 + $0x24] sm:$0xf]
      %v4342 = vld [vmem:[%s4331 + $0x28] sm:$0xf]
      %v4343 = vld [vmem:[%s4331 + $0x2c] sm:$0xf]
      %v4344 = vld [vmem:[%s4331 + $0x30] sm:$0xf]
      %v4345 = vld [vmem:[%s4331 + $0x34] sm:$0xf]
      %v4346 = vld [vmem:[%s4331 + $0x38] sm:$0xf]
      %v4347 = vld [vmem:[%s4331 + $0x3c] sm:$0xf]
      %v4364 = vunpack.c.l.b16 %v4332
      %v4365 = vunpack.c.l.b16 %v4333
      %v4366 = vunpack.c.l.b16 %v4334
      %v4367 = vunpack.c.l.b16 %v4335
      %v4368 = vunpack.c.l.b16 %v4336
      %v4369 = vunpack.c.l.b16 %v4337
      %v4370 = vunpack.c.l.b16 %v4338
      %v4371 = vunpack.c.l.b16 %v4339
      %v4372 = vunpack.c.l.b16 %v4340
      %v4373 = vunpack.c.l.b16 %v4341
      %v4374 = vunpack.c.l.b16 %v4342
      %v4375 = vunpack.c.l.b16 %v4343
      %v4376 = vunpack.c.l.b16 %v4344
      %v4377 = vunpack.c.l.b16 %v4345
      %v4378 = vunpack.c.l.b16 %v4346
      %v4379 = vunpack.c.l.b16 %v4347
      %v4380 = vpack.c.b16 %v4365, %v4364
      %v4381 = vpack.c.b16 %v4367, %v4366
      %v4382 = vpack.c.b16 %v4369, %v4368
      %v4383 = vpack.c.b16 %v4371, %v4370
      %v4384 = vpack.c.b16 %v4373, %v4372
      %v4385 = vpack.c.b16 %v4375, %v4374
      %v4386 = vpack.c.b16 %v4377, %v4376
      %v4387 = vpack.c.b16 %v4379, %v4378
      %4396 = vmatprep.subr.bf16.mxu0 0
      %4397 = vmatpush1.bf16.msra.mxu0 %v4380
      %4398 = vmatprep.subr.bf16.mxu0 0
      %4399 = vmatpush1.bf16.msra.mxu0 %v4381
      %4400 = vmatprep.subr.bf16.mxu0 0
      %4401 = vmatpush1.bf16.msra.mxu0 %v4382
      %4402 = vmatprep.subr.bf16.mxu0 0
      %4403 = vmatpush1.bf16.msra.mxu0 %v4383
      %4404 = vmatprep.subr.bf16.mxu0 0
      %4405 = vmatpush1.bf16.msra.mxu0 %v4384
      %4406 = vmatprep.subr.bf16.mxu0 0
      %4407 = vmatpush1.bf16.msra.mxu0 %v4385
      %4408 = vmatprep.subr.bf16.mxu0 0
      %4409 = vmatpush1.bf16.msra.mxu0 %v4386
      %4410 = vmatprep.subr.bf16.mxu0 0
      %4411 = vmatpush1.bf16.msra.mxu0 %v4387
      %4412 = vmatprep.subr.bf16.mxu0 0
      %4413 = vmatpush1.bf16.msra.mxu0 0
      %4414 = vmatprep.subr.bf16.mxu0 0
      %4415 = vmatpush1.bf16.msra.mxu0 0
      %4416 = vmatprep.subr.bf16.mxu0 0
      %4417 = vmatpush1.bf16.msra.mxu0 0
      %4418 = vmatprep.subr.bf16.mxu0 0
      %4419 = vmatpush1.bf16.msra.mxu0 0
      %4420 = vmatprep.subr.bf16.mxu0 0
      %4421 = vmatpush1.bf16.msra.mxu0 0
      %4422 = vmatprep.subr.bf16.mxu0 0
      %4423 = vmatpush1.bf16.msra.mxu0 0
      %4424 = vmatprep.subr.bf16.mxu0 0
      %4425 = vmatpush1.bf16.msra.mxu0 0
      %4426 = vmatprep.subr.bf16.mxu0 0
      %4427 = vmatpush1.bf16.msra.mxu0 0
      %4428 = vmatprep.mubr.bf16.mxu0 0
      %4429 = vmatmul.mubr.bf16.gmra.mrb[0].mxu0 %v4315
      %v4430 = vpop.f32.mrb[0].mxu0
      %v4431 = vadd.f32 0.0, %v4430
      %v4432 = vpop.f32.mrb[0].mxu0
      %v4433 = vpop.f32.mrb[0].mxu0
      %v4434 = vadd.f32 0.0, %v4433
      %v4435 = vpop.f32.mrb[0].mxu0
      %4436 = vmatprep.mubr.bf16.mxu0 0
      %4437 = vmatmul.mubr.bf16.gmra.mrb[0].mxu0 %v4316
      %v4438 = vpop.f32.mrb[0].mxu0
      %v4439 = vadd.f32 0.0, %v4438
      %v4440 = vpop.f32.mrb[0].mxu0
      %v4441 = vpop.f32.mrb[0].mxu0
      %v4442 = vadd.f32 0.0, %v4441
      %v4443 = vpop.f32.mrb[0].mxu0
      %4444 = vmatprep.mubr.bf16.mxu0 0
      %4445 = vmatmul.mubr.bf16.gmra.mrb[0].mxu0 %v4317
      %v4446 = vpop.f32.mrb[0].mxu0
      %v4447 = vadd.f32 0.0, %v4446
      %v4448 = vpop.f32.mrb[0].mxu0
      %v4449 = vpop.f32.mrb[0].mxu0
      %v4450 = vadd.f32 0.0, %v4449
      %v4451 = vpop.f32.mrb[0].mxu0
      %4452 = vmatprep.mubr.bf16.mxu0 0
      %4453 = vmatmul.mubr.bf16.gmra.mrb[0].mxu0 %v4318
      %v4454 = vpop.f32.mrb[0].mxu0
      %v4455 = vadd.f32 0.0, %v4454
      %v4456 = vpop.f32.mrb[0].mxu0
      %v4457 = vpop.f32.mrb[0].mxu0
      %v4458 = vadd.f32 0.0, %v4457
      %v4459 = vpop.f32.mrb[0].mxu0
      %4460 = vmatprep.mubr.bf16.mxu0 0
      %4461 = vmatmul.mubr.bf16.gmra.mrb[0].mxu0 %v4319
      %v4462 = vpop.f32.mrb[0].mxu0
      %v4463 = vadd.f32 0.0, %v4462
      %v4464 = vpop.f32.mrb[0].mxu0
      %v4465 = vpop.f32.mrb[0].mxu0
      %v4466 = vadd.f32 0.0, %v4465
      %v4467 = vpop.f32.mrb[0].mxu0
      %4468 = vmatprep.mubr.bf16.mxu0 0
      %4469 = vmatmul.mubr.bf16.gmra.mrb[0].mxu0 %v4320
      %v4470 = vpop.f32.mrb[0].mxu0
      %v4471 = vadd.f32 0.0, %v4470
      %v4472 = vpop.f32.mrb[0].mxu0
      %v4473 = vpop.f32.mrb[0].mxu0
      %v4474 = vadd.f32 0.0, %v4473
      %v4475 = vpop.f32.mrb[0].mxu0
      %4476 = vmatprep.mubr.bf16.mxu0 0
      %4477 = vmatmul.mubr.bf16.gmra.mrb[0].mxu0 %v4321
      %v4478 = vpop.f32.mrb[0].mxu0
      %v4479 = vadd.f32 0.0, %v4478
      %v4480 = vpop.f32.mrb[0].mxu0
      %v4481 = vpop.f32.mrb[0].mxu0
      %v4482 = vadd.f32 0.0, %v4481
      %v4483 = vpop.f32.mrb[0].mxu0
      %4484 = vmatprep.mubr.bf16.mxu0 0
      %4485 = vmatmul.mubr.bf16.gmra.mrb[0].mxu0 %v4322
      %v4486 = vpop.f32.mrb[0].mxu0
      %v4487 = vadd.f32 0.0, %v4486
      %v4488 = vpop.f32.mrb[0].mxu0
      %v4489 = vpop.f32.mrb[0].mxu0
      %v4490 = vadd.f32 0.0, %v4489
      %v4491 = vpop.f32.mrb[0].mxu0
      %4492 = vmatprep.mubr.bf16.mxu0 0
      %4493 = vmatmul.mubr.bf16.gmra.mrb[0].mxu0 %v4323
      %v4494 = vpop.f32.mrb[0].mxu0
      %v4495 = vadd.f32 0.0, %v4494
      %v4496 = vpop.f32.mrb[0].mxu0
      %v4497 = vpop.f32.mrb[0].mxu0
      %v4498 = vadd.f32 0.0, %v4497
      %v4499 = vpop.f32.mrb[0].mxu0
      %4500 = vmatprep.mubr.bf16.mxu0 0
      %4501 = vmatmul.mubr.bf16.gmra.mrb[0].mxu0 %v4324
      %v4502 = vpop.f32.mrb[0].mxu0
      %v4503 = vadd.f32 0.0, %v4502
      %v4504 = vpop.f32.mrb[0].mxu0
      %v4505 = vpop.f32.mrb[0].mxu0
      %v4506 = vadd.f32 0.0, %v4505
      %v4507 = vpop.f32.mrb[0].mxu0
      %4508 = vmatprep.mubr.bf16.mxu0 0
      %4509 = vmatmul.mubr.bf16.gmra.mrb[0].mxu0 %v4325
      %v4510 = vpop.f32.mrb[0].mxu0
      %v4511 = vadd.f32 0.0, %v4510
      %v4512 = vpop.f32.mrb[0].mxu0
      %v4513 = vpop.f32.mrb[0].mxu0
      %v4514 = vadd.f32 0.0, %v4513
      %v4515 = vpop.f32.mrb[0].mxu0
      %4516 = vmatprep.mubr.bf16.mxu0 0
      %4517 = vmatmul.mubr.bf16.gmra.mrb[0].mxu0 %v4326
      %v4518 = vpop.f32.mrb[0].mxu0
      %v4519 = vadd.f32 0.0, %v4518
      %v4520 = vpop.f32.mrb[0].mxu0
      %v4521 = vpop.f32.mrb[0].mxu0
      %v4522 = vadd.f32 0.0, %v4521
      %v4523 = vpop.f32.mrb[0].mxu0
      %4524 = vmatprep.mubr.bf16.mxu0 0
      %4525 = vmatmul.mubr.bf16.gmra.mrb[0].mxu0 %v4327
      %v4526 = vpop.f32.mrb[0].mxu0
      %v4527 = vadd.f32 0.0, %v4526
      %v4528 = vpop.f32.mrb[0].mxu0
      %v4529 = vpop.f32.mrb[0].mxu0
      %v4530 = vadd.f32 0.0, %v4529
      %v4531 = vpop.f32.mrb[0].mxu0
      %4532 = vmatprep.mubr.bf16.mxu0 0
      %4533 = vmatmul.mubr.bf16.gmra.mrb[0].mxu0 %v4328
      %v4534 = vpop.f32.mrb[0].mxu0
      %v4535 = vadd.f32 0.0, %v4534
      %v4536 = vpop.f32.mrb[0].mxu0
      %v4537 = vpop.f32.mrb[0].mxu0
      %v4538 = vadd.f32 0.0, %v4537
      %v4539 = vpop.f32.mrb[0].mxu0
      %4540 = vmatprep.mubr.bf16.mxu0 0
      %4541 = vmatmul.mubr.bf16.gmra.mrb[0].mxu0 %v4329
      %v4542 = vpop.f32.mrb[0].mxu0
      %v4543 = vadd.f32 0.0, %v4542
      %v4544 = vpop.f32.mrb[0].mxu0
      %v4545 = vpop.f32.mrb[0].mxu0
      %v4546 = vadd.f32 0.0, %v4545
      %v4547 = vpop.f32.mrb[0].mxu0
      %4548 = vmatprep.mubr.bf16.mxu0 0
      %4549 = vmatmul.mubr.bf16.gmra.mrb[0].mxu0 %v4330
      %v4550 = vpop.f32.mrb[0].mxu0
      %v4551 = vadd.f32 0.0, %v4550
      %v4552 = vpop.f32.mrb[0].mxu0
      %v4553 = vpop.f32.mrb[0].mxu0
      %v4554 = vadd.f32 0.0, %v4553
      %v4555 = vpop.f32.mrb[0].mxu0
      %4556 = vdwg.mxu0
      %v4557 = vadd.f32 %v4251, %v4431
      %v4558 = vadd.f32 %v4252, %v4434
      %v4559 = vadd.f32 %v4253, %v4439
      %v4560 = vadd.f32 %v4254, %v4442
      %v4561 = vadd.f32 %v4255, %v4447
      %v4562 = vadd.f32 %v4256, %v4450
      %v4563 = vadd.f32 %v4257, %v4455
      %v4564 = vadd.f32 %v4258, %v4458
      %v4565 = vadd.f32 %v4259, %v4463
      %v4566 = vadd.f32 %v4260, %v4466
      %v4567 = vadd.f32 %v4261, %v4471
      %v4568 = vadd.f32 %v4262, %v4474
      %v4569 = vadd.f32 %v4263, %v4479
      %v4570 = vadd.f32 %v4264, %v4482
      %v4571 = vadd.f32 %v4265, %v4487
      %v4572 = vadd.f32 %v4266, %v4490
      %v4573 = vadd.f32 %v4267, %v4495
      %v4574 = vadd.f32 %v4268, %v4498
      %v4575 = vadd.f32 %v4269, %v4503
      %v4576 = vadd.f32 %v4270, %v4506
      %v4577 = vadd.f32 %v4271, %v4511
      %v4578 = vadd.f32 %v4272, %v4514
      %v4579 = vadd.f32 %v4273, %v4519
      %v4580 = vadd.f32 %v4274, %v4522
      %v4581 = vadd.f32 %v4275, %v4527
      %v4582 = vadd.f32 %v4276, %v4530
      %v4583 = vadd.f32 %v4277, %v4535
      %v4584 = vadd.f32 %v4278, %v4538
      %v4585 = vadd.f32 %v4279, %v4543
      %v4586 = vadd.f32 %v4280, %v4546
      %v4587 = vadd.f32 %v4281, %v4551
      %v4588 = vadd.f32 %v4282, %v4554
      %v4589 = vld [vmem:[%s3020 + $0x2] sm:$0xff]
      %v4590 = vld [vmem:[%s3020 + $0xa] sm:$0xff]
      %v4591 = vld [vmem:[%s3020 + $0x1a] sm:$0xff]
      %v4592 = vld [vmem:[%s3020 + $0x22] sm:$0xff]
      %v4593 = vld [vmem:[%s3020 + $0x32] sm:$0xff]
      %v4594 = vld [vmem:[%s3020 + $0x3a] sm:$0xff]
      %v4595 = vld [vmem:[%s3020 + $0x4a] sm:$0xff]
      %v4596 = vld [vmem:[%s3020 + $0x52] sm:$0xff]
      %v4597 = vld [vmem:[%s3020 + $0x62] sm:$0xff]
      %v4598 = vld [vmem:[%s3020 + $0x6a] sm:$0xff]
      %v4599 = vld [vmem:[%s3020 + $0x7a] sm:$0xff]
      %v4600 = vld [vmem:[%s3020 + $0x82] sm:$0xff]
      %v4601 = vld [vmem:[%s3020 + $0x92] sm:$0xff]
      %v4602 = vld [vmem:[%s3020 + $0x9a] sm:$0xff]
      %v4603 = vld [vmem:[%s3020 + $0xaa] sm:$0xff]
      %v4604 = vld [vmem:[%s3020 + $0xb2] sm:$0xff]
      %v4605 = vld [vmem:[%s3020 + $0xc2] sm:$0xff]
      %v4606 = vld [vmem:[%s3020 + $0xca] sm:$0xff]
      %v4607 = vld [vmem:[%s3020 + $0xda] sm:$0xff]
      %v4608 = vld [vmem:[%s3020 + $0xe2] sm:$0xff]
      %v4609 = vld [vmem:[%s3020 + $0xf2] sm:$0xff]
      %v4610 = vld [vmem:[%s3020 + $0xfa] sm:$0xff]
      %v4611 = vld [vmem:[%s3020 + $0x10a] sm:$0xff]
      %v4612 = vld [vmem:[%s3020 + $0x112] sm:$0xff]
      %v4613 = vld [vmem:[%s3020 + $0x122] sm:$0xff]
      %v4614 = vld [vmem:[%s3020 + $0x12a] sm:$0xff]
      %v4615 = vld [vmem:[%s3020 + $0x13a] sm:$0xff]
      %v4616 = vld [vmem:[%s3020 + $0x142] sm:$0xff]
      %v4617 = vld [vmem:[%s3020 + $0x152] sm:$0xff]
      %v4618 = vld [vmem:[%s3020 + $0x15a] sm:$0xff]
      %v4619 = vld [vmem:[%s3020 + $0x16a] sm:$0xff]
      %v4620 = vld [vmem:[%s3020 + $0x172] sm:$0xff]
      %v4621 = vpack.c.bf16 %v4590, %v4589
      %v4622 = vpack.c.bf16 %v4592, %v4591
      %v4623 = vpack.c.bf16 %v4594, %v4593
      %v4624 = vpack.c.bf16 %v4596, %v4595
      %v4625 = vpack.c.bf16 %v4598, %v4597
      %v4626 = vpack.c.bf16 %v4600, %v4599
      %v4627 = vpack.c.bf16 %v4602, %v4601
      %v4628 = vpack.c.bf16 %v4604, %v4603
      %v4629 = vpack.c.bf16 %v4606, %v4605
      %v4630 = vpack.c.bf16 %v4608, %v4607
      %v4631 = vpack.c.bf16 %v4610, %v4609
      %v4632 = vpack.c.bf16 %v4612, %v4611
      %v4633 = vpack.c.bf16 %v4614, %v4613
      %v4634 = vpack.c.bf16 %v4616, %v4615
      %v4635 = vpack.c.bf16 %v4618, %v4617
      %v4636 = vpack.c.bf16 %v4620, %v4619
      %s4637 = scalar_lea.vmem %s3, 320
      %v4638 = vld [vmem:[%s4637] sm:$0xf]
      %v4639 = vld [vmem:[%s4637 + $0x4] sm:$0xf]
      %v4640 = vld [vmem:[%s4637 + $0x8] sm:$0xf]
      %v4641 = vld [vmem:[%s4637 + $0xc] sm:$0xf]
      %v4642 = vld [vmem:[%s4637 + $0x10] sm:$0xf]
      %v4643 = vld [vmem:[%s4637 + $0x14] sm:$0xf]
      %v4644 = vld [vmem:[%s4637 + $0x18] sm:$0xf]
      %v4645 = vld [vmem:[%s4637 + $0x1c] sm:$0xf]
      %v4646 = vld [vmem:[%s4637 + $0x20] sm:$0xf]
      %v4647 = vld [vmem:[%s4637 + $0x24] sm:$0xf]
      %v4648 = vld [vmem:[%s4637 + $0x28] sm:$0xf]
      %v4649 = vld [vmem:[%s4637 + $0x2c] sm:$0xf]
      %v4650 = vld [vmem:[%s4637 + $0x30] sm:$0xf]
      %v4651 = vld [vmem:[%s4637 + $0x34] sm:$0xf]
      %v4652 = vld [vmem:[%s4637 + $0x38] sm:$0xf]
      %v4653 = vld [vmem:[%s4637 + $0x3c] sm:$0xf]
      %v4670 = vunpack.c.l.b16 %v4638
      %v4671 = vunpack.c.l.b16 %v4639
      %v4672 = vunpack.c.l.b16 %v4640
      %v4673 = vunpack.c.l.b16 %v4641
      %v4674 = vunpack.c.l.b16 %v4642
      %v4675 = vunpack.c.l.b16 %v4643
      %v4676 = vunpack.c.l.b16 %v4644
      %v4677 = vunpack.c.l.b16 %v4645
      %v4678 = vunpack.c.l.b16 %v4646
      %v4679 = vunpack.c.l.b16 %v4647
      %v4680 = vunpack.c.l.b16 %v4648
      %v4681 = vunpack.c.l.b16 %v4649
      %v4682 = vunpack.c.l.b16 %v4650
      %v4683 = vunpack.c.l.b16 %v4651
      %v4684 = vunpack.c.l.b16 %v4652
      %v4685 = vunpack.c.l.b16 %v4653
      %v4686 = vpack.c.b16 %v4671, %v4670
      %v4687 = vpack.c.b16 %v4673, %v4672
      %v4688 = vpack.c.b16 %v4675, %v4674
      %v4689 = vpack.c.b16 %v4677, %v4676
      %v4690 = vpack.c.b16 %v4679, %v4678
      %v4691 = vpack.c.b16 %v4681, %v4680
      %v4692 = vpack.c.b16 %v4683, %v4682
      %v4693 = vpack.c.b16 %v4685, %v4684
      %4702 = vmatprep.subr.bf16.mxu0 0
      %4703 = vmatpush1.bf16.msra.mxu0 %v4686
      %4704 = vmatprep.subr.bf16.mxu0 0
      %4705 = vmatpush1.bf16.msra.mxu0 %v4687
      %4706 = vmatprep.subr.bf16.mxu0 0
      %4707 = vmatpush1.bf16.msra.mxu0 %v4688
      %4708 = vmatprep.subr.bf16.mxu0 0
      %4709 = vmatpush1.bf16.msra.mxu0 %v4689
      %4710 = vmatprep.subr.bf16.mxu0 0
      %4711 = vmatpush1.bf16.msra.mxu0 %v4690
      %4712 = vmatprep.subr.bf16.mxu0 0
      %4713 = vmatpush1.bf16.msra.mxu0 %v4691
      %4714 = vmatprep.subr.bf16.mxu0 0
      %4715 = vmatpush1.bf16.msra.mxu0 %v4692
      %4716 = vmatprep.subr.bf16.mxu0 0
      %4717 = vmatpush1.bf16.msra.mxu0 %v4693
      %4718 = vmatprep.subr.bf16.mxu0 0
      %4719 = vmatpush1.bf16.msra.mxu0 0
      %4720 = vmatprep.subr.bf16.mxu0 0
      %4721 = vmatpush1.bf16.msra.mxu0 0
      %4722 = vmatprep.subr.bf16.mxu0 0
      %4723 = vmatpush1.bf16.msra.mxu0 0
      %4724 = vmatprep.subr.bf16.mxu0 0
      %4725 = vmatpush1.bf16.msra.mxu0 0
      %4726 = vmatprep.subr.bf16.mxu0 0
      %4727 = vmatpush1.bf16.msra.mxu0 0
      %4728 = vmatprep.subr.bf16.mxu0 0
      %4729 = vmatpush1.bf16.msra.mxu0 0
      %4730 = vmatprep.subr.bf16.mxu0 0
      %4731 = vmatpush1.bf16.msra.mxu0 0
      %4732 = vmatprep.subr.bf16.mxu0 0
      %4733 = vmatpush1.bf16.msra.mxu0 0
      %4734 = vmatprep.mubr.bf16.mxu0 0
      %4735 = vmatmul.mubr.bf16.gmra.mrb[0].mxu0 %v4621
      %v4736 = vpop.f32.mrb[0].mxu0
      %v4737 = vadd.f32 0.0, %v4736
      %v4738 = vpop.f32.mrb[0].mxu0
      %v4739 = vpop.f32.mrb[0].mxu0
      %v4740 = vadd.f32 0.0, %v4739
      %v4741 = vpop.f32.mrb[0].mxu0
      %4742 = vmatprep.mubr.bf16.mxu0 0
      %4743 = vmatmul.mubr.bf16.gmra.mrb[0].mxu0 %v4622
      %v4744 = vpop.f32.mrb[0].mxu0
      %v4745 = vadd.f32 0.0, %v4744
      %v4746 = vpop.f32.mrb[0].mxu0
      %v4747 = vpop.f32.mrb[0].mxu0
      %v4748 = vadd.f32 0.0, %v4747
      %v4749 = vpop.f32.mrb[0].mxu0
      %4750 = vmatprep.mubr.bf16.mxu0 0
      %4751 = vmatmul.mubr.bf16.gmra.mrb[0].mxu0 %v4623
      %v4752 = vpop.f32.mrb[0].mxu0
      %v4753 = vadd.f32 0.0, %v4752
      %v4754 = vpop.f32.mrb[0].mxu0
      %v4755 = vpop.f32.mrb[0].mxu0
      %v4756 = vadd.f32 0.0, %v4755
      %v4757 = vpop.f32.mrb[0].mxu0
      %4758 = vmatprep.mubr.bf16.mxu0 0
      %4759 = vmatmul.mubr.bf16.gmra.mrb[0].mxu0 %v4624
      %v4760 = vpop.f32.mrb[0].mxu0
      %v4761 = vadd.f32 0.0, %v4760
      %v4762 = vpop.f32.mrb[0].mxu0
      %v4763 = vpop.f32.mrb[0].mxu0
      %v4764 = vadd.f32 0.0, %v4763
      %v4765 = vpop.f32.mrb[0].mxu0
      %4766 = vmatprep.mubr.bf16.mxu0 0
      %4767 = vmatmul.mubr.bf16.gmra.mrb[0].mxu0 %v4625
      %v4768 = vpop.f32.mrb[0].mxu0
      %v4769 = vadd.f32 0.0, %v4768
      %v4770 = vpop.f32.mrb[0].mxu0
      %v4771 = vpop.f32.mrb[0].mxu0
      %v4772 = vadd.f32 0.0, %v4771
      %v4773 = vpop.f32.mrb[0].mxu0
      %4774 = vmatprep.mubr.bf16.mxu0 0
      %4775 = vmatmul.mubr.bf16.gmra.mrb[0].mxu0 %v4626
      %v4776 = vpop.f32.mrb[0].mxu0
      %v4777 = vadd.f32 0.0, %v4776
      %v4778 = vpop.f32.mrb[0].mxu0
      %v4779 = vpop.f32.mrb[0].mxu0
      %v4780 = vadd.f32 0.0, %v4779
      %v4781 = vpop.f32.mrb[0].mxu0
      %4782 = vmatprep.mubr.bf16.mxu0 0
      %4783 = vmatmul.mubr.bf16.gmra.mrb[0].mxu0 %v4627
      %v4784 = vpop.f32.mrb[0].mxu0
      %v4785 = vadd.f32 0.0, %v4784
      %v4786 = vpop.f32.mrb[0].mxu0
      %v4787 = vpop.f32.mrb[0].mxu0
      %v4788 = vadd.f32 0.0, %v4787
      %v4789 = vpop.f32.mrb[0].mxu0
      %4790 = vmatprep.mubr.bf16.mxu0 0
      %4791 = vmatmul.mubr.bf16.gmra.mrb[0].mxu0 %v4628
      %v4792 = vpop.f32.mrb[0].mxu0
      %v4793 = vadd.f32 0.0, %v4792
      %v4794 = vpop.f32.mrb[0].mxu0
      %v4795 = vpop.f32.mrb[0].mxu0
      %v4796 = vadd.f32 0.0, %v4795
      %v4797 = vpop.f32.mrb[0].mxu0
      %4798 = vmatprep.mubr.bf16.mxu0 0
      %4799 = vmatmul.mubr.bf16.gmra.mrb[0].mxu0 %v4629
      %v4800 = vpop.f32.mrb[0].mxu0
      %v4801 = vadd.f32 0.0, %v4800
      %v4802 = vpop.f32.mrb[0].mxu0
      %v4803 = vpop.f32.mrb[0].mxu0
      %v4804 = vadd.f32 0.0, %v4803
      %v4805 = vpop.f32.mrb[0].mxu0
      %4806 = vmatprep.mubr.bf16.mxu0 0
      %4807 = vmatmul.mubr.bf16.gmra.mrb[0].mxu0 %v4630
      %v4808 = vpop.f32.mrb[0].mxu0
      %v4809 = vadd.f32 0.0, %v4808
      %v4810 = vpop.f32.mrb[0].mxu0
      %v4811 = vpop.f32.mrb[0].mxu0
      %v4812 = vadd.f32 0.0, %v4811
      %v4813 = vpop.f32.mrb[0].mxu0
      %4814 = vmatprep.mubr.bf16.mxu0 0
      %4815 = vmatmul.mubr.bf16.gmra.mrb[0].mxu0 %v4631
      %v4816 = vpop.f32.mrb[0].mxu0
      %v4817 = vadd.f32 0.0, %v4816
      %v4818 = vpop.f32.mrb[0].mxu0
      %v4819 = vpop.f32.mrb[0].mxu0
      %v4820 = vadd.f32 0.0, %v4819
      %v4821 = vpop.f32.mrb[0].mxu0
      %4822 = vmatprep.mubr.bf16.mxu0 0
      %4823 = vmatmul.mubr.bf16.gmra.mrb[0].mxu0 %v4632
      %v4824 = vpop.f32.mrb[0].mxu0
      %v4825 = vadd.f32 0.0, %v4824
      %v4826 = vpop.f32.mrb[0].mxu0
      %v4827 = vpop.f32.mrb[0].mxu0
      %v4828 = vadd.f32 0.0, %v4827
      %v4829 = vpop.f32.mrb[0].mxu0
      %4830 = vmatprep.mubr.bf16.mxu0 0
      %4831 = vmatmul.mubr.bf16.gmra.mrb[0].mxu0 %v4633
      %v4832 = vpop.f32.mrb[0].mxu0
      %v4833 = vadd.f32 0.0, %v4832
      %v4834 = vpop.f32.mrb[0].mxu0
      %v4835 = vpop.f32.mrb[0].mxu0
      %v4836 = vadd.f32 0.0, %v4835
      %v4837 = vpop.f32.mrb[0].mxu0
      %4838 = vmatprep.mubr.bf16.mxu0 0
      %4839 = vmatmul.mubr.bf16.gmra.mrb[0].mxu0 %v4634
      %v4840 = vpop.f32.mrb[0].mxu0
      %v4841 = vadd.f32 0.0, %v4840
      %v4842 = vpop.f32.mrb[0].mxu0
      %v4843 = vpop.f32.mrb[0].mxu0
      %v4844 = vadd.f32 0.0, %v4843
      %v4845 = vpop.f32.mrb[0].mxu0
      %4846 = vmatprep.mubr.bf16.mxu0 0
      %4847 = vmatmul.mubr.bf16.gmra.mrb[0].mxu0 %v4635
      %v4848 = vpop.f32.mrb[0].mxu0
      %v4849 = vadd.f32 0.0, %v4848
      %v4850 = vpop.f32.mrb[0].mxu0
      %v4851 = vpop.f32.mrb[0].mxu0
      %v4852 = vadd.f32 0.0, %v4851
      %v4853 = vpop.f32.mrb[0].mxu0
      %4854 = vmatprep.mubr.bf16.mxu0 0
      %4855 = vmatmul.mubr.bf16.gmra.mrb[0].mxu0 %v4636
      %v4856 = vpop.f32.mrb[0].mxu0
      %v4857 = vadd.f32 0.0, %v4856
      %v4858 = vpop.f32.mrb[0].mxu0
      %v4859 = vpop.f32.mrb[0].mxu0
      %v4860 = vadd.f32 0.0, %v4859
      %v4861 = vpop.f32.mrb[0].mxu0
      %4862 = vdwg.mxu0
      %v4863 = vadd.f32 %v4557, %v4737
      %v4864 = vadd.f32 %v4558, %v4740
      %v4865 = vadd.f32 %v4559, %v4745
      %v4866 = vadd.f32 %v4560, %v4748
      %v4867 = vadd.f32 %v4561, %v4753
      %v4868 = vadd.f32 %v4562, %v4756
      %v4869 = vadd.f32 %v4563, %v4761
      %v4870 = vadd.f32 %v4564, %v4764
      %v4871 = vadd.f32 %v4565, %v4769
      %v4872 = vadd.f32 %v4566, %v4772
      %v4873 = vadd.f32 %v4567, %v4777
      %v4874 = vadd.f32 %v4568, %v4780
      %v4875 = vadd.f32 %v4569, %v4785
      %v4876 = vadd.f32 %v4570, %v4788
      %v4877 = vadd.f32 %v4571, %v4793
      %v4878 = vadd.f32 %v4572, %v4796
      %v4879 = vadd.f32 %v4573, %v4801
      %v4880 = vadd.f32 %v4574, %v4804
      %v4881 = vadd.f32 %v4575, %v4809
      %v4882 = vadd.f32 %v4576, %v4812
      %v4883 = vadd.f32 %v4577, %v4817
      %v4884 = vadd.f32 %v4578, %v4820
      %v4885 = vadd.f32 %v4579, %v4825
      %v4886 = vadd.f32 %v4580, %v4828
      %v4887 = vadd.f32 %v4581, %v4833
      %v4888 = vadd.f32 %v4582, %v4836
      %v4889 = vadd.f32 %v4583, %v4841
      %v4890 = vadd.f32 %v4584, %v4844
      %v4891 = vadd.f32 %v4585, %v4849
      %v4892 = vadd.f32 %v4586, %v4852
      %v4893 = vadd.f32 %v4587, %v4857
      %v4894 = vadd.f32 %v4588, %v4860
      %s4895 = scalar_lea.vmem [#allocation2], 48
      %v4896 = vld [vmem:[%s4895] sm:$0xff]
      %v4897 = vld [vmem:[%s4895 + $0x8] sm:$0xff]
      %v4898 = vld [vmem:[%s4895 + $0x18] sm:$0xff]
      %v4899 = vld [vmem:[%s4895 + $0x20] sm:$0xff]
      %v4900 = vld [vmem:[%s4895 + $0x30] sm:$0xff]
      %v4901 = vld [vmem:[%s4895 + $0x38] sm:$0xff]
      %v4902 = vld [vmem:[%s4895 + $0x48] sm:$0xff]
      %v4903 = vld [vmem:[%s4895 + $0x50] sm:$0xff]
      %v4904 = vld [vmem:[%s4895 + $0x60] sm:$0xff]
      %v4905 = vld [vmem:[%s4895 + $0x68] sm:$0xff]
      %v4906 = vld [vmem:[%s4895 + $0x78] sm:$0xff]
      %v4907 = vld [vmem:[%s4895 + $0x80] sm:$0xff]
      %v4908 = vld [vmem:[%s4895 + $0x90] sm:$0xff]
      %v4909 = vld [vmem:[%s4895 + $0x98] sm:$0xff]
      %v4910 = vld [vmem:[%s4895 + $0xa8] sm:$0xff]
      %v4911 = vld [vmem:[%s4895 + $0xb0] sm:$0xff]
      %v4912 = vld [vmem:[%s4895 + $0xc0] sm:$0xff]
      %v4913 = vld [vmem:[%s4895 + $0xc8] sm:$0xff]
      %v4914 = vld [vmem:[%s4895 + $0xd8] sm:$0xff]
      %v4915 = vld [vmem:[%s4895 + $0xe0] sm:$0xff]
      %v4916 = vld [vmem:[%s4895 + $0xf0] sm:$0xff]
      %v4917 = vld [vmem:[%s4895 + $0xf8] sm:$0xff]
      %v4918 = vld [vmem:[%s4895 + $0x108] sm:$0xff]
      %v4919 = vld [vmem:[%s4895 + $0x110] sm:$0xff]
      %v4920 = vld [vmem:[%s4895 + $0x120] sm:$0xff]
      %v4921 = vld [vmem:[%s4895 + $0x128] sm:$0xff]
      %v4922 = vld [vmem:[%s4895 + $0x138] sm:$0xff]
      %v4923 = vld [vmem:[%s4895 + $0x140] sm:$0xff]
      %v4924 = vld [vmem:[%s4895 + $0x150] sm:$0xff]
      %v4925 = vld [vmem:[%s4895 + $0x158] sm:$0xff]
      %v4926 = vld [vmem:[%s4895 + $0x168] sm:$0xff]
      %v4927 = vld [vmem:[%s4895 + $0x170] sm:$0xff]
      %v4928 = vpack.c.bf16 %v4897, %v4896
      %v4929 = vpack.c.bf16 %v4899, %v4898
      %v4930 = vpack.c.bf16 %v4901, %v4900
      %v4931 = vpack.c.bf16 %v4903, %v4902
      %v4932 = vpack.c.bf16 %v4905, %v4904
      %v4933 = vpack.c.bf16 %v4907, %v4906
      %v4934 = vpack.c.bf16 %v4909, %v4908
      %v4935 = vpack.c.bf16 %v4911, %v4910
      %v4936 = vpack.c.bf16 %v4913, %v4912
      %v4937 = vpack.c.bf16 %v4915, %v4914
      %v4938 = vpack.c.bf16 %v4917, %v4916
      %v4939 = vpack.c.bf16 %v4919, %v4918
      %v4940 = vpack.c.bf16 %v4921, %v4920
      %v4941 = vpack.c.bf16 %v4923, %v4922
      %v4942 = vpack.c.bf16 %v4925, %v4924
      %v4943 = vpack.c.bf16 %v4927, %v4926
      %s4944 = scalar_lea.vmem %s3, 384
      %v4945 = vld [vmem:[%s4944] sm:$0xf]
      %v4946 = vld [vmem:[%s4944 + $0x4] sm:$0xf]
      %v4947 = vld [vmem:[%s4944 + $0x8] sm:$0xf]
      %v4948 = vld [vmem:[%s4944 + $0xc] sm:$0xf]
      %v4949 = vld [vmem:[%s4944 + $0x10] sm:$0xf]
      %v4950 = vld [vmem:[%s4944 + $0x14] sm:$0xf]
      %v4951 = vld [vmem:[%s4944 + $0x18] sm:$0xf]
      %v4952 = vld [vmem:[%s4944 + $0x1c] sm:$0xf]
      %v4953 = vld [vmem:[%s4944 + $0x20] sm:$0xf]
      %v4954 = vld [vmem:[%s4944 + $0x24] sm:$0xf]
      %v4955 = vld [vmem:[%s4944 + $0x28] sm:$0xf]
      %v4956 = vld [vmem:[%s4944 + $0x2c] sm:$0xf]
      %v4957 = vld [vmem:[%s4944 + $0x30] sm:$0xf]
      %v4958 = vld [vmem:[%s4944 + $0x34] sm:$0xf]
      %v4959 = vld [vmem:[%s4944 + $0x38] sm:$0xf]
      %v4960 = vld [vmem:[%s4944 + $0x3c] sm:$0xf]
      %v4977 = vunpack.c.l.b16 %v4945
      %v4978 = vunpack.c.l.b16 %v4946
      %v4979 = vunpack.c.l.b16 %v4947
      %v4980 = vunpack.c.l.b16 %v4948
      %v4981 = vunpack.c.l.b16 %v4949
      %v4982 = vunpack.c.l.b16 %v4950
      %v4983 = vunpack.c.l.b16 %v4951
      %v4984 = vunpack.c.l.b16 %v4952
      %v4985 = vunpack.c.l.b16 %v4953
      %v4986 = vunpack.c.l.b16 %v4954
      %v4987 = vunpack.c.l.b16 %v4955
      %v4988 = vunpack.c.l.b16 %v4956
      %v4989 = vunpack.c.l.b16 %v4957
      %v4990 = vunpack.c.l.b16 %v4958
      %v4991 = vunpack.c.l.b16 %v4959
      %v4992 = vunpack.c.l.b16 %v4960
      %v4993 = vpack.c.b16 %v4978, %v4977
      %v4994 = vpack.c.b16 %v4980, %v4979
      %v4995 = vpack.c.b16 %v4982, %v4981
      %v4996 = vpack.c.b16 %v4984, %v4983
      %v4997 = vpack.c.b16 %v4986, %v4985
      %v4998 = vpack.c.b16 %v4988, %v4987
      %v4999 = vpack.c.b16 %v4990, %v4989
      %v5000 = vpack.c.b16 %v4992, %v4991
      %5009 = vmatprep.subr.bf16.mxu0 0
      %5010 = vmatpush1.bf16.msra.mxu0 %v4993
      %5011 = vmatprep.subr.bf16.mxu0 0
      %5012 = vmatpush1.bf16.msra.mxu0 %v4994
      %5013 = vmatprep.subr.bf16.mxu0 0
      %5014 = vmatpush1.bf16.msra.mxu0 %v4995
      %5015 = vmatprep.subr.bf16.mxu0 0
      %5016 = vmatpush1.bf16.msra.mxu0 %v4996
      %5017 = vmatprep.subr.bf16.mxu0 0
      %5018 = vmatpush1.bf16.msra.mxu0 %v4997
      %5019 = vmatprep.subr.bf16.mxu0 0
      %5020 = vmatpush1.bf16.msra.mxu0 %v4998
      %5021 = vmatprep.subr.bf16.mxu0 0
      %5022 = vmatpush1.bf16.msra.mxu0 %v4999
      %5023 = vmatprep.subr.bf16.mxu0 0
      %5024 = vmatpush1.bf16.msra.mxu0 %v5000
      %5025 = vmatprep.subr.bf16.mxu0 0
      %5026 = vmatpush1.bf16.msra.mxu0 0
      %5027 = vmatprep.subr.bf16.mxu0 0
      %5028 = vmatpush1.bf16.msra.mxu0 0
      %5029 = vmatprep.subr.bf16.mxu0 0
      %5030 = vmatpush1.bf16.msra.mxu0 0
      %5031 = vmatprep.subr.bf16.mxu0 0
      %5032 = vmatpush1.bf16.msra.mxu0 0
      %5033 = vmatprep.subr.bf16.mxu0 0
      %5034 = vmatpush1.bf16.msra.mxu0 0
      %5035 = vmatprep.subr.bf16.mxu0 0
      %5036 = vmatpush1.bf16.msra.mxu0 0
      %5037 = vmatprep.subr.bf16.mxu0 0
      %5038 = vmatpush1.bf16.msra.mxu0 0
      %5039 = vmatprep.subr.bf16.mxu0 0
      %5040 = vmatpush1.bf16.msra.mxu0 0
      %5041 = vmatprep.mubr.bf16.mxu0 0
      %5042 = vmatmul.mubr.bf16.gmra.mrb[0].mxu0 %v4928
      %v5043 = vpop.f32.mrb[0].mxu0
      %v5044 = vadd.f32 0.0, %v5043
      %v5045 = vpop.f32.mrb[0].mxu0
      %v5046 = vpop.f32.mrb[0].mxu0
      %v5047 = vadd.f32 0.0, %v5046
      %v5048 = vpop.f32.mrb[0].mxu0
      %5049 = vmatprep.mubr.bf16.mxu0 0
      %5050 = vmatmul.mubr.bf16.gmra.mrb[0].mxu0 %v4929
      %v5051 = vpop.f32.mrb[0].mxu0
      %v5052 = vadd.f32 0.0, %v5051
      %v5053 = vpop.f32.mrb[0].mxu0
      %v5054 = vpop.f32.mrb[0].mxu0
      %v5055 = vadd.f32 0.0, %v5054
      %v5056 = vpop.f32.mrb[0].mxu0
      %5057 = vmatprep.mubr.bf16.mxu0 0
      %5058 = vmatmul.mubr.bf16.gmra.mrb[0].mxu0 %v4930
      %v5059 = vpop.f32.mrb[0].mxu0
      %v5060 = vadd.f32 0.0, %v5059
      %v5061 = vpop.f32.mrb[0].mxu0
      %v5062 = vpop.f32.mrb[0].mxu0
      %v5063 = vadd.f32 0.0, %v5062
      %v5064 = vpop.f32.mrb[0].mxu0
      %5065 = vmatprep.mubr.bf16.mxu0 0
      %5066 = vmatmul.mubr.bf16.gmra.mrb[0].mxu0 %v4931
      %v5067 = vpop.f32.mrb[0].mxu0
      %v5068 = vadd.f32 0.0, %v5067
      %v5069 = vpop.f32.mrb[0].mxu0
      %v5070 = vpop.f32.mrb[0].mxu0
      %v5071 = vadd.f32 0.0, %v5070
      %v5072 = vpop.f32.mrb[0].mxu0
      %5073 = vmatprep.mubr.bf16.mxu0 0
      %5074 = vmatmul.mubr.bf16.gmra.mrb[0].mxu0 %v4932
      %v5075 = vpop.f32.mrb[0].mxu0
      %v5076 = vadd.f32 0.0, %v5075
      %v5077 = vpop.f32.mrb[0].mxu0
      %v5078 = vpop.f32.mrb[0].mxu0
      %v5079 = vadd.f32 0.0, %v5078
      %v5080 = vpop.f32.mrb[0].mxu0
      %5081 = vmatprep.mubr.bf16.mxu0 0
      %5082 = vmatmul.mubr.bf16.gmra.mrb[0].mxu0 %v4933
      %v5083 = vpop.f32.mrb[0].mxu0
      %v5084 = vadd.f32 0.0, %v5083
      %v5085 = vpop.f32.mrb[0].mxu0
      %v5086 = vpop.f32.mrb[0].mxu0
      %v5087 = vadd.f32 0.0, %v5086
      %v5088 = vpop.f32.mrb[0].mxu0
      %5089 = vmatprep.mubr.bf16.mxu0 0
      %5090 = vmatmul.mubr.bf16.gmra.mrb[0].mxu0 %v4934
      %v5091 = vpop.f32.mrb[0].mxu0
      %v5092 = vadd.f32 0.0, %v5091
      %v5093 = vpop.f32.mrb[0].mxu0
      %v5094 = vpop.f32.mrb[0].mxu0
      %v5095 = vadd.f32 0.0, %v5094
      %v5096 = vpop.f32.mrb[0].mxu0
      %5097 = vmatprep.mubr.bf16.mxu0 0
      %5098 = vmatmul.mubr.bf16.gmra.mrb[0].mxu0 %v4935
      %v5099 = vpop.f32.mrb[0].mxu0
      %v5100 = vadd.f32 0.0, %v5099
      %v5101 = vpop.f32.mrb[0].mxu0
      %v5102 = vpop.f32.mrb[0].mxu0
      %v5103 = vadd.f32 0.0, %v5102
      %v5104 = vpop.f32.mrb[0].mxu0
      %5105 = vmatprep.mubr.bf16.mxu0 0
      %5106 = vmatmul.mubr.bf16.gmra.mrb[0].mxu0 %v4936
      %v5107 = vpop.f32.mrb[0].mxu0
      %v5108 = vadd.f32 0.0, %v5107
      %v5109 = vpop.f32.mrb[0].mxu0
      %v5110 = vpop.f32.mrb[0].mxu0
      %v5111 = vadd.f32 0.0, %v5110
      %v5112 = vpop.f32.mrb[0].mxu0
      %5113 = vmatprep.mubr.bf16.mxu0 0
      %5114 = vmatmul.mubr.bf16.gmra.mrb[0].mxu0 %v4937
      %v5115 = vpop.f32.mrb[0].mxu0
      %v5116 = vadd.f32 0.0, %v5115
      %v5117 = vpop.f32.mrb[0].mxu0
      %v5118 = vpop.f32.mrb[0].mxu0
      %v5119 = vadd.f32 0.0, %v5118
      %v5120 = vpop.f32.mrb[0].mxu0
      %5121 = vmatprep.mubr.bf16.mxu0 0
      %5122 = vmatmul.mubr.bf16.gmra.mrb[0].mxu0 %v4938
      %v5123 = vpop.f32.mrb[0].mxu0
      %v5124 = vadd.f32 0.0, %v5123
      %v5125 = vpop.f32.mrb[0].mxu0
      %v5126 = vpop.f32.mrb[0].mxu0
      %v5127 = vadd.f32 0.0, %v5126
      %v5128 = vpop.f32.mrb[0].mxu0
      %5129 = vmatprep.mubr.bf16.mxu0 0
      %5130 = vmatmul.mubr.bf16.gmra.mrb[0].mxu0 %v4939
      %v5131 = vpop.f32.mrb[0].mxu0
      %v5132 = vadd.f32 0.0, %v5131
      %v5133 = vpop.f32.mrb[0].mxu0
      %v5134 = vpop.f32.mrb[0].mxu0
      %v5135 = vadd.f32 0.0, %v5134
      %v5136 = vpop.f32.mrb[0].mxu0
      %5137 = vmatprep.mubr.bf16.mxu0 0
      %5138 = vmatmul.mubr.bf16.gmra.mrb[0].mxu0 %v4940
      %v5139 = vpop.f32.mrb[0].mxu0
      %v5140 = vadd.f32 0.0, %v5139
      %v5141 = vpop.f32.mrb[0].mxu0
      %v5142 = vpop.f32.mrb[0].mxu0
      %v5143 = vadd.f32 0.0, %v5142
      %v5144 = vpop.f32.mrb[0].mxu0
      %5145 = vmatprep.mubr.bf16.mxu0 0
      %5146 = vmatmul.mubr.bf16.gmra.mrb[0].mxu0 %v4941
      %v5147 = vpop.f32.mrb[0].mxu0
      %v5148 = vadd.f32 0.0, %v5147
      %v5149 = vpop.f32.mrb[0].mxu0
      %v5150 = vpop.f32.mrb[0].mxu0
      %v5151 = vadd.f32 0.0, %v5150
      %v5152 = vpop.f32.mrb[0].mxu0
      %5153 = vmatprep.mubr.bf16.mxu0 0
      %5154 = vmatmul.mubr.bf16.gmra.mrb[0].mxu0 %v4942
      %v5155 = vpop.f32.mrb[0].mxu0
      %v5156 = vadd.f32 0.0, %v5155
      %v5157 = vpop.f32.mrb[0].mxu0
      %v5158 = vpop.f32.mrb[0].mxu0
      %v5159 = vadd.f32 0.0, %v5158
      %v5160 = vpop.f32.mrb[0].mxu0
      %5161 = vmatprep.mubr.bf16.mxu0 0
      %5162 = vmatmul.mubr.bf16.gmra.mrb[0].mxu0 %v4943
      %v5163 = vpop.f32.mrb[0].mxu0
      %v5164 = vadd.f32 0.0, %v5163
      %v5165 = vpop.f32.mrb[0].mxu0
      %v5166 = vpop.f32.mrb[0].mxu0
      %v5167 = vadd.f32 0.0, %v5166
      %v5168 = vpop.f32.mrb[0].mxu0
      %5169 = vdwg.mxu0
      %v5170 = vadd.f32 %v4863, %v5044
      %v5171 = vadd.f32 %v4864, %v5047
      %v5172 = vadd.f32 %v4865, %v5052
      %v5173 = vadd.f32 %v4866, %v5055
      %v5174 = vadd.f32 %v4867, %v5060
      %v5175 = vadd.f32 %v4868, %v5063
      %v5176 = vadd.f32 %v4869, %v5068
      %v5177 = vadd.f32 %v4870, %v5071
      %v5178 = vadd.f32 %v4871, %v5076
      %v5179 = vadd.f32 %v4872, %v5079
      %v5180 = vadd.f32 %v4873, %v5084
      %v5181 = vadd.f32 %v4874, %v5087
      %v5182 = vadd.f32 %v4875, %v5092
      %v5183 = vadd.f32 %v4876, %v5095
      %v5184 = vadd.f32 %v4877, %v5100
      %v5185 = vadd.f32 %v4878, %v5103
      %v5186 = vadd.f32 %v4879, %v5108
      %v5187 = vadd.f32 %v4880, %v5111
      %v5188 = vadd.f32 %v4881, %v5116
      %v5189 = vadd.f32 %v4882, %v5119
      %v5190 = vadd.f32 %v4883, %v5124
      %v5191 = vadd.f32 %v4884, %v5127
      %v5192 = vadd.f32 %v4885, %v5132
      %v5193 = vadd.f32 %v4886, %v5135
      %v5194 = vadd.f32 %v4887, %v5140
      %v5195 = vadd.f32 %v4888, %v5143
      %v5196 = vadd.f32 %v4889, %v5148
      %v5197 = vadd.f32 %v4890, %v5151
      %v5198 = vadd.f32 %v4891, %v5156
      %v5199 = vadd.f32 %v4892, %v5159
      %v5200 = vadd.f32 %v4893, %v5164
      %v5201 = vadd.f32 %v4894, %v5167
      %v5202 = vld [vmem:[%s4895 + $0x1] sm:$0xff]
      %v5203 = vld [vmem:[%s4895 + $0x9] sm:$0xff]
      %v5204 = vld [vmem:[%s4895 + $0x19] sm:$0xff]
      %v5205 = vld [vmem:[%s4895 + $0x21] sm:$0xff]
      %v5206 = vld [vmem:[%s4895 + $0x31] sm:$0xff]
      %v5207 = vld [vmem:[%s4895 + $0x39] sm:$0xff]
      %v5208 = vld [vmem:[%s4895 + $0x49] sm:$0xff]
      %v5209 = vld [vmem:[%s4895 + $0x51] sm:$0xff]
      %v5210 = vld [vmem:[%s4895 + $0x61] sm:$0xff]
      %v5211 = vld [vmem:[%s4895 + $0x69] sm:$0xff]
      %v5212 = vld [vmem:[%s4895 + $0x79] sm:$0xff]
      %v5213 = vld [vmem:[%s4895 + $0x81] sm:$0xff]
      %v5214 = vld [vmem:[%s4895 + $0x91] sm:$0xff]
      %v5215 = vld [vmem:[%s4895 + $0x99] sm:$0xff]
      %v5216 = vld [vmem:[%s4895 + $0xa9] sm:$0xff]
      %v5217 = vld [vmem:[%s4895 + $0xb1] sm:$0xff]
      %v5218 = vld [vmem:[%s4895 + $0xc1] sm:$0xff]
      %v5219 = vld [vmem:[%s4895 + $0xc9] sm:$0xff]
      %v5220 = vld [vmem:[%s4895 + $0xd9] sm:$0xff]
      %v5221 = vld [vmem:[%s4895 + $0xe1] sm:$0xff]
      %v5222 = vld [vmem:[%s4895 + $0xf1] sm:$0xff]
      %v5223 = vld [vmem:[%s4895 + $0xf9] sm:$0xff]
      %v5224 = vld [vmem:[%s4895 + $0x109] sm:$0xff]
      %v5225 = vld [vmem:[%s4895 + $0x111] sm:$0xff]
      %v5226 = vld [vmem:[%s4895 + $0x121] sm:$0xff]
      %v5227 = vld [vmem:[%s4895 + $0x129] sm:$0xff]
      %v5228 = vld [vmem:[%s4895 + $0x139] sm:$0xff]
      %v5229 = vld [vmem:[%s4895 + $0x141] sm:$0xff]
      %v5230 = vld [vmem:[%s4895 + $0x151] sm:$0xff]
      %v5231 = vld [vmem:[%s4895 + $0x159] sm:$0xff]
      %v5232 = vld [vmem:[%s4895 + $0x169] sm:$0xff]
      %v5233 = vld [vmem:[%s4895 + $0x171] sm:$0xff]
      %v5234 = vpack.c.bf16 %v5203, %v5202
      %v5235 = vpack.c.bf16 %v5205, %v5204
      %v5236 = vpack.c.bf16 %v5207, %v5206
      %v5237 = vpack.c.bf16 %v5209, %v5208
      %v5238 = vpack.c.bf16 %v5211, %v5210
      %v5239 = vpack.c.bf16 %v5213, %v5212
      %v5240 = vpack.c.bf16 %v5215, %v5214
      %v5241 = vpack.c.bf16 %v5217, %v5216
      %v5242 = vpack.c.bf16 %v5219, %v5218
      %v5243 = vpack.c.bf16 %v5221, %v5220
      %v5244 = vpack.c.bf16 %v5223, %v5222
      %v5245 = vpack.c.bf16 %v5225, %v5224
      %v5246 = vpack.c.bf16 %v5227, %v5226
      %v5247 = vpack.c.bf16 %v5229, %v5228
      %v5248 = vpack.c.bf16 %v5231, %v5230
      %v5249 = vpack.c.bf16 %v5233, %v5232
      %s5250 = scalar_lea.vmem %s3, 448
      %v5251 = vld [vmem:[%s5250] sm:$0xf]
      %v5252 = vld [vmem:[%s5250 + $0x4] sm:$0xf]
      %v5253 = vld [vmem:[%s5250 + $0x8] sm:$0xf]
      %v5254 = vld [vmem:[%s5250 + $0xc] sm:$0xf]
      %v5255 = vld [vmem:[%s5250 + $0x10] sm:$0xf]
      %v5256 = vld [vmem:[%s5250 + $0x14] sm:$0xf]
      %v5257 = vld [vmem:[%s5250 + $0x18] sm:$0xf]
      %v5258 = vld [vmem:[%s5250 + $0x1c] sm:$0xf]
      %v5259 = vld [vmem:[%s5250 + $0x20] sm:$0xf]
      %v5260 = vld [vmem:[%s5250 + $0x24] sm:$0xf]
      %v5261 = vld [vmem:[%s5250 + $0x28] sm:$0xf]
      %v5262 = vld [vmem:[%s5250 + $0x2c] sm:$0xf]
      %v5263 = vld [vmem:[%s5250 + $0x30] sm:$0xf]
      %v5264 = vld [vmem:[%s5250 + $0x34] sm:$0xf]
      %v5265 = vld [vmem:[%s5250 + $0x38] sm:$0xf]
      %v5266 = vld [vmem:[%s5250 + $0x3c] sm:$0xf]
      %v5283 = vunpack.c.l.b16 %v5251
      %v5284 = vunpack.c.l.b16 %v5252
      %v5285 = vunpack.c.l.b16 %v5253
      %v5286 = vunpack.c.l.b16 %v5254
      %v5287 = vunpack.c.l.b16 %v5255
      %v5288 = vunpack.c.l.b16 %v5256
      %v5289 = vunpack.c.l.b16 %v5257
      %v5290 = vunpack.c.l.b16 %v5258
      %v5291 = vunpack.c.l.b16 %v5259
      %v5292 = vunpack.c.l.b16 %v5260
      %v5293 = vunpack.c.l.b16 %v5261
      %v5294 = vunpack.c.l.b16 %v5262
      %v5295 = vunpack.c.l.b16 %v5263
      %v5296 = vunpack.c.l.b16 %v5264
      %v5297 = vunpack.c.l.b16 %v5265
      %v5298 = vunpack.c.l.b16 %v5266
      %v5299 = vpack.c.b16 %v5284, %v5283
      %v5300 = vpack.c.b16 %v5286, %v5285
      %v5301 = vpack.c.b16 %v5288, %v5287
      %v5302 = vpack.c.b16 %v5290, %v5289
      %v5303 = vpack.c.b16 %v5292, %v5291
      %v5304 = vpack.c.b16 %v5294, %v5293
      %v5305 = vpack.c.b16 %v5296, %v5295
      %v5306 = vpack.c.b16 %v5298, %v5297
      %5315 = vmatprep.subr.bf16.mxu0 0
      %5316 = vmatpush1.bf16.msra.mxu0 %v5299
      %5317 = vmatprep.subr.bf16.mxu0 0
      %5318 = vmatpush1.bf16.msra.mxu0 %v5300
      %5319 = vmatprep.subr.bf16.mxu0 0
      %5320 = vmatpush1.bf16.msra.mxu0 %v5301
      %5321 = vmatprep.subr.bf16.mxu0 0
      %5322 = vmatpush1.bf16.msra.mxu0 %v5302
      %5323 = vmatprep.subr.bf16.mxu0 0
      %5324 = vmatpush1.bf16.msra.mxu0 %v5303
      %5325 = vmatprep.subr.bf16.mxu0 0
      %5326 = vmatpush1.bf16.msra.mxu0 %v5304
      %5327 = vmatprep.subr.bf16.mxu0 0
      %5328 = vmatpush1.bf16.msra.mxu0 %v5305
      %5329 = vmatprep.subr.bf16.mxu0 0
      %5330 = vmatpush1.bf16.msra.mxu0 %v5306
      %5331 = vmatprep.subr.bf16.mxu0 0
      %5332 = vmatpush1.bf16.msra.mxu0 0
      %5333 = vmatprep.subr.bf16.mxu0 0
      %5334 = vmatpush1.bf16.msra.mxu0 0
      %5335 = vmatprep.subr.bf16.mxu0 0
      %5336 = vmatpush1.bf16.msra.mxu0 0
      %5337 = vmatprep.subr.bf16.mxu0 0
      %5338 = vmatpush1.bf16.msra.mxu0 0
      %5339 = vmatprep.subr.bf16.mxu0 0
      %5340 = vmatpush1.bf16.msra.mxu0 0
      %5341 = vmatprep.subr.bf16.mxu0 0
      %5342 = vmatpush1.bf16.msra.mxu0 0
      %5343 = vmatprep.subr.bf16.mxu0 0
      %5344 = vmatpush1.bf16.msra.mxu0 0
      %5345 = vmatprep.subr.bf16.mxu0 0
      %5346 = vmatpush1.bf16.msra.mxu0 0
      %5347 = vmatprep.mubr.bf16.mxu0 0
      %5348 = vmatmul.mubr.bf16.gmra.mrb[0].mxu0 %v5234
      %v5349 = vpop.f32.mrb[0].mxu0
      %v5350 = vadd.f32 0.0, %v5349
      %v5351 = vpop.f32.mrb[0].mxu0
      %v5352 = vpop.f32.mrb[0].mxu0
      %v5353 = vadd.f32 0.0, %v5352
      %v5354 = vpop.f32.mrb[0].mxu0
      %5355 = vmatprep.mubr.bf16.mxu0 0
      %5356 = vmatmul.mubr.bf16.gmra.mrb[0].mxu0 %v5235
      %v5357 = vpop.f32.mrb[0].mxu0
      %v5358 = vadd.f32 0.0, %v5357
      %v5359 = vpop.f32.mrb[0].mxu0
      %v5360 = vpop.f32.mrb[0].mxu0
      %v5361 = vadd.f32 0.0, %v5360
      %v5362 = vpop.f32.mrb[0].mxu0
      %5363 = vmatprep.mubr.bf16.mxu0 0
      %5364 = vmatmul.mubr.bf16.gmra.mrb[0].mxu0 %v5236
      %v5365 = vpop.f32.mrb[0].mxu0
      %v5366 = vadd.f32 0.0, %v5365
      %v5367 = vpop.f32.mrb[0].mxu0
      %v5368 = vpop.f32.mrb[0].mxu0
      %v5369 = vadd.f32 0.0, %v5368
      %v5370 = vpop.f32.mrb[0].mxu0
      %5371 = vmatprep.mubr.bf16.mxu0 0
      %5372 = vmatmul.mubr.bf16.gmra.mrb[0].mxu0 %v5237
      %v5373 = vpop.f32.mrb[0].mxu0
      %v5374 = vadd.f32 0.0, %v5373
      %v5375 = vpop.f32.mrb[0].mxu0
      %v5376 = vpop.f32.mrb[0].mxu0
      %v5377 = vadd.f32 0.0, %v5376
      %v5378 = vpop.f32.mrb[0].mxu0
      %5379 = vmatprep.mubr.bf16.mxu0 0
      %5380 = vmatmul.mubr.bf16.gmra.mrb[0].mxu0 %v5238
      %v5381 = vpop.f32.mrb[0].mxu0
      %v5382 = vadd.f32 0.0, %v5381
      %v5383 = vpop.f32.mrb[0].mxu0
      %v5384 = vpop.f32.mrb[0].mxu0
      %v5385 = vadd.f32 0.0, %v5384
      %v5386 = vpop.f32.mrb[0].mxu0
      %5387 = vmatprep.mubr.bf16.mxu0 0
      %5388 = vmatmul.mubr.bf16.gmra.mrb[0].mxu0 %v5239
      %v5389 = vpop.f32.mrb[0].mxu0
      %v5390 = vadd.f32 0.0, %v5389
      %v5391 = vpop.f32.mrb[0].mxu0
      %v5392 = vpop.f32.mrb[0].mxu0
      %v5393 = vadd.f32 0.0, %v5392
      %v5394 = vpop.f32.mrb[0].mxu0
      %5395 = vmatprep.mubr.bf16.mxu0 0
      %5396 = vmatmul.mubr.bf16.gmra.mrb[0].mxu0 %v5240
      %v5397 = vpop.f32.mrb[0].mxu0
      %v5398 = vadd.f32 0.0, %v5397
      %v5399 = vpop.f32.mrb[0].mxu0
      %v5400 = vpop.f32.mrb[0].mxu0
      %v5401 = vadd.f32 0.0, %v5400
      %v5402 = vpop.f32.mrb[0].mxu0
      %5403 = vmatprep.mubr.bf16.mxu0 0
      %5404 = vmatmul.mubr.bf16.gmra.mrb[0].mxu0 %v5241
      %v5405 = vpop.f32.mrb[0].mxu0
      %v5406 = vadd.f32 0.0, %v5405
      %v5407 = vpop.f32.mrb[0].mxu0
      %v5408 = vpop.f32.mrb[0].mxu0
      %v5409 = vadd.f32 0.0, %v5408
      %v5410 = vpop.f32.mrb[0].mxu0
      %5411 = vmatprep.mubr.bf16.mxu0 0
      %5412 = vmatmul.mubr.bf16.gmra.mrb[0].mxu0 %v5242
      %v5413 = vpop.f32.mrb[0].mxu0
      %v5414 = vadd.f32 0.0, %v5413
      %v5415 = vpop.f32.mrb[0].mxu0
      %v5416 = vpop.f32.mrb[0].mxu0
      %v5417 = vadd.f32 0.0, %v5416
      %v5418 = vpop.f32.mrb[0].mxu0
      %5419 = vmatprep.mubr.bf16.mxu0 0
      %5420 = vmatmul.mubr.bf16.gmra.mrb[0].mxu0 %v5243
      %v5421 = vpop.f32.mrb[0].mxu0
      %v5422 = vadd.f32 0.0, %v5421
      %v5423 = vpop.f32.mrb[0].mxu0
      %v5424 = vpop.f32.mrb[0].mxu0
      %v5425 = vadd.f32 0.0, %v5424
      %v5426 = vpop.f32.mrb[0].mxu0
      %5427 = vmatprep.mubr.bf16.mxu0 0
      %5428 = vmatmul.mubr.bf16.gmra.mrb[0].mxu0 %v5244
      %v5429 = vpop.f32.mrb[0].mxu0
      %v5430 = vadd.f32 0.0, %v5429
      %v5431 = vpop.f32.mrb[0].mxu0
      %v5432 = vpop.f32.mrb[0].mxu0
      %v5433 = vadd.f32 0.0, %v5432
      %v5434 = vpop.f32.mrb[0].mxu0
      %5435 = vmatprep.mubr.bf16.mxu0 0
      %5436 = vmatmul.mubr.bf16.gmra.mrb[0].mxu0 %v5245
      %v5437 = vpop.f32.mrb[0].mxu0
      %v5438 = vadd.f32 0.0, %v5437
      %v5439 = vpop.f32.mrb[0].mxu0
      %v5440 = vpop.f32.mrb[0].mxu0
      %v5441 = vadd.f32 0.0, %v5440
      %v5442 = vpop.f32.mrb[0].mxu0
      %5443 = vmatprep.mubr.bf16.mxu0 0
      %5444 = vmatmul.mubr.bf16.gmra.mrb[0].mxu0 %v5246
      %v5445 = vpop.f32.mrb[0].mxu0
      %v5446 = vadd.f32 0.0, %v5445
      %v5447 = vpop.f32.mrb[0].mxu0
      %v5448 = vpop.f32.mrb[0].mxu0
      %v5449 = vadd.f32 0.0, %v5448
      %v5450 = vpop.f32.mrb[0].mxu0
      %5451 = vmatprep.mubr.bf16.mxu0 0
      %5452 = vmatmul.mubr.bf16.gmra.mrb[0].mxu0 %v5247
      %v5453 = vpop.f32.mrb[0].mxu0
      %v5454 = vadd.f32 0.0, %v5453
      %v5455 = vpop.f32.mrb[0].mxu0
      %v5456 = vpop.f32.mrb[0].mxu0
      %v5457 = vadd.f32 0.0, %v5456
      %v5458 = vpop.f32.mrb[0].mxu0
      %5459 = vmatprep.mubr.bf16.mxu0 0
      %5460 = vmatmul.mubr.bf16.gmra.mrb[0].mxu0 %v5248
      %v5461 = vpop.f32.mrb[0].mxu0
      %v5462 = vadd.f32 0.0, %v5461
      %v5463 = vpop.f32.mrb[0].mxu0
      %v5464 = vpop.f32.mrb[0].mxu0
      %v5465 = vadd.f32 0.0, %v5464
      %v5466 = vpop.f32.mrb[0].mxu0
      %5467 = vmatprep.mubr.bf16.mxu0 0
      %5468 = vmatmul.mubr.bf16.gmra.mrb[0].mxu0 %v5249
      %v5469 = vpop.f32.mrb[0].mxu0
      %v5470 = vadd.f32 0.0, %v5469
      %v5471 = vpop.f32.mrb[0].mxu0
      %v5472 = vpop.f32.mrb[0].mxu0
      %v5473 = vadd.f32 0.0, %v5472
      %v5474 = vpop.f32.mrb[0].mxu0
      %5475 = vdwg.mxu0
      %v5476 = vadd.f32 %v5170, %v5350
      %v5477 = vadd.f32 %v5171, %v5353
      %v5478 = vadd.f32 %v5172, %v5358
      %v5479 = vadd.f32 %v5173, %v5361
      %v5480 = vadd.f32 %v5174, %v5366
      %v5481 = vadd.f32 %v5175, %v5369
      %v5482 = vadd.f32 %v5176, %v5374
      %v5483 = vadd.f32 %v5177, %v5377
      %v5484 = vadd.f32 %v5178, %v5382
      %v5485 = vadd.f32 %v5179, %v5385
      %v5486 = vadd.f32 %v5180, %v5390
      %v5487 = vadd.f32 %v5181, %v5393
      %v5488 = vadd.f32 %v5182, %v5398
      %v5489 = vadd.f32 %v5183, %v5401
      %v5490 = vadd.f32 %v5184, %v5406
      %v5491 = vadd.f32 %v5185, %v5409
      %v5492 = vadd.f32 %v5186, %v5414
      %v5493 = vadd.f32 %v5187, %v5417
      %v5494 = vadd.f32 %v5188, %v5422
      %v5495 = vadd.f32 %v5189, %v5425
      %v5496 = vadd.f32 %v5190, %v5430
      %v5497 = vadd.f32 %v5191, %v5433
      %v5498 = vadd.f32 %v5192, %v5438
      %v5499 = vadd.f32 %v5193, %v5441
      %v5500 = vadd.f32 %v5194, %v5446
      %v5501 = vadd.f32 %v5195, %v5449
      %v5502 = vadd.f32 %v5196, %v5454
      %v5503 = vadd.f32 %v5197, %v5457
      %v5504 = vadd.f32 %v5198, %v5462
      %v5505 = vadd.f32 %v5199, %v5465
      %v5506 = vadd.f32 %v5200, %v5470
      %v5507 = vadd.f32 %v5201, %v5473
      %v5508 = vld [vmem:[%s4895 + $0x2] sm:$0xff]
      %v5509 = vld [vmem:[%s4895 + $0xa] sm:$0xff]
      %v5510 = vld [vmem:[%s4895 + $0x1a] sm:$0xff]
      %v5511 = vld [vmem:[%s4895 + $0x22] sm:$0xff]
      %v5512 = vld [vmem:[%s4895 + $0x32] sm:$0xff]
      %v5513 = vld [vmem:[%s4895 + $0x3a] sm:$0xff]
      %v5514 = vld [vmem:[%s4895 + $0x4a] sm:$0xff]
      %v5515 = vld [vmem:[%s4895 + $0x52] sm:$0xff]
      %v5516 = vld [vmem:[%s4895 + $0x62] sm:$0xff]
      %v5517 = vld [vmem:[%s4895 + $0x6a] sm:$0xff]
      %v5518 = vld [vmem:[%s4895 + $0x7a] sm:$0xff]
      %v5519 = vld [vmem:[%s4895 + $0x82] sm:$0xff]
      %v5520 = vld [vmem:[%s4895 + $0x92] sm:$0xff]
      %v5521 = vld [vmem:[%s4895 + $0x9a] sm:$0xff]
      %v5522 = vld [vmem:[%s4895 + $0xaa] sm:$0xff]
      %v5523 = vld [vmem:[%s4895 + $0xb2] sm:$0xff]
      %v5524 = vld [vmem:[%s4895 + $0xc2] sm:$0xff]
      %v5525 = vld [vmem:[%s4895 + $0xca] sm:$0xff]
      %v5526 = vld [vmem:[%s4895 + $0xda] sm:$0xff]
      %v5527 = vld [vmem:[%s4895 + $0xe2] sm:$0xff]
      %v5528 = vld [vmem:[%s4895 + $0xf2] sm:$0xff]
      %v5529 = vld [vmem:[%s4895 + $0xfa] sm:$0xff]
      %v5530 = vld [vmem:[%s4895 + $0x10a] sm:$0xff]
      %v5531 = vld [vmem:[%s4895 + $0x112] sm:$0xff]
      %v5532 = vld [vmem:[%s4895 + $0x122] sm:$0xff]
      %v5533 = vld [vmem:[%s4895 + $0x12a] sm:$0xff]
      %v5534 = vld [vmem:[%s4895 + $0x13a] sm:$0xff]
      %v5535 = vld [vmem:[%s4895 + $0x142] sm:$0xff]
      %v5536 = vld [vmem:[%s4895 + $0x152] sm:$0xff]
      %v5537 = vld [vmem:[%s4895 + $0x15a] sm:$0xff]
      %v5538 = vld [vmem:[%s4895 + $0x16a] sm:$0xff]
      %v5539 = vld [vmem:[%s4895 + $0x172] sm:$0xff]
      %v5540 = vpack.c.bf16 %v5509, %v5508
      %v5541 = vpack.c.bf16 %v5511, %v5510
      %v5542 = vpack.c.bf16 %v5513, %v5512
      %v5543 = vpack.c.bf16 %v5515, %v5514
      %v5544 = vpack.c.bf16 %v5517, %v5516
      %v5545 = vpack.c.bf16 %v5519, %v5518
      %v5546 = vpack.c.bf16 %v5521, %v5520
      %v5547 = vpack.c.bf16 %v5523, %v5522
      %v5548 = vpack.c.bf16 %v5525, %v5524
      %v5549 = vpack.c.bf16 %v5527, %v5526
      %v5550 = vpack.c.bf16 %v5529, %v5528
      %v5551 = vpack.c.bf16 %v5531, %v5530
      %v5552 = vpack.c.bf16 %v5533, %v5532
      %v5553 = vpack.c.bf16 %v5535, %v5534
      %v5554 = vpack.c.bf16 %v5537, %v5536
      %v5555 = vpack.c.bf16 %v5539, %v5538
      %s5556 = scalar_lea.vmem %s3, 512
      %v5557 = vld [vmem:[%s5556] sm:$0xf]
      %v5558 = vld [vmem:[%s5556 + $0x4] sm:$0xf]
      %v5559 = vld [vmem:[%s5556 + $0x8] sm:$0xf]
      %v5560 = vld [vmem:[%s5556 + $0xc] sm:$0xf]
      %v5561 = vld [vmem:[%s5556 + $0x10] sm:$0xf]
      %v5562 = vld [vmem:[%s5556 + $0x14] sm:$0xf]
      %v5563 = vld [vmem:[%s5556 + $0x18] sm:$0xf]
      %v5564 = vld [vmem:[%s5556 + $0x1c] sm:$0xf]
      %v5565 = vld [vmem:[%s5556 + $0x20] sm:$0xf]
      %v5566 = vld [vmem:[%s5556 + $0x24] sm:$0xf]
      %v5567 = vld [vmem:[%s5556 + $0x28] sm:$0xf]
      %v5568 = vld [vmem:[%s5556 + $0x2c] sm:$0xf]
      %v5569 = vld [vmem:[%s5556 + $0x30] sm:$0xf]
      %v5570 = vld [vmem:[%s5556 + $0x34] sm:$0xf]
      %v5571 = vld [vmem:[%s5556 + $0x38] sm:$0xf]
      %v5572 = vld [vmem:[%s5556 + $0x3c] sm:$0xf]
      %v5589 = vunpack.c.l.b16 %v5557
      %v5590 = vunpack.c.l.b16 %v5558
      %v5591 = vunpack.c.l.b16 %v5559
      %v5592 = vunpack.c.l.b16 %v5560
      %v5593 = vunpack.c.l.b16 %v5561
      %v5594 = vunpack.c.l.b16 %v5562
      %v5595 = vunpack.c.l.b16 %v5563
      %v5596 = vunpack.c.l.b16 %v5564
      %v5597 = vunpack.c.l.b16 %v5565
      %v5598 = vunpack.c.l.b16 %v5566
      %v5599 = vunpack.c.l.b16 %v5567
      %v5600 = vunpack.c.l.b16 %v5568
      %v5601 = vunpack.c.l.b16 %v5569
      %v5602 = vunpack.c.l.b16 %v5570
      %v5603 = vunpack.c.l.b16 %v5571
      %v5604 = vunpack.c.l.b16 %v5572
      %v5605 = vpack.c.b16 %v5590, %v5589
      %v5606 = vpack.c.b16 %v5592, %v5591
      %v5607 = vpack.c.b16 %v5594, %v5593
      %v5608 = vpack.c.b16 %v5596, %v5595
      %v5609 = vpack.c.b16 %v5598, %v5597
      %v5610 = vpack.c.b16 %v5600, %v5599
      %v5611 = vpack.c.b16 %v5602, %v5601
      %v5612 = vpack.c.b16 %v5604, %v5603
      %5621 = vmatprep.subr.bf16.mxu0 0
      %5622 = vmatpush1.bf16.msra.mxu0 %v5605
      %5623 = vmatprep.subr.bf16.mxu0 0
      %5624 = vmatpush1.bf16.msra.mxu0 %v5606
      %5625 = vmatprep.subr.bf16.mxu0 0
      %5626 = vmatpush1.bf16.msra.mxu0 %v5607
      %5627 = vmatprep.subr.bf16.mxu0 0
      %5628 = vmatpush1.bf16.msra.mxu0 %v5608
      %5629 = vmatprep.subr.bf16.mxu0 0
      %5630 = vmatpush1.bf16.msra.mxu0 %v5609
      %5631 = vmatprep.subr.bf16.mxu0 0
      %5632 = vmatpush1.bf16.msra.mxu0 %v5610
      %5633 = vmatprep.subr.bf16.mxu0 0
      %5634 = vmatpush1.bf16.msra.mxu0 %v5611
      %5635 = vmatprep.subr.bf16.mxu0 0
      %5636 = vmatpush1.bf16.msra.mxu0 %v5612
      %5637 = vmatprep.subr.bf16.mxu0 0
      %5638 = vmatpush1.bf16.msra.mxu0 0
      %5639 = vmatprep.subr.bf16.mxu0 0
      %5640 = vmatpush1.bf16.msra.mxu0 0
      %5641 = vmatprep.subr.bf16.mxu0 0
      %5642 = vmatpush1.bf16.msra.mxu0 0
      %5643 = vmatprep.subr.bf16.mxu0 0
      %5644 = vmatpush1.bf16.msra.mxu0 0
      %5645 = vmatprep.subr.bf16.mxu0 0
      %5646 = vmatpush1.bf16.msra.mxu0 0
      %5647 = vmatprep.subr.bf16.mxu0 0
      %5648 = vmatpush1.bf16.msra.mxu0 0
      %5649 = vmatprep.subr.bf16.mxu0 0
      %5650 = vmatpush1.bf16.msra.mxu0 0
      %5651 = vmatprep.subr.bf16.mxu0 0
      %5652 = vmatpush1.bf16.msra.mxu0 0
      %5653 = vmatprep.mubr.bf16.mxu0 0
      %5654 = vmatmul.mubr.bf16.gmra.mrb[0].mxu0 %v5540
      %v5655 = vpop.f32.mrb[0].mxu0
      %v5656 = vadd.f32 0.0, %v5655
      %v5657 = vpop.f32.mrb[0].mxu0
      %v5658 = vpop.f32.mrb[0].mxu0
      %v5659 = vadd.f32 0.0, %v5658
      %v5660 = vpop.f32.mrb[0].mxu0
      %5661 = vmatprep.mubr.bf16.mxu0 0
      %5662 = vmatmul.mubr.bf16.gmra.mrb[0].mxu0 %v5541
      %v5663 = vpop.f32.mrb[0].mxu0
      %v5664 = vadd.f32 0.0, %v5663
      %v5665 = vpop.f32.mrb[0].mxu0
      %v5666 = vpop.f32.mrb[0].mxu0
      %v5667 = vadd.f32 0.0, %v5666
      %v5668 = vpop.f32.mrb[0].mxu0
      %5669 = vmatprep.mubr.bf16.mxu0 0
      %5670 = vmatmul.mubr.bf16.gmra.mrb[0].mxu0 %v5542
      %v5671 = vpop.f32.mrb[0].mxu0
      %v5672 = vadd.f32 0.0, %v5671
      %v5673 = vpop.f32.mrb[0].mxu0
      %v5674 = vpop.f32.mrb[0].mxu0
      %v5675 = vadd.f32 0.0, %v5674
      %v5676 = vpop.f32.mrb[0].mxu0
      %5677 = vmatprep.mubr.bf16.mxu0 0
      %5678 = vmatmul.mubr.bf16.gmra.mrb[0].mxu0 %v5543
      %v5679 = vpop.f32.mrb[0].mxu0
      %v5680 = vadd.f32 0.0, %v5679
      %v5681 = vpop.f32.mrb[0].mxu0
      %v5682 = vpop.f32.mrb[0].mxu0
      %v5683 = vadd.f32 0.0, %v5682
      %v5684 = vpop.f32.mrb[0].mxu0
      %5685 = vmatprep.mubr.bf16.mxu0 0
      %5686 = vmatmul.mubr.bf16.gmra.mrb[0].mxu0 %v5544
      %v5687 = vpop.f32.mrb[0].mxu0
      %v5688 = vadd.f32 0.0, %v5687
      %v5689 = vpop.f32.mrb[0].mxu0
      %v5690 = vpop.f32.mrb[0].mxu0
      %v5691 = vadd.f32 0.0, %v5690
      %v5692 = vpop.f32.mrb[0].mxu0
      %5693 = vmatprep.mubr.bf16.mxu0 0
      %5694 = vmatmul.mubr.bf16.gmra.mrb[0].mxu0 %v5545
      %v5695 = vpop.f32.mrb[0].mxu0
      %v5696 = vadd.f32 0.0, %v5695
      %v5697 = vpop.f32.mrb[0].mxu0
      %v5698 = vpop.f32.mrb[0].mxu0
      %v5699 = vadd.f32 0.0, %v5698
      %v5700 = vpop.f32.mrb[0].mxu0
      %5701 = vmatprep.mubr.bf16.mxu0 0
      %5702 = vmatmul.mubr.bf16.gmra.mrb[0].mxu0 %v5546
      %v5703 = vpop.f32.mrb[0].mxu0
      %v5704 = vadd.f32 0.0, %v5703
      %v5705 = vpop.f32.mrb[0].mxu0
      %v5706 = vpop.f32.mrb[0].mxu0
      %v5707 = vadd.f32 0.0, %v5706
      %v5708 = vpop.f32.mrb[0].mxu0
      %5709 = vmatprep.mubr.bf16.mxu0 0
      %5710 = vmatmul.mubr.bf16.gmra.mrb[0].mxu0 %v5547
      %v5711 = vpop.f32.mrb[0].mxu0
      %v5712 = vadd.f32 0.0, %v5711
      %v5713 = vpop.f32.mrb[0].mxu0
      %v5714 = vpop.f32.mrb[0].mxu0
      %v5715 = vadd.f32 0.0, %v5714
      %v5716 = vpop.f32.mrb[0].mxu0
      %5717 = vmatprep.mubr.bf16.mxu0 0
      %5718 = vmatmul.mubr.bf16.gmra.mrb[0].mxu0 %v5548
      %v5719 = vpop.f32.mrb[0].mxu0
      %v5720 = vadd.f32 0.0, %v5719
      %v5721 = vpop.f32.mrb[0].mxu0
      %v5722 = vpop.f32.mrb[0].mxu0
      %v5723 = vadd.f32 0.0, %v5722
      %v5724 = vpop.f32.mrb[0].mxu0
      %5725 = vmatprep.mubr.bf16.mxu0 0
      %5726 = vmatmul.mubr.bf16.gmra.mrb[0].mxu0 %v5549
      %v5727 = vpop.f32.mrb[0].mxu0
      %v5728 = vadd.f32 0.0, %v5727
      %v5729 = vpop.f32.mrb[0].mxu0
      %v5730 = vpop.f32.mrb[0].mxu0
      %v5731 = vadd.f32 0.0, %v5730
      %v5732 = vpop.f32.mrb[0].mxu0
      %5733 = vmatprep.mubr.bf16.mxu0 0
      %5734 = vmatmul.mubr.bf16.gmra.mrb[0].mxu0 %v5550
      %v5735 = vpop.f32.mrb[0].mxu0
      %v5736 = vadd.f32 0.0, %v5735
      %v5737 = vpop.f32.mrb[0].mxu0
      %v5738 = vpop.f32.mrb[0].mxu0
      %v5739 = vadd.f32 0.0, %v5738
      %v5740 = vpop.f32.mrb[0].mxu0
      %5741 = vmatprep.mubr.bf16.mxu0 0
      %5742 = vmatmul.mubr.bf16.gmra.mrb[0].mxu0 %v5551
      %v5743 = vpop.f32.mrb[0].mxu0
      %v5744 = vadd.f32 0.0, %v5743
      %v5745 = vpop.f32.mrb[0].mxu0
      %v5746 = vpop.f32.mrb[0].mxu0
      %v5747 = vadd.f32 0.0, %v5746
      %v5748 = vpop.f32.mrb[0].mxu0
      %5749 = vmatprep.mubr.bf16.mxu0 0
      %5750 = vmatmul.mubr.bf16.gmra.mrb[0].mxu0 %v5552
      %v5751 = vpop.f32.mrb[0].mxu0
      %v5752 = vadd.f32 0.0, %v5751
      %v5753 = vpop.f32.mrb[0].mxu0
      %v5754 = vpop.f32.mrb[0].mxu0
      %v5755 = vadd.f32 0.0, %v5754
      %v5756 = vpop.f32.mrb[0].mxu0
      %5757 = vmatprep.mubr.bf16.mxu0 0
      %5758 = vmatmul.mubr.bf16.gmra.mrb[0].mxu0 %v5553
      %v5759 = vpop.f32.mrb[0].mxu0
      %v5760 = vadd.f32 0.0, %v5759
      %v5761 = vpop.f32.mrb[0].mxu0
      %v5762 = vpop.f32.mrb[0].mxu0
      %v5763 = vadd.f32 0.0, %v5762
      %v5764 = vpop.f32.mrb[0].mxu0
      %5765 = vmatprep.mubr.bf16.mxu0 0
      %5766 = vmatmul.mubr.bf16.gmra.mrb[0].mxu0 %v5554
      %v5767 = vpop.f32.mrb[0].mxu0
      %v5768 = vadd.f32 0.0, %v5767
      %v5769 = vpop.f32.mrb[0].mxu0
      %v5770 = vpop.f32.mrb[0].mxu0
      %v5771 = vadd.f32 0.0, %v5770
      %v5772 = vpop.f32.mrb[0].mxu0
      %5773 = vmatprep.mubr.bf16.mxu0 0
      %5774 = vmatmul.mubr.bf16.gmra.mrb[0].mxu0 %v5555
      %v5775 = vpop.f32.mrb[0].mxu0
      %v5776 = vadd.f32 0.0, %v5775
      %v5777 = vpop.f32.mrb[0].mxu0
      %v5778 = vpop.f32.mrb[0].mxu0
      %v5779 = vadd.f32 0.0, %v5778
      %v5780 = vpop.f32.mrb[0].mxu0
      %5781 = vdwg.mxu0
      %v5782 = vadd.f32 %v5476, %v5656
      %v5783 = vadd.f32 %v5477, %v5659
      %v5784 = vadd.f32 %v5478, %v5664
      %v5785 = vadd.f32 %v5479, %v5667
      %v5786 = vadd.f32 %v5480, %v5672
      %v5787 = vadd.f32 %v5481, %v5675
      %v5788 = vadd.f32 %v5482, %v5680
      %v5789 = vadd.f32 %v5483, %v5683
      %v5790 = vadd.f32 %v5484, %v5688
      %v5791 = vadd.f32 %v5485, %v5691
      %v5792 = vadd.f32 %v5486, %v5696
      %v5793 = vadd.f32 %v5487, %v5699
      %v5794 = vadd.f32 %v5488, %v5704
      %v5795 = vadd.f32 %v5489, %v5707
      %v5796 = vadd.f32 %v5490, %v5712
      %v5797 = vadd.f32 %v5491, %v5715
      %v5798 = vadd.f32 %v5492, %v5720
      %v5799 = vadd.f32 %v5493, %v5723
      %v5800 = vadd.f32 %v5494, %v5728
      %v5801 = vadd.f32 %v5495, %v5731
      %v5802 = vadd.f32 %v5496, %v5736
      %v5803 = vadd.f32 %v5497, %v5739
      %v5804 = vadd.f32 %v5498, %v5744
      %v5805 = vadd.f32 %v5499, %v5747
      %v5806 = vadd.f32 %v5500, %v5752
      %v5807 = vadd.f32 %v5501, %v5755
      %v5808 = vadd.f32 %v5502, %v5760
      %v5809 = vadd.f32 %v5503, %v5763
      %v5810 = vadd.f32 %v5504, %v5768
      %v5811 = vadd.f32 %v5505, %v5771
      %v5812 = vadd.f32 %v5506, %v5776
      %v5813 = vadd.f32 %v5507, %v5779
      %v5814 = vmax.f32 %v5782, 0.0
      %v5815 = vmax.f32 %v5783, 0.0
      %v5816 = vmax.f32 %v5784, 0.0
      %v5817 = vmax.f32 %v5785, 0.0
      %v5818 = vmax.f32 %v5786, 0.0
      %v5819 = vmax.f32 %v5787, 0.0
      %v5820 = vmax.f32 %v5788, 0.0
      %v5821 = vmax.f32 %v5789, 0.0
      %v5822 = vmax.f32 %v5790, 0.0
      %v5823 = vmax.f32 %v5791, 0.0
      %v5824 = vmax.f32 %v5792, 0.0
      %v5825 = vmax.f32 %v5793, 0.0
      %v5826 = vmax.f32 %v5794, 0.0
      %v5827 = vmax.f32 %v5795, 0.0
      %v5828 = vmax.f32 %v5796, 0.0
      %v5829 = vmax.f32 %v5797, 0.0
      %v5830 = vmax.f32 %v5798, 0.0
      %v5831 = vmax.f32 %v5799, 0.0
      %v5832 = vmax.f32 %v5800, 0.0
      %v5833 = vmax.f32 %v5801, 0.0
      %v5834 = vmax.f32 %v5802, 0.0
      %v5835 = vmax.f32 %v5803, 0.0
      %v5836 = vmax.f32 %v5804, 0.0
      %v5837 = vmax.f32 %v5805, 0.0
      %v5838 = vmax.f32 %v5806, 0.0
      %v5839 = vmax.f32 %v5807, 0.0
      %v5840 = vmax.f32 %v5808, 0.0
      %v5841 = vmax.f32 %v5809, 0.0
      %v5842 = vmax.f32 %v5810, 0.0
      %v5843 = vmax.f32 %v5811, 0.0
      %v5844 = vmax.f32 %v5812, 0.0
      %v5845 = vmax.f32 %v5813, 0.0
      %v5846 = vmax.f32 %v5814, %v5818
      %v5847 = vmax.f32 %v5815, %v5819
      %v5848 = vmax.f32 %v5816, %v5820
      %v5849 = vmax.f32 %v5817, %v5821
      %v5850 = vmax.f32 %v5846, %v5822
      %v5851 = vmax.f32 %v5847, %v5823
      %v5852 = vmax.f32 %v5848, %v5824
      %v5853 = vmax.f32 %v5849, %v5825
      %v5854 = vmax.f32 %v5850, %v5826
      %v5855 = vmax.f32 %v5851, %v5827
      %v5856 = vmax.f32 %v5852, %v5828
      %v5857 = vmax.f32 %v5853, %v5829
      %v5858 = vmax.f32 %v5854, %v5830
      %v5859 = vmax.f32 %v5855, %v5831
      %v5860 = vmax.f32 %v5856, %v5832
      %v5861 = vmax.f32 %v5857, %v5833
      %v5862 = vmax.f32 %v5858, %v5834
      %v5863 = vmax.f32 %v5859, %v5835
      %v5864 = vmax.f32 %v5860, %v5836
      %v5865 = vmax.f32 %v5861, %v5837
      %v5866 = vmax.f32 %v5862, %v5838
      %v5867 = vmax.f32 %v5863, %v5839
      %v5868 = vmax.f32 %v5864, %v5840
      %v5869 = vmax.f32 %v5865, %v5841
      %v5870 = vmax.f32 %v5866, %v5842
      %v5871 = vmax.f32 %v5867, %v5843
      %v5872 = vmax.f32 %v5868, %v5844
      %v5873 = vmax.f32 %v5869, %v5845
      %v5874 = vmax.f32 %v5870, %v5871
      %v5875 = vmax.f32 %v5872, %v5873
      %v5876 = vmax.f32 %v5874, %v5875
      %v5877 = vrot.slane %v5876, 4
      %v5878 = vmax.f32 %v5876, %v5877
      %v5879 = vrot.slane %v5878, 2
      %v5880 = vmax.f32 %v5878, %v5879
      %v5881 = vrot.slane %v5880, 1
      %v5882 = vmax.f32 %v5880, %v5881
      %v5883 = vpack.c.bf16 %v5882, %v5882
      %v5884 = vld [vmem:[%s5] sm:$0xf]
      %v5885 = vld [vmem:[%s5 + $0x4] sm:$0xf]
      %v5886 = vld [vmem:[%s5 + $0x8] sm:$0xf]
      %v5887 = vld [vmem:[%s5 + $0xc] sm:$0xf]
      %v5888 = vld [vmem:[%s5 + $0x10] sm:$0xf]
      %v5889 = vld [vmem:[%s5 + $0x14] sm:$0xf]
      %v5890 = vld [vmem:[%s5 + $0x18] sm:$0xf]
      %v5891 = vld [vmem:[%s5 + $0x1c] sm:$0xf]
      %v5892 = vld [vmem:[%s5 + $0x20] sm:$0xf]
      %v5893 = vld [vmem:[%s5 + $0x24] sm:$0xf]
      %v5894 = vld [vmem:[%s5 + $0x28] sm:$0xf]
      %v5895 = vld [vmem:[%s5 + $0x2c] sm:$0xf]
      %v5896 = vld [vmem:[%s5 + $0x30] sm:$0xf]
      %v5897 = vld [vmem:[%s5 + $0x34] sm:$0xf]
      %v5898 = vld [vmem:[%s5 + $0x38] sm:$0xf]
      %v5899 = vld [vmem:[%s5 + $0x3c] sm:$0xf]
      %v5900 = vld [vmem:[%s6] sm:$0x1]
      %v5917 = vunpack.c.l.b16 %v5884
      %v5918 = vunpack.c.l.b16 %v5885
      %v5919 = vunpack.c.l.b16 %v5886
      %v5920 = vunpack.c.l.b16 %v5887
      %v5921 = vunpack.c.l.b16 %v5888
      %v5922 = vunpack.c.l.b16 %v5889
      %v5923 = vunpack.c.l.b16 %v5890
      %v5924 = vunpack.c.l.b16 %v5891
      %v5925 = vunpack.c.l.b16 %v5892
      %v5926 = vunpack.c.l.b16 %v5893
      %v5927 = vunpack.c.l.b16 %v5894
      %v5928 = vunpack.c.l.b16 %v5895
      %v5929 = vunpack.c.l.b16 %v5896
      %v5930 = vunpack.c.l.b16 %v5897
      %v5931 = vunpack.c.l.b16 %v5898
      %v5932 = vunpack.c.l.b16 %v5899
      %v5933 = vpack.c.b16 %v5918, %v5917
      %v5934 = vpack.c.b16 %v5920, %v5919
      %v5935 = vpack.c.b16 %v5922, %v5921
      %v5936 = vpack.c.b16 %v5924, %v5923
      %v5937 = vpack.c.b16 %v5926, %v5925
      %v5938 = vpack.c.b16 %v5928, %v5927
      %v5939 = vpack.c.b16 %v5930, %v5929
      %v5940 = vpack.c.b16 %v5932, %v5931
      %5949 = vmatprep.subr.bf16.mxu0 0
      %5950 = vmatpush1.bf16.msra.mxu0 %v5933
      %5951 = vmatprep.subr.bf16.mxu0 0
      %5952 = vmatpush1.bf16.msra.mxu0 %v5934
      %5953 = vmatprep.subr.bf16.mxu0 0
      %5954 = vmatpush1.bf16.msra.mxu0 %v5935
      %5955 = vmatprep.subr.bf16.mxu0 0
      %5956 = vmatpush1.bf16.msra.mxu0 %v5936
      %5957 = vmatprep.subr.bf16.mxu0 0
      %5958 = vmatpush1.bf16.msra.mxu0 %v5937
      %5959 = vmatprep.subr.bf16.mxu0 0
      %5960 = vmatpush1.bf16.msra.mxu0 %v5938
      %5961 = vmatprep.subr.bf16.mxu0 0
      %5962 = vmatpush1.bf16.msra.mxu0 %v5939
      %5963 = vmatprep.subr.bf16.mxu0 0
      %5964 = vmatpush1.bf16.msra.mxu0 %v5940
      %5965 = vmatprep.subr.bf16.mxu0 0
      %5966 = vmatpush1.bf16.msra.mxu0 0
      %5967 = vmatprep.subr.bf16.mxu0 0
      %5968 = vmatpush1.bf16.msra.mxu0 0
      %5969 = vmatprep.subr.bf16.mxu0 0
      %5970 = vmatpush1.bf16.msra.mxu0 0
      %5971 = vmatprep.subr.bf16.mxu0 0
      %5972 = vmatpush1.bf16.msra.mxu0 0
      %5973 = vmatprep.subr.bf16.mxu0 0
      %5974 = vmatpush1.bf16.msra.mxu0 0
      %5975 = vmatprep.subr.bf16.mxu0 0
      %5976 = vmatpush1.bf16.msra.mxu0 0
      %5977 = vmatprep.subr.bf16.mxu0 0
      %5978 = vmatpush1.bf16.msra.mxu0 0
      %5979 = vmatprep.subr.bf16.mxu0 0
      %5980 = vmatpush1.bf16.msra.mxu0 0
      %5981 = vmatprep.mubr.bf16.mxu0 0
      %5982 = vmatmul.mubr.bf16.gmra.mrb[0].mxu0 %v5883
      %v5983 = vpop.f32.mrb[0].mxu0
      %v5984 = vadd.f32 %v5900, %v5983
      %v5985 = vpop.f32.mrb[0].mxu0
      %v5986 = vpop.f32.mrb[0].mxu0
      %v5987 = vpop.f32.mrb[0].mxu0
      %5988 = vdwg.mxu0
      %v5989 = vlaneseq
      %v5990 = vshrl.u32 %v5989, 7
      %v5991 = vsub.s32 0, %v5990
      %v5992 = vrot.slane %v5984, %v5991
      %5993 = vst [vmem:[%s276] sm:$0xff] %v5992
      %p5994 = scmp.lt.s32.totalorder %s18, 1
      %s5995 = scalar_select %p5994, %s18, 1
      %s5996 = smul.addr %s5995, 8
      %s5997 = scalar_lea.vmem %s7, %s5996
      // Predicated region
      $region49: #{timmnet_forward.1} parent=47 // pred_check
        %p5998 = pneg %p188
      $region50: #{timmnet_forward.1} parent=47 // pred_check_branch
        %6000 = sbr.rel (%p5998) target = $region52
      $region51: #{timmnet_forward.1} parent=47 // pred_region
        _
      $region52: #{timmnet_forward.1} parent=47 // pred_fallthru
        _
    $region48: #{timmnet_forward.1} parent=5 // pred_fallthru
      _
    %p6001 = scmp.le.s32.totalorder 2, %s13
    // Predicated region
    $region53: #{timmnet_forward.1} parent=5 // pred_check
      %p6002 = pneg %p6001
    $region54: #{timmnet_forward.1} parent=5 // pred_check_branch
      %6004 = sbr.rel (%p6002) target = $region56
    $region55: #{timmnet_forward.1} parent=5 // pred_region
      %s6005 = ssub.s32 %s13, 2
      // Predicated region
      $region57: #{timmnet_forward.1} parent=55 // pred_check
        %p6006 = pneg %p194
      $region58: #{timmnet_forward.1} parent=55 // pred_check_branch
        %6008 = sbr.rel (%p6006) target = $region60
      $region59: #{timmnet_forward.1} parent=55 // pred_region
        %p6009 = scmp.lt.s32.totalorder %s19, 1
        %s6010 = scalar_select %p6009, %s19, 1
        %s6011 = smul.addr %s6010, 8
        %s6012 = scalar_lea.vmem %s7, %s6011
      $region60: #{timmnet_forward.1} parent=55 // pred_fallthru
        _
    $region56: #{timmnet_forward.1} parent=5 // pred_fallthru
      _
  $region6: #{timmnet_forward.1} parent=0 // loop_footer
    %s17 = sadd.s32 1, %s13
  $region7: #{timmnet_forward.1} parent=0 // loop_footer_branch
    %12 = sbr.rel target = $region3
  $region8: #{timmnet_forward.1} parent=0 // loop_exit
    _

</llo_original>
